<compile_context>
chip_gen: v7x
topology: tpu7x:2x2x1
jax: 0.10.0
libtpu: 0.0.40
codegen_flags: <defaults>
</compile_context>

<pallas_src>
import jax
import jax.numpy as jnp
import numpy as np
from jax.experimental import pallas as pl
from jax.experimental.pallas import tpu as pltpu

# ---------------- mini-BERT config (synthetic) ----------------
VOCAB = 50
MAX_POS = 16
TYPE_VOCAB = 2
HIDDEN = 64
HEADS = 4
HEAD_DIM = HIDDEN // HEADS
INTER = 128
LAYERS = 2
W2V_DIM = 300
NUM_CLASSES = 4
LN_EPS = 1e-12
MASK_NEG = -1e9

QKV_STRIDE = 128            # Q at lanes [0,64), K at [128,192), V at [256,320)
QKV_WIDTH = 3 * QKV_STRIDE
W2V_PAD = 384               # w2v features zero-padded to a lane-aligned width


# ----------------------- fused Pallas kernel -----------------------

def _fused_genre_kernel(
    x_ref,        # [B*S, H]        token+pos+type embeddings (pre-LN)
    mask_ref,     # [B*S, B*S]      additive attention mask (block-diag + key padding)
    pool_ref,     # [B, B*S]        mean-pooling matrix (1/S on own-batch columns)
    w2v_ref,      # [B, W2V_PAD]    zero-padded word2vec features
    hmask_ref,    # [HEADS, 1, H]   0/1 column masks selecting each head's columns
    emb_g_ref, emb_b_ref,           # [1, H]
    wqkv_ref, bqkv_ref,             # [L, H, QKV_WIDTH], [L, 1, QKV_WIDTH]
    wo_ref, bo_ref,                 # [L, H, H], [L, 1, H]
    ln1g_ref, ln1b_ref,             # [L, 1, H]
    w1_ref, b1_ref,                 # [L, H, INTER], [L, 1, INTER]
    w2_ref, b2_ref,                 # [L, INTER, H], [L, 1, H]
    ln2g_ref, ln2b_ref,             # [L, 1, H]
    clswh_ref,    # [H, C]
    clsww_ref,    # [W2V_PAD, C]
    clsb_ref,     # [1, C]
    out_ref,      # [B, C]
):
    def layer_norm(h, g, b):
        mu = jnp.mean(h, axis=-1, keepdims=True)
        var = jnp.mean((h - mu) ** 2, axis=-1, keepdims=True)
        return (h - mu) * jax.lax.rsqrt(var + LN_EPS) * g + b

    def gelu(h):
        # tanh approximation of BERT's erf-based GELU (drift < 1e-3)
        return 0.5 * h * (1.0 + jnp.tanh(0.7978845608028654 *
                                         (h + 0.044715 * h * h * h)))

    # embedding LayerNorm (plain LN, no zeros residual)
    x = layer_norm(x_ref[...], emb_g_ref[...], emb_b_ref[...])        # [BS, H]
    mask2d = mask_ref[...]                                             # [BS, BS]
    scale = 1.0 / (HEAD_DIM ** 0.5)

    for l in range(LAYERS):                    # static unroll (2 layers)
        # packed QKV projection: one MXU pass, lane-aligned output blocks
        qkv = jnp.dot(x, wqkv_ref[l], preferred_element_type=jnp.float32) + bqkv_ref[l]
        q = qkv[:, 0:HIDDEN]
        k = qkv[:, QKV_STRIDE:QKV_STRIDE + HIDDEN]
        v = qkv[:, 2 * QKV_STRIDE:2 * QKV_STRIDE + HIDDEN]

        # Multi-head attention with 0/1 column masks: (q*hm) @ k^T equals q_h @ k_h^T
        # because non-head columns contribute exact zeros, and p @ (v*hm) deposits the
        # head's context back into its own output columns, so the sum over heads
        # reproduces the usual "concat heads" layout — no slicing / transposes needed.
        ctx = jnp.zeros_like(x)
        for h in range(HEADS):
            hm = hmask_ref[h]                                          # [1, H]
            s = jnp.dot(q * hm, k.T, preferred_element_type=jnp.float32)
            s = s * scale + mask2d
            s = s - jnp.max(s, axis=-1, keepdims=True)
            p = jnp.exp(s)
            p = p * pl.reciprocal(jnp.sum(p, axis=-1, keepdims=True), approx=True)
            ctx = ctx + jnp.dot(p, v * hm, preferred_element_type=jnp.float32)

        attn_out = jnp.dot(ctx, wo_ref[l], preferred_element_type=jnp.float32) + bo_ref[l]
        x = layer_norm(x + attn_out, ln1g_ref[l], ln1b_ref[l])

        hmid = gelu(jnp.dot(x, w1_ref[l], preferred_element_type=jnp.float32) + b1_ref[l])
        ffn = jnp.dot(hmid, w2_ref[l], preferred_element_type=jnp.float32) + b2_ref[l]
        x = layer_norm(x + ffn, ln2g_ref[l], ln2b_ref[l])

    # mean pool over the sequence (== last_hidden_state.mean(1)) as a tiny matmul,
    # then the classifier with its weight split into pooled / w2v parts (no concat).
    pooled = jnp.dot(pool_ref[...], x, preferred_element_type=jnp.float32)        # [B, H]
    logits = (jnp.dot(pooled, clswh_ref[...], preferred_element_type=jnp.float32)
              + jnp.dot(w2v_ref[...], clsww_ref[...], preferred_element_type=jnp.float32)
              + clsb_ref[...])
    out_ref[...] = logits


def fused_forward(x_emb, mask2d, pool, w2v_p, kp):
    inputs = (x_emb, mask2d, pool, w2v_p,
              kp["head_mask"], kp["emb_ln_g"], kp["emb_ln_b"],
              kp["wqkv"], kp["bqkv"], kp["wo"], kp["bo"],
              kp["ln1_g"], kp["ln1_b"], kp["w1"], kp["b1"],
              kp["w2"], kp["b2"], kp["ln2_g"], kp["ln2_b"],
              kp["cls_w_h"], kp["cls_w_w2v"], kp["cls_b"])
    B = pool.shape[0]
    # Whole-array blocks: total footprint < 1 MiB, so everything sits in VMEM and the
    # kernel runs as a single grid step (no tiling / pipelining needed at this size).
    in_specs = [pl.BlockSpec(a.shape, lambda i, _nd=a.ndim: (0,) * _nd) for a in inputs]
    return pl.pallas_call(
        _fused_genre_kernel,
        out_shape=jax.ShapeDtypeStruct((B, NUM_CLASSES), jnp.float32),
        grid=(1,),
        in_specs=in_specs,
        out_specs=pl.BlockSpec((B, NUM_CLASSES), lambda i: (0, 0)),
        compiler_params=pltpu.CompilerParams(dimension_semantics=("arbitrary",)),
    )(*inputs)


@jax.jit
def genre_classifier_forward(kp, input_ids, attention_mask, w2v_embeddings):
    B, S = input_ids.shape
    # XLA glue: token-id gather + tiny static mask/pool tables; the rest is one kernel.
    emb = (kp["word_emb"][input_ids]
           + kp["pos_emb"][jnp.arange(S)][None, :, :]
           + kp["type_emb"][0][None, None, :])
    x_emb = emb.reshape(B * S, HIDDEN).astype(jnp.float32)

    batch_idx = jnp.arange(B * S) // S
    key_valid = attention_mask.reshape(B * S).astype(jnp.int32) > 0
    same_batch = batch_idx[:, None] == batch_idx[None, :]
    mask2d = jnp.where(same_batch & key_valid[None, :], 0.0, MASK_NEG).astype(jnp.float32)

    pool = (batch_idx[None, :] == jnp.arange(B)[:, None]).astype(jnp.float32) / float(S)

    w2v_p = jnp.zeros((B, W2V_PAD), jnp.float32).at[:, :W2V_DIM].set(
        w2v_embeddings.astype(jnp.float32))

    return fused_forward(x_emb, mask2d, pool, w2v_p, kp)


# ----------------------- parameters ----------------------------

def init_params(seed=0):
    key = jax.random.PRNGKey(seed)
    keys = iter(jax.random.split(key, 32))

    def nrm(shape):
        return (0.02 * jax.random.normal(next(keys), shape)).astype(jnp.float32)

    p = {
        "word_emb": nrm((VOCAB, HIDDEN)),
        "pos_emb": nrm((MAX_POS, HIDDEN)),
        "type_emb": nrm((TYPE_VOCAB, HIDDEN)),
        "emb_ln_g": jnp.ones((HIDDEN,), jnp.float32),
        "emb_ln_b": jnp.zeros((HIDDEN,), jnp.float32),
        "layers": [],
    }
    for _ in range(LAYERS):
        lp = {
            "wq": nrm((HIDDEN, HIDDEN)), "bq": jnp.zeros((HIDDEN,), jnp.float32),
            "wk": nrm((HIDDEN, HIDDEN)), "bk": jnp.zeros((HIDDEN,), jnp.float32),
            "wv": nrm((HIDDEN, HIDDEN)), "bv": jnp.zeros((HIDDEN,), jnp.float32),
            "wo": nrm((HIDDEN, HIDDEN)), "bo": jnp.zeros((HIDDEN,), jnp.float32),
            "ln1_g": jnp.ones((HIDDEN,), jnp.float32),
            "ln1_b": jnp.zeros((HIDDEN,), jnp.float32),
            "w1": nrm((HIDDEN, INTER)), "b1": jnp.zeros((INTER,), jnp.float32),
            "w2": nrm((INTER, HIDDEN)), "b2": jnp.zeros((HIDDEN,), jnp.float32),
            "ln2_g": jnp.ones((HIDDEN,), jnp.float32),
            "ln2_b": jnp.zeros((HIDDEN,), jnp.float32),
        }
        p["layers"].append(lp)
    # classifier: Linear(hidden_size + 300, 4); rows [0:H) act on pooled, [H:) on w2v
    p["cls_w"] = nrm((HIDDEN + W2V_DIM, NUM_CLASSES))
    p["cls_b"] = jnp.zeros((NUM_CLASSES,), jnp.float32)
    return p


def prepare_params(p):
    """Pack raw parameters into the kernel-friendly layout (done once, offline)."""
    layers = p["layers"]

    def stack_w(name):
        return jnp.stack([lp[name] for lp in layers], axis=0)

    def stack_v(name):
        return jnp.stack([lp[name].reshape(1, -1) for lp in layers], axis=0)

    wqkv = jnp.zeros((LAYERS, HIDDEN, QKV_WIDTH), jnp.float32)
    bqkv = jnp.zeros((LAYERS, 1, QKV_WIDTH), jnp.float32)
    for l, lp in enumerate(layers):
        for j, (wn, bn) in enumerate((("wq", "bq"), ("wk", "bk"), ("wv", "bv"))):
            off = j * QKV_STRIDE
            wqkv = wqkv.at[l, :, off:off + HIDDEN].set(lp[wn])
            bqkv = bqkv.at[l, 0, off:off + HIDDEN].set(lp[bn])

    head_mask = jnp.zeros((HEADS, 1, HIDDEN), jnp.float32)
    for h in range(HEADS):
        head_mask = head_mask.at[h, 0, h * HEAD_DIM:(h + 1) * HEAD_DIM].set(1.0)

    cls_w_w2v = jnp.zeros((W2V_PAD, NUM_CLASSES), jnp.float32)
    cls_w_w2v = cls_w_w2v.at[:W2V_DIM, :].set(p["cls_w"][HIDDEN:, :])

    return {
        "word_emb": p["word_emb"], "pos_emb": p["pos_emb"], "type_emb": p["type_emb"],
        "emb_ln_g": p["emb_ln_g"].reshape(1, HIDDEN),
        "emb_ln_b": p["emb_ln_b"].reshape(1, HIDDEN),
        "head_mask": head_mask,
        "wqkv": wqkv, "bqkv": bqkv,
        "wo": stack_w("wo"), "bo": stack_v("bo"),
        "ln1_g": stack_v("ln1_g"), "ln1_b": stack_v("ln1_b"),
        "w1": stack_w("w1"), "b1": stack_v("b1"),
        "w2": stack_w("w2"), "b2": stack_v("b2"),
        "ln2_g": stack_v("ln2_g"), "ln2_b": stack_v("ln2_b"),
        "cls_w_h": p["cls_w"][:HIDDEN, :],
        "cls_w_w2v": cls_w_w2v,
        "cls_b": p["cls_b"].reshape(1, NUM_CLASSES),
    }


# ----------------------- pure-JAX reference (correctness) -----------------------

def reference_forward(p, input_ids, attention_mask, w2v):
    B, S = input_ids.shape

    def ln(h, g, b):
        mu = h.mean(-1, keepdims=True)
        var = ((h - mu) ** 2).mean(-1, keepdims=True)
        return (h - mu) / jnp.sqrt(var + LN_EPS) * g + b

    def gelu(h):
        return 0.5 * h * (1.0 + jnp.tanh(0.7978845608028654 * (h + 0.044715 * h ** 3)))

    x = (p["word_emb"][input_ids]
         + p["pos_emb"][jnp.arange(S)][None]
         + p["type_emb"][0][None, None])
    x = ln(x, p["emb_ln_g"], p["emb_ln_b"])
    add_mask = (1.0 - attention_mask.astype(jnp.float32)) * MASK_NEG

    for lp in p["layers"]:
        q = x @ lp["wq"] + lp["bq"]
        k = x @ lp["wk"] + lp["bk"]
        v = x @ lp["wv"] + lp["bv"]

        def split(t):
            return t.reshape(B, S, HEADS, HEAD_DIM).transpose(0, 2, 1, 3)

        s = jnp.einsum("bhqd,bhkd->bhqk", split(q), split(k)) / (HEAD_DIM ** 0.5)
        s = s + add_mask[:, None, None, :]
        pr = jax.nn.softmax(s, axis=-1)
        ctx = (jnp.einsum("bhqk,bhkd->bhqd", pr, split(v))
               .transpose(0, 2, 1, 3).reshape(B, S, HIDDEN))
        x = ln(x + ctx @ lp["wo"] + lp["bo"], lp["ln1_g"], lp["ln1_b"])
        h1 = gelu(x @ lp["w1"] + lp["b1"])
        x = ln(x + h1 @ lp["w2"] + lp["b2"], lp["ln2_g"], lp["ln2_b"])

    pooled = x.mean(axis=1)                      # last_hidden_state.mean(1)
    cat = jnp.concatenate([pooled, w2v.astype(pooled.dtype)], axis=1)
    return cat @ p["cls_w"] + p["cls_b"]


if __name__ == "__main__":
    params = init_params(0)
    kparams = prepare_params(params)

    key = jax.random.PRNGKey(0)
    k1, k2, k3 = jax.random.split(key, 3)
    B, S = 2, 8
    input_ids = jax.random.randint(k1, (B, S), 0, VOCAB, dtype=jnp.int32)
    attention_mask = jnp.array([[1] * S, [1] * 6 + [0] * 2], dtype=jnp.int32)
    w2v = jax.random.normal(k3, (B, W2V_DIM), dtype=jnp.float32)

    logits = genre_classifier_forward(kparams, input_ids, attention_mask, w2v)
    logits = jax.block_until_ready(logits)
    assert logits.shape == (B, NUM_CLASSES) and logits.dtype == jnp.float32

    ref = reference_forward(params, input_ids, attention_mask, w2v)
    np.testing.assert_allclose(np.asarray(logits), np.asarray(ref), rtol=2e-2, atol=2e-2)

    print("KERNEL_OK")
</pallas_src>

<mosaic_0001>
module attributes {stable_mosaic.version = 11 : i64} {
  func.func @_fused_genre_kernel(%arg0: i32, %arg1: memref<16x64xf32, #tpu.memory_space<vmem>>, %arg2: memref<16x16xf32, #tpu.memory_space<vmem>>, %arg3: memref<2x16xf32, #tpu.memory_space<vmem>>, %arg4: memref<2x384xf32, #tpu.memory_space<vmem>>, %arg5: memref<4x1x64xf32, #tpu.memory_space<vmem>>, %arg6: memref<1x64xf32, #tpu.memory_space<vmem>>, %arg7: memref<1x64xf32, #tpu.memory_space<vmem>>, %arg8: memref<2x64x384xf32, #tpu.memory_space<vmem>>, %arg9: memref<2x1x384xf32, #tpu.memory_space<vmem>>, %arg10: memref<2x64x64xf32, #tpu.memory_space<vmem>>, %arg11: memref<2x1x64xf32, #tpu.memory_space<vmem>>, %arg12: memref<2x1x64xf32, #tpu.memory_space<vmem>>, %arg13: memref<2x1x64xf32, #tpu.memory_space<vmem>>, %arg14: memref<2x64x128xf32, #tpu.memory_space<vmem>>, %arg15: memref<2x1x128xf32, #tpu.memory_space<vmem>>, %arg16: memref<2x128x64xf32, #tpu.memory_space<vmem>>, %arg17: memref<2x1x64xf32, #tpu.memory_space<vmem>>, %arg18: memref<2x1x64xf32, #tpu.memory_space<vmem>>, %arg19: memref<2x1x64xf32, #tpu.memory_space<vmem>>, %arg20: memref<64x4xf32, #tpu.memory_space<vmem>>, %arg21: memref<384x4xf32, #tpu.memory_space<vmem>>, %arg22: memref<1x4xf32, #tpu.memory_space<vmem>>, %arg23: memref<2x4xf32, #tpu.memory_space<vmem>>) attributes {dimension_semantics = [#tpu.dimension_semantics<arbitrary>], iteration_bounds = array<i64: 1>, scalar_prefetch = 0 : i64, scratch_operands = 0 : i64, tpu.core_type = #tpu.core_type<tc>, window_params = [{pipeline_mode = #tpu.pipeline_mode<synchronous>, transform_indices = @transform_0, window_bounds = array<i64: 16, 64>}, {pipeline_mode = #tpu.pipeline_mode<synchronous>, transform_indices = @transform_1, window_bounds = array<i64: 16, 16>}, {pipeline_mode = #tpu.pipeline_mode<synchronous>, transform_indices = @transform_2, window_bounds = array<i64: 2, 16>}, {pipeline_mode = #tpu.pipeline_mode<synchronous>, transform_indices = @transform_3, window_bounds = array<i64: 2, 384>}, {pipeline_mode = #tpu.pipeline_mode<synchronous>, transform_indices = @transform_4, window_bounds = array<i64: 4, 1, 64>}, {pipeline_mode = #tpu.pipeline_mode<synchronous>, transform_indices = @transform_5, window_bounds = array<i64: 1, 64>}, {pipeline_mode = #tpu.pipeline_mode<synchronous>, transform_indices = @transform_6, window_bounds = array<i64: 1, 64>}, {pipeline_mode = #tpu.pipeline_mode<synchronous>, transform_indices = @transform_7, window_bounds = array<i64: 2, 64, 384>}, {pipeline_mode = #tpu.pipeline_mode<synchronous>, transform_indices = @transform_8, window_bounds = array<i64: 2, 1, 384>}, {pipeline_mode = #tpu.pipeline_mode<synchronous>, transform_indices = @transform_9, window_bounds = array<i64: 2, 64, 64>}, {pipeline_mode = #tpu.pipeline_mode<synchronous>, transform_indices = @transform_10, window_bounds = array<i64: 2, 1, 64>}, {pipeline_mode = #tpu.pipeline_mode<synchronous>, transform_indices = @transform_11, window_bounds = array<i64: 2, 1, 64>}, {pipeline_mode = #tpu.pipeline_mode<synchronous>, transform_indices = @transform_12, window_bounds = array<i64: 2, 1, 64>}, {pipeline_mode = #tpu.pipeline_mode<synchronous>, transform_indices = @transform_13, window_bounds = array<i64: 2, 64, 128>}, {pipeline_mode = #tpu.pipeline_mode<synchronous>, transform_indices = @transform_14, window_bounds = array<i64: 2, 1, 128>}, {pipeline_mode = #tpu.pipeline_mode<synchronous>, transform_indices = @transform_15, window_bounds = array<i64: 2, 128, 64>}, {pipeline_mode = #tpu.pipeline_mode<synchronous>, transform_indices = @transform_16, window_bounds = array<i64: 2, 1, 64>}, {pipeline_mode = #tpu.pipeline_mode<synchronous>, transform_indices = @transform_17, window_bounds = array<i64: 2, 1, 64>}, {pipeline_mode = #tpu.pipeline_mode<synchronous>, transform_indices = @transform_18, window_bounds = array<i64: 2, 1, 64>}, {pipeline_mode = #tpu.pipeline_mode<synchronous>, transform_indices = @transform_19, window_bounds = array<i64: 64, 4>}, {pipeline_mode = #tpu.pipeline_mode<synchronous>, transform_indices = @transform_20, window_bounds = array<i64: 384, 4>}, {pipeline_mode = #tpu.pipeline_mode<synchronous>, transform_indices = @transform_21, window_bounds = array<i64: 1, 4>}, {pipeline_mode = #tpu.pipeline_mode<synchronous>, transform_indices = @transform_22, window_bounds = array<i64: 2, 4>}]} {
    %c0 = arith.constant 0 : index
    %c0_0 = arith.constant 0 : index
    %0 = vector.load %arg1[%c0, %c0_0] : memref<16x64xf32, #tpu.memory_space<vmem>>, vector<16x64xf32>
    %c0_1 = arith.constant 0 : index
    %c0_2 = arith.constant 0 : index
    %1 = vector.load %arg6[%c0_1, %c0_2] : memref<1x64xf32, #tpu.memory_space<vmem>>, vector<1x64xf32>
    %c0_3 = arith.constant 0 : index
    %c0_4 = arith.constant 0 : index
    %2 = vector.load %arg7[%c0_3, %c0_4] : memref<1x64xf32, #tpu.memory_space<vmem>>, vector<1x64xf32>
    %cst = arith.constant dense<0.000000e+00> : vector<16xf32>
    %3 = vector.multi_reduction <add>, %0, %cst [1] : vector<16x64xf32> to vector<16xf32>
    %4 = vector.shape_cast %3 : vector<16xf32> to vector<16x1xf32>
    %cst_5 = arith.constant 6.400000e+01 : f32
    %5 = vector.broadcast %cst_5 : f32 to vector<16x1xf32>
    %6 = arith.divf %4, %5 : vector<16x1xf32>
    %7 = vector.broadcast %6 : vector<16x1xf32> to vector<16x64xf32>
    %8 = arith.subf %0, %7 : vector<16x64xf32>
    %9 = arith.mulf %8, %8 : vector<16x64xf32>
    %cst_6 = arith.constant dense<0.000000e+00> : vector<16xf32>
    %10 = vector.multi_reduction <add>, %9, %cst_6 [1] : vector<16x64xf32> to vector<16xf32>
    %11 = vector.shape_cast %10 : vector<16xf32> to vector<16x1xf32>
    %cst_7 = arith.constant 6.400000e+01 : f32
    %12 = vector.broadcast %cst_7 : f32 to vector<16x1xf32>
    %13 = arith.divf %11, %12 : vector<16x1xf32>
    %14 = vector.broadcast %6 : vector<16x1xf32> to vector<16x64xf32>
    %15 = arith.subf %0, %14 : vector<16x64xf32>
    %cst_8 = arith.constant 9.99999996E-13 : f32
    %16 = vector.broadcast %cst_8 : f32 to vector<16x1xf32>
    %17 = arith.addf %13, %16 : vector<16x1xf32>
    %18 = math.rsqrt %17 : vector<16x1xf32>
    %19 = vector.broadcast %18 : vector<16x1xf32> to vector<16x64xf32>
    %20 = arith.mulf %15, %19 : vector<16x64xf32>
    %21 = vector.broadcast %1 : vector<1x64xf32> to vector<16x64xf32>
    %22 = arith.mulf %20, %21 : vector<16x64xf32>
    %23 = vector.broadcast %2 : vector<1x64xf32> to vector<16x64xf32>
    %24 = arith.addf %22, %23 : vector<16x64xf32>
    %c0_9 = arith.constant 0 : index
    %c0_10 = arith.constant 0 : index
    %25 = vector.load %arg2[%c0_9, %c0_10] : memref<16x16xf32, #tpu.memory_space<vmem>>, vector<16x16xf32>
    %c0_11 = arith.constant 0 : index
    %c0_12 = arith.constant 0 : index
    %c0_13 = arith.constant 0 : index
    %26 = vector.load %arg8[%c0_11, %c0_12, %c0_13] : memref<2x64x384xf32, #tpu.memory_space<vmem>>, vector<1x64x384xf32>
    %27 = vector.shape_cast %26 : vector<1x64x384xf32> to vector<64x384xf32>
    %cst_14 = arith.constant dense<0.000000e+00> : vector<16x384xf32>
    %28 = tpu.matmul %24, %27, %cst_14 {dimension_numbers = #tpu.dot_dimension_numbers<[1], [0], [0], [1], [0, 0, 1, 1], [], []>} : vector<16x64xf32>, vector<64x384xf32>, vector<16x384xf32> -> vector<16x384xf32>
    %c0_15 = arith.constant 0 : index
    %c0_16 = arith.constant 0 : index
    %c0_17 = arith.constant 0 : index
    %29 = vector.load %arg9[%c0_15, %c0_16, %c0_17] : memref<2x1x384xf32, #tpu.memory_space<vmem>>, vector<1x1x384xf32>
    %30 = vector.shape_cast %29 : vector<1x1x384xf32> to vector<1x384xf32>
    %31 = vector.broadcast %30 : vector<1x384xf32> to vector<16x384xf32>
    %32 = arith.addf %28, %31 : vector<16x384xf32>
    %33 = vector.extract_strided_slice %32 {offsets = [0, 0], sizes = [16, 64], strides = [1, 1]} : vector<16x384xf32> to vector<16x64xf32>
    %34 = vector.extract_strided_slice %32 {offsets = [0, 128], sizes = [16, 64], strides = [1, 1]} : vector<16x384xf32> to vector<16x64xf32>
    %35 = vector.extract_strided_slice %32 {offsets = [0, 256], sizes = [16, 64], strides = [1, 1]} : vector<16x384xf32> to vector<16x64xf32>
    %cst_18 = arith.constant 0.000000e+00 : f32
    %36 = vector.broadcast %cst_18 : f32 to vector<16x64xf32>
    %c0_19 = arith.constant 0 : index
    %c0_20 = arith.constant 0 : index
    %c0_21 = arith.constant 0 : index
    %37 = vector.load %arg5[%c0_19, %c0_20, %c0_21] : memref<4x1x64xf32, #tpu.memory_space<vmem>>, vector<1x1x64xf32>
    %38 = vector.shape_cast %37 : vector<1x1x64xf32> to vector<1x64xf32>
    %39 = vector.broadcast %38 : vector<1x64xf32> to vector<16x64xf32>
    %40 = arith.mulf %33, %39 : vector<16x64xf32>
    %41 = tpu.transpose %34, [1, 0] : vector<16x64xf32> -> vector<64x16xf32>
    %cst_22 = arith.constant dense<0.000000e+00> : vector<16x16xf32>
    %42 = tpu.matmul %40, %41, %cst_22 {dimension_numbers = #tpu.dot_dimension_numbers<[1], [0], [0], [1], [0, 0, 1, 1], [], []>} : vector<16x64xf32>, vector<64x16xf32>, vector<16x16xf32> -> vector<16x16xf32>
    %cst_23 = arith.constant 2.500000e-01 : f32
    %43 = vector.broadcast %cst_23 : f32 to vector<16x16xf32>
    %44 = arith.mulf %42, %43 : vector<16x16xf32>
    %45 = arith.addf %44, %25 : vector<16x16xf32>
    %cst_24 = arith.constant dense<0xFF800000> : vector<16xf32>
    %46 = vector.multi_reduction <maximumf>, %45, %cst_24 [1] : vector<16x16xf32> to vector<16xf32>
    %47 = vector.shape_cast %46 : vector<16xf32> to vector<16x1xf32>
    %48 = vector.broadcast %47 : vector<16x1xf32> to vector<16x16xf32>
    %49 = arith.subf %45, %48 : vector<16x16xf32>
    %50 = math.exp %49 : vector<16x16xf32>
    %cst_25 = arith.constant dense<0.000000e+00> : vector<16xf32>
    %51 = vector.multi_reduction <add>, %50, %cst_25 [1] : vector<16x16xf32> to vector<16xf32>
    %52 = vector.shape_cast %51 : vector<16xf32> to vector<16x1xf32>
    %53 = tpu.reciprocal %52 {approx = true} : vector<16x1xf32> -> vector<16x1xf32>
    %54 = vector.broadcast %53 : vector<16x1xf32> to vector<16x16xf32>
    %55 = arith.mulf %50, %54 : vector<16x16xf32>
    %56 = vector.broadcast %38 : vector<1x64xf32> to vector<16x64xf32>
    %57 = arith.mulf %35, %56 : vector<16x64xf32>
    %cst_26 = arith.constant dense<0.000000e+00> : vector<16x64xf32>
    %58 = tpu.matmul %55, %57, %cst_26 {dimension_numbers = #tpu.dot_dimension_numbers<[1], [0], [0], [1], [0, 0, 1, 1], [], []>} : vector<16x16xf32>, vector<16x64xf32>, vector<16x64xf32> -> vector<16x64xf32>
    %59 = arith.addf %36, %58 : vector<16x64xf32>
    %c1 = arith.constant 1 : index
    %c0_27 = arith.constant 0 : index
    %c0_28 = arith.constant 0 : index
    %60 = vector.load %arg5[%c1, %c0_27, %c0_28] : memref<4x1x64xf32, #tpu.memory_space<vmem>>, vector<1x1x64xf32>
    %61 = vector.shape_cast %60 : vector<1x1x64xf32> to vector<1x64xf32>
    %62 = vector.broadcast %61 : vector<1x64xf32> to vector<16x64xf32>
    %63 = arith.mulf %33, %62 : vector<16x64xf32>
    %64 = tpu.transpose %34, [1, 0] : vector<16x64xf32> -> vector<64x16xf32>
    %cst_29 = arith.constant dense<0.000000e+00> : vector<16x16xf32>
    %65 = tpu.matmul %63, %64, %cst_29 {dimension_numbers = #tpu.dot_dimension_numbers<[1], [0], [0], [1], [0, 0, 1, 1], [], []>} : vector<16x64xf32>, vector<64x16xf32>, vector<16x16xf32> -> vector<16x16xf32>
    %cst_30 = arith.constant 2.500000e-01 : f32
    %66 = vector.broadcast %cst_30 : f32 to vector<16x16xf32>
    %67 = arith.mulf %65, %66 : vector<16x16xf32>
    %68 = arith.addf %67, %25 : vector<16x16xf32>
    %cst_31 = arith.constant dense<0xFF800000> : vector<16xf32>
    %69 = vector.multi_reduction <maximumf>, %68, %cst_31 [1] : vector<16x16xf32> to vector<16xf32>
    %70 = vector.shape_cast %69 : vector<16xf32> to vector<16x1xf32>
    %71 = vector.broadcast %70 : vector<16x1xf32> to vector<16x16xf32>
    %72 = arith.subf %68, %71 : vector<16x16xf32>
    %73 = math.exp %72 : vector<16x16xf32>
    %cst_32 = arith.constant dense<0.000000e+00> : vector<16xf32>
    %74 = vector.multi_reduction <add>, %73, %cst_32 [1] : vector<16x16xf32> to vector<16xf32>
    %75 = vector.shape_cast %74 : vector<16xf32> to vector<16x1xf32>
    %76 = tpu.reciprocal %75 {approx = true} : vector<16x1xf32> -> vector<16x1xf32>
    %77 = vector.broadcast %76 : vector<16x1xf32> to vector<16x16xf32>
    %78 = arith.mulf %73, %77 : vector<16x16xf32>
    %79 = vector.broadcast %61 : vector<1x64xf32> to vector<16x64xf32>
    %80 = arith.mulf %35, %79 : vector<16x64xf32>
    %cst_33 = arith.constant dense<0.000000e+00> : vector<16x64xf32>
    %81 = tpu.matmul %78, %80, %cst_33 {dimension_numbers = #tpu.dot_dimension_numbers<[1], [0], [0], [1], [0, 0, 1, 1], [], []>} : vector<16x16xf32>, vector<16x64xf32>, vector<16x64xf32> -> vector<16x64xf32>
    %82 = arith.addf %59, %81 : vector<16x64xf32>
    %c2 = arith.constant 2 : index
    %c0_34 = arith.constant 0 : index
    %c0_35 = arith.constant 0 : index
    %83 = vector.load %arg5[%c2, %c0_34, %c0_35] : memref<4x1x64xf32, #tpu.memory_space<vmem>>, vector<1x1x64xf32>
    %84 = vector.shape_cast %83 : vector<1x1x64xf32> to vector<1x64xf32>
    %85 = vector.broadcast %84 : vector<1x64xf32> to vector<16x64xf32>
    %86 = arith.mulf %33, %85 : vector<16x64xf32>
    %87 = tpu.transpose %34, [1, 0] : vector<16x64xf32> -> vector<64x16xf32>
    %cst_36 = arith.constant dense<0.000000e+00> : vector<16x16xf32>
    %88 = tpu.matmul %86, %87, %cst_36 {dimension_numbers = #tpu.dot_dimension_numbers<[1], [0], [0], [1], [0, 0, 1, 1], [], []>} : vector<16x64xf32>, vector<64x16xf32>, vector<16x16xf32> -> vector<16x16xf32>
    %cst_37 = arith.constant 2.500000e-01 : f32
    %89 = vector.broadcast %cst_37 : f32 to vector<16x16xf32>
    %90 = arith.mulf %88, %89 : vector<16x16xf32>
    %91 = arith.addf %90, %25 : vector<16x16xf32>
    %cst_38 = arith.constant dense<0xFF800000> : vector<16xf32>
    %92 = vector.multi_reduction <maximumf>, %91, %cst_38 [1] : vector<16x16xf32> to vector<16xf32>
    %93 = vector.shape_cast %92 : vector<16xf32> to vector<16x1xf32>
    %94 = vector.broadcast %93 : vector<16x1xf32> to vector<16x16xf32>
    %95 = arith.subf %91, %94 : vector<16x16xf32>
    %96 = math.exp %95 : vector<16x16xf32>
    %cst_39 = arith.constant dense<0.000000e+00> : vector<16xf32>
    %97 = vector.multi_reduction <add>, %96, %cst_39 [1] : vector<16x16xf32> to vector<16xf32>
    %98 = vector.shape_cast %97 : vector<16xf32> to vector<16x1xf32>
    %99 = tpu.reciprocal %98 {approx = true} : vector<16x1xf32> -> vector<16x1xf32>
    %100 = vector.broadcast %99 : vector<16x1xf32> to vector<16x16xf32>
    %101 = arith.mulf %96, %100 : vector<16x16xf32>
    %102 = vector.broadcast %84 : vector<1x64xf32> to vector<16x64xf32>
    %103 = arith.mulf %35, %102 : vector<16x64xf32>
    %cst_40 = arith.constant dense<0.000000e+00> : vector<16x64xf32>
    %104 = tpu.matmul %101, %103, %cst_40 {dimension_numbers = #tpu.dot_dimension_numbers<[1], [0], [0], [1], [0, 0, 1, 1], [], []>} : vector<16x16xf32>, vector<16x64xf32>, vector<16x64xf32> -> vector<16x64xf32>
    %105 = arith.addf %82, %104 : vector<16x64xf32>
    %c3 = arith.constant 3 : index
    %c0_41 = arith.constant 0 : index
    %c0_42 = arith.constant 0 : index
    %106 = vector.load %arg5[%c3, %c0_41, %c0_42] : memref<4x1x64xf32, #tpu.memory_space<vmem>>, vector<1x1x64xf32>
    %107 = vector.shape_cast %106 : vector<1x1x64xf32> to vector<1x64xf32>
    %108 = vector.broadcast %107 : vector<1x64xf32> to vector<16x64xf32>
    %109 = arith.mulf %33, %108 : vector<16x64xf32>
    %110 = tpu.transpose %34, [1, 0] : vector<16x64xf32> -> vector<64x16xf32>
    %cst_43 = arith.constant dense<0.000000e+00> : vector<16x16xf32>
    %111 = tpu.matmul %109, %110, %cst_43 {dimension_numbers = #tpu.dot_dimension_numbers<[1], [0], [0], [1], [0, 0, 1, 1], [], []>} : vector<16x64xf32>, vector<64x16xf32>, vector<16x16xf32> -> vector<16x16xf32>
    %cst_44 = arith.constant 2.500000e-01 : f32
    %112 = vector.broadcast %cst_44 : f32 to vector<16x16xf32>
    %113 = arith.mulf %111, %112 : vector<16x16xf32>
    %114 = arith.addf %113, %25 : vector<16x16xf32>
    %cst_45 = arith.constant dense<0xFF800000> : vector<16xf32>
    %115 = vector.multi_reduction <maximumf>, %114, %cst_45 [1] : vector<16x16xf32> to vector<16xf32>
    %116 = vector.shape_cast %115 : vector<16xf32> to vector<16x1xf32>
    %117 = vector.broadcast %116 : vector<16x1xf32> to vector<16x16xf32>
    %118 = arith.subf %114, %117 : vector<16x16xf32>
    %119 = math.exp %118 : vector<16x16xf32>
    %cst_46 = arith.constant dense<0.000000e+00> : vector<16xf32>
    %120 = vector.multi_reduction <add>, %119, %cst_46 [1] : vector<16x16xf32> to vector<16xf32>
    %121 = vector.shape_cast %120 : vector<16xf32> to vector<16x1xf32>
    %122 = tpu.reciprocal %121 {approx = true} : vector<16x1xf32> -> vector<16x1xf32>
    %123 = vector.broadcast %122 : vector<16x1xf32> to vector<16x16xf32>
    %124 = arith.mulf %119, %123 : vector<16x16xf32>
    %125 = vector.broadcast %107 : vector<1x64xf32> to vector<16x64xf32>
    %126 = arith.mulf %35, %125 : vector<16x64xf32>
    %cst_47 = arith.constant dense<0.000000e+00> : vector<16x64xf32>
    %127 = tpu.matmul %124, %126, %cst_47 {dimension_numbers = #tpu.dot_dimension_numbers<[1], [0], [0], [1], [0, 0, 1, 1], [], []>} : vector<16x16xf32>, vector<16x64xf32>, vector<16x64xf32> -> vector<16x64xf32>
    %128 = arith.addf %105, %127 : vector<16x64xf32>
    %c0_48 = arith.constant 0 : index
    %c0_49 = arith.constant 0 : index
    %c0_50 = arith.constant 0 : index
    %129 = vector.load %arg10[%c0_48, %c0_49, %c0_50] : memref<2x64x64xf32, #tpu.memory_space<vmem>>, vector<1x64x64xf32>
    %130 = vector.shape_cast %129 : vector<1x64x64xf32> to vector<64x64xf32>
    %cst_51 = arith.constant dense<0.000000e+00> : vector<16x64xf32>
    %131 = tpu.matmul %128, %130, %cst_51 {dimension_numbers = #tpu.dot_dimension_numbers<[1], [0], [0], [1], [0, 0, 1, 1], [], []>} : vector<16x64xf32>, vector<64x64xf32>, vector<16x64xf32> -> vector<16x64xf32>
    %c0_52 = arith.constant 0 : index
    %c0_53 = arith.constant 0 : index
    %c0_54 = arith.constant 0 : index
    %132 = vector.load %arg11[%c0_52, %c0_53, %c0_54] : memref<2x1x64xf32, #tpu.memory_space<vmem>>, vector<1x1x64xf32>
    %133 = vector.shape_cast %132 : vector<1x1x64xf32> to vector<1x64xf32>
    %134 = vector.broadcast %133 : vector<1x64xf32> to vector<16x64xf32>
    %135 = arith.addf %131, %134 : vector<16x64xf32>
    %136 = arith.addf %24, %135 : vector<16x64xf32>
    %c0_55 = arith.constant 0 : index
    %c0_56 = arith.constant 0 : index
    %c0_57 = arith.constant 0 : index
    %137 = vector.load %arg12[%c0_55, %c0_56, %c0_57] : memref<2x1x64xf32, #tpu.memory_space<vmem>>, vector<1x1x64xf32>
    %138 = vector.shape_cast %137 : vector<1x1x64xf32> to vector<1x64xf32>
    %c0_58 = arith.constant 0 : index
    %c0_59 = arith.constant 0 : index
    %c0_60 = arith.constant 0 : index
    %139 = vector.load %arg13[%c0_58, %c0_59, %c0_60] : memref<2x1x64xf32, #tpu.memory_space<vmem>>, vector<1x1x64xf32>
    %140 = vector.shape_cast %139 : vector<1x1x64xf32> to vector<1x64xf32>
    %cst_61 = arith.constant dense<0.000000e+00> : vector<16xf32>
    %141 = vector.multi_reduction <add>, %136, %cst_61 [1] : vector<16x64xf32> to vector<16xf32>
    %142 = vector.shape_cast %141 : vector<16xf32> to vector<16x1xf32>
    %cst_62 = arith.constant 6.400000e+01 : f32
    %143 = vector.broadcast %cst_62 : f32 to vector<16x1xf32>
    %144 = arith.divf %142, %143 : vector<16x1xf32>
    %145 = vector.broadcast %144 : vector<16x1xf32> to vector<16x64xf32>
    %146 = arith.subf %136, %145 : vector<16x64xf32>
    %147 = arith.mulf %146, %146 : vector<16x64xf32>
    %cst_63 = arith.constant dense<0.000000e+00> : vector<16xf32>
    %148 = vector.multi_reduction <add>, %147, %cst_63 [1] : vector<16x64xf32> to vector<16xf32>
    %149 = vector.shape_cast %148 : vector<16xf32> to vector<16x1xf32>
    %cst_64 = arith.constant 6.400000e+01 : f32
    %150 = vector.broadcast %cst_64 : f32 to vector<16x1xf32>
    %151 = arith.divf %149, %150 : vector<16x1xf32>
    %152 = vector.broadcast %144 : vector<16x1xf32> to vector<16x64xf32>
    %153 = arith.subf %136, %152 : vector<16x64xf32>
    %cst_65 = arith.constant 9.99999996E-13 : f32
    %154 = vector.broadcast %cst_65 : f32 to vector<16x1xf32>
    %155 = arith.addf %151, %154 : vector<16x1xf32>
    %156 = math.rsqrt %155 : vector<16x1xf32>
    %157 = vector.broadcast %156 : vector<16x1xf32> to vector<16x64xf32>
    %158 = arith.mulf %153, %157 : vector<16x64xf32>
    %159 = vector.broadcast %138 : vector<1x64xf32> to vector<16x64xf32>
    %160 = arith.mulf %158, %159 : vector<16x64xf32>
    %161 = vector.broadcast %140 : vector<1x64xf32> to vector<16x64xf32>
    %162 = arith.addf %160, %161 : vector<16x64xf32>
    %c0_66 = arith.constant 0 : index
    %c0_67 = arith.constant 0 : index
    %c0_68 = arith.constant 0 : index
    %163 = vector.load %arg14[%c0_66, %c0_67, %c0_68] : memref<2x64x128xf32, #tpu.memory_space<vmem>>, vector<1x64x128xf32>
    %164 = vector.shape_cast %163 : vector<1x64x128xf32> to vector<64x128xf32>
    %cst_69 = arith.constant dense<0.000000e+00> : vector<16x128xf32>
    %165 = tpu.matmul %162, %164, %cst_69 {dimension_numbers = #tpu.dot_dimension_numbers<[1], [0], [0], [1], [0, 0, 1, 1], [], []>} : vector<16x64xf32>, vector<64x128xf32>, vector<16x128xf32> -> vector<16x128xf32>
    %c0_70 = arith.constant 0 : index
    %c0_71 = arith.constant 0 : index
    %c0_72 = arith.constant 0 : index
    %166 = vector.load %arg15[%c0_70, %c0_71, %c0_72] : memref<2x1x128xf32, #tpu.memory_space<vmem>>, vector<1x1x128xf32>
    %167 = vector.shape_cast %166 : vector<1x1x128xf32> to vector<1x128xf32>
    %168 = vector.broadcast %167 : vector<1x128xf32> to vector<16x128xf32>
    %169 = arith.addf %165, %168 : vector<16x128xf32>
    %cst_73 = arith.constant 5.000000e-01 : f32
    %170 = vector.broadcast %cst_73 : f32 to vector<16x128xf32>
    %171 = arith.mulf %170, %169 : vector<16x128xf32>
    %cst_74 = arith.constant 4.471500e-02 : f32
    %172 = vector.broadcast %cst_74 : f32 to vector<16x128xf32>
    %173 = arith.mulf %172, %169 : vector<16x128xf32>
    %174 = arith.mulf %173, %169 : vector<16x128xf32>
    %175 = arith.mulf %174, %169 : vector<16x128xf32>
    %176 = arith.addf %169, %175 : vector<16x128xf32>
    %cst_75 = arith.constant 0.797884583 : f32
    %177 = vector.broadcast %cst_75 : f32 to vector<16x128xf32>
    %178 = arith.mulf %177, %176 : vector<16x128xf32>
    %179 = math.tanh %178 : vector<16x128xf32>
    %cst_76 = arith.constant 1.000000e+00 : f32
    %180 = vector.broadcast %cst_76 : f32 to vector<16x128xf32>
    %181 = arith.addf %180, %179 : vector<16x128xf32>
    %182 = arith.mulf %171, %181 : vector<16x128xf32>
    %c0_77 = arith.constant 0 : index
    %c0_78 = arith.constant 0 : index
    %c0_79 = arith.constant 0 : index
    %183 = vector.load %arg16[%c0_77, %c0_78, %c0_79] : memref<2x128x64xf32, #tpu.memory_space<vmem>>, vector<1x128x64xf32>
    %184 = vector.shape_cast %183 : vector<1x128x64xf32> to vector<128x64xf32>
    %cst_80 = arith.constant dense<0.000000e+00> : vector<16x64xf32>
    %185 = tpu.matmul %182, %184, %cst_80 {dimension_numbers = #tpu.dot_dimension_numbers<[1], [0], [0], [1], [0, 0, 1, 1], [], []>} : vector<16x128xf32>, vector<128x64xf32>, vector<16x64xf32> -> vector<16x64xf32>
    %c0_81 = arith.constant 0 : index
    %c0_82 = arith.constant 0 : index
    %c0_83 = arith.constant 0 : index
    %186 = vector.load %arg17[%c0_81, %c0_82, %c0_83] : memref<2x1x64xf32, #tpu.memory_space<vmem>>, vector<1x1x64xf32>
    %187 = vector.shape_cast %186 : vector<1x1x64xf32> to vector<1x64xf32>
    %188 = vector.broadcast %187 : vector<1x64xf32> to vector<16x64xf32>
    %189 = arith.addf %185, %188 : vector<16x64xf32>
    %190 = arith.addf %162, %189 : vector<16x64xf32>
    %c0_84 = arith.constant 0 : index
    %c0_85 = arith.constant 0 : index
    %c0_86 = arith.constant 0 : index
    %191 = vector.load %arg18[%c0_84, %c0_85, %c0_86] : memref<2x1x64xf32, #tpu.memory_space<vmem>>, vector<1x1x64xf32>
    %192 = vector.shape_cast %191 : vector<1x1x64xf32> to vector<1x64xf32>
    %c0_87 = arith.constant 0 : index
    %c0_88 = arith.constant 0 : index
    %c0_89 = arith.constant 0 : index
    %193 = vector.load %arg19[%c0_87, %c0_88, %c0_89] : memref<2x1x64xf32, #tpu.memory_space<vmem>>, vector<1x1x64xf32>
    %194 = vector.shape_cast %193 : vector<1x1x64xf32> to vector<1x64xf32>
    %cst_90 = arith.constant dense<0.000000e+00> : vector<16xf32>
    %195 = vector.multi_reduction <add>, %190, %cst_90 [1] : vector<16x64xf32> to vector<16xf32>
    %196 = vector.shape_cast %195 : vector<16xf32> to vector<16x1xf32>
    %cst_91 = arith.constant 6.400000e+01 : f32
    %197 = vector.broadcast %cst_91 : f32 to vector<16x1xf32>
    %198 = arith.divf %196, %197 : vector<16x1xf32>
    %199 = vector.broadcast %198 : vector<16x1xf32> to vector<16x64xf32>
    %200 = arith.subf %190, %199 : vector<16x64xf32>
    %201 = arith.mulf %200, %200 : vector<16x64xf32>
    %cst_92 = arith.constant dense<0.000000e+00> : vector<16xf32>
    %202 = vector.multi_reduction <add>, %201, %cst_92 [1] : vector<16x64xf32> to vector<16xf32>
    %203 = vector.shape_cast %202 : vector<16xf32> to vector<16x1xf32>
    %cst_93 = arith.constant 6.400000e+01 : f32
    %204 = vector.broadcast %cst_93 : f32 to vector<16x1xf32>
    %205 = arith.divf %203, %204 : vector<16x1xf32>
    %206 = vector.broadcast %198 : vector<16x1xf32> to vector<16x64xf32>
    %207 = arith.subf %190, %206 : vector<16x64xf32>
    %cst_94 = arith.constant 9.99999996E-13 : f32
    %208 = vector.broadcast %cst_94 : f32 to vector<16x1xf32>
    %209 = arith.addf %205, %208 : vector<16x1xf32>
    %210 = math.rsqrt %209 : vector<16x1xf32>
    %211 = vector.broadcast %210 : vector<16x1xf32> to vector<16x64xf32>
    %212 = arith.mulf %207, %211 : vector<16x64xf32>
    %213 = vector.broadcast %192 : vector<1x64xf32> to vector<16x64xf32>
    %214 = arith.mulf %212, %213 : vector<16x64xf32>
    %215 = vector.broadcast %194 : vector<1x64xf32> to vector<16x64xf32>
    %216 = arith.addf %214, %215 : vector<16x64xf32>
    %c1_95 = arith.constant 1 : index
    %c0_96 = arith.constant 0 : index
    %c0_97 = arith.constant 0 : index
    %217 = vector.load %arg8[%c1_95, %c0_96, %c0_97] : memref<2x64x384xf32, #tpu.memory_space<vmem>>, vector<1x64x384xf32>
    %218 = vector.shape_cast %217 : vector<1x64x384xf32> to vector<64x384xf32>
    %cst_98 = arith.constant dense<0.000000e+00> : vector<16x384xf32>
    %219 = tpu.matmul %216, %218, %cst_98 {dimension_numbers = #tpu.dot_dimension_numbers<[1], [0], [0], [1], [0, 0, 1, 1], [], []>} : vector<16x64xf32>, vector<64x384xf32>, vector<16x384xf32> -> vector<16x384xf32>
    %c1_99 = arith.constant 1 : index
    %c0_100 = arith.constant 0 : index
    %c0_101 = arith.constant 0 : index
    %220 = vector.load %arg9[%c1_99, %c0_100, %c0_101] : memref<2x1x384xf32, #tpu.memory_space<vmem>>, vector<1x1x384xf32>
    %221 = vector.shape_cast %220 : vector<1x1x384xf32> to vector<1x384xf32>
    %222 = vector.broadcast %221 : vector<1x384xf32> to vector<16x384xf32>
    %223 = arith.addf %219, %222 : vector<16x384xf32>
    %224 = vector.extract_strided_slice %223 {offsets = [0, 0], sizes = [16, 64], strides = [1, 1]} : vector<16x384xf32> to vector<16x64xf32>
    %225 = vector.extract_strided_slice %223 {offsets = [0, 128], sizes = [16, 64], strides = [1, 1]} : vector<16x384xf32> to vector<16x64xf32>
    %226 = vector.extract_strided_slice %223 {offsets = [0, 256], sizes = [16, 64], strides = [1, 1]} : vector<16x384xf32> to vector<16x64xf32>
    %cst_102 = arith.constant 0.000000e+00 : f32
    %227 = vector.broadcast %cst_102 : f32 to vector<16x64xf32>
    %c0_103 = arith.constant 0 : index
    %c0_104 = arith.constant 0 : index
    %c0_105 = arith.constant 0 : index
    %228 = vector.load %arg5[%c0_103, %c0_104, %c0_105] : memref<4x1x64xf32, #tpu.memory_space<vmem>>, vector<1x1x64xf32>
    %229 = vector.shape_cast %228 : vector<1x1x64xf32> to vector<1x64xf32>
    %230 = vector.broadcast %229 : vector<1x64xf32> to vector<16x64xf32>
    %231 = arith.mulf %224, %230 : vector<16x64xf32>
    %232 = tpu.transpose %225, [1, 0] : vector<16x64xf32> -> vector<64x16xf32>
    %cst_106 = arith.constant dense<0.000000e+00> : vector<16x16xf32>
    %233 = tpu.matmul %231, %232, %cst_106 {dimension_numbers = #tpu.dot_dimension_numbers<[1], [0], [0], [1], [0, 0, 1, 1], [], []>} : vector<16x64xf32>, vector<64x16xf32>, vector<16x16xf32> -> vector<16x16xf32>
    %cst_107 = arith.constant 2.500000e-01 : f32
    %234 = vector.broadcast %cst_107 : f32 to vector<16x16xf32>
    %235 = arith.mulf %233, %234 : vector<16x16xf32>
    %236 = arith.addf %235, %25 : vector<16x16xf32>
    %cst_108 = arith.constant dense<0xFF800000> : vector<16xf32>
    %237 = vector.multi_reduction <maximumf>, %236, %cst_108 [1] : vector<16x16xf32> to vector<16xf32>
    %238 = vector.shape_cast %237 : vector<16xf32> to vector<16x1xf32>
    %239 = vector.broadcast %238 : vector<16x1xf32> to vector<16x16xf32>
    %240 = arith.subf %236, %239 : vector<16x16xf32>
    %241 = math.exp %240 : vector<16x16xf32>
    %cst_109 = arith.constant dense<0.000000e+00> : vector<16xf32>
    %242 = vector.multi_reduction <add>, %241, %cst_109 [1] : vector<16x16xf32> to vector<16xf32>
    %243 = vector.shape_cast %242 : vector<16xf32> to vector<16x1xf32>
    %244 = tpu.reciprocal %243 {approx = true} : vector<16x1xf32> -> vector<16x1xf32>
    %245 = vector.broadcast %244 : vector<16x1xf32> to vector<16x16xf32>
    %246 = arith.mulf %241, %245 : vector<16x16xf32>
    %247 = vector.broadcast %229 : vector<1x64xf32> to vector<16x64xf32>
    %248 = arith.mulf %226, %247 : vector<16x64xf32>
    %cst_110 = arith.constant dense<0.000000e+00> : vector<16x64xf32>
    %249 = tpu.matmul %246, %248, %cst_110 {dimension_numbers = #tpu.dot_dimension_numbers<[1], [0], [0], [1], [0, 0, 1, 1], [], []>} : vector<16x16xf32>, vector<16x64xf32>, vector<16x64xf32> -> vector<16x64xf32>
    %250 = arith.addf %227, %249 : vector<16x64xf32>
    %c1_111 = arith.constant 1 : index
    %c0_112 = arith.constant 0 : index
    %c0_113 = arith.constant 0 : index
    %251 = vector.load %arg5[%c1_111, %c0_112, %c0_113] : memref<4x1x64xf32, #tpu.memory_space<vmem>>, vector<1x1x64xf32>
    %252 = vector.shape_cast %251 : vector<1x1x64xf32> to vector<1x64xf32>
    %253 = vector.broadcast %252 : vector<1x64xf32> to vector<16x64xf32>
    %254 = arith.mulf %224, %253 : vector<16x64xf32>
    %255 = tpu.transpose %225, [1, 0] : vector<16x64xf32> -> vector<64x16xf32>
    %cst_114 = arith.constant dense<0.000000e+00> : vector<16x16xf32>
    %256 = tpu.matmul %254, %255, %cst_114 {dimension_numbers = #tpu.dot_dimension_numbers<[1], [0], [0], [1], [0, 0, 1, 1], [], []>} : vector<16x64xf32>, vector<64x16xf32>, vector<16x16xf32> -> vector<16x16xf32>
    %cst_115 = arith.constant 2.500000e-01 : f32
    %257 = vector.broadcast %cst_115 : f32 to vector<16x16xf32>
    %258 = arith.mulf %256, %257 : vector<16x16xf32>
    %259 = arith.addf %258, %25 : vector<16x16xf32>
    %cst_116 = arith.constant dense<0xFF800000> : vector<16xf32>
    %260 = vector.multi_reduction <maximumf>, %259, %cst_116 [1] : vector<16x16xf32> to vector<16xf32>
    %261 = vector.shape_cast %260 : vector<16xf32> to vector<16x1xf32>
    %262 = vector.broadcast %261 : vector<16x1xf32> to vector<16x16xf32>
    %263 = arith.subf %259, %262 : vector<16x16xf32>
    %264 = math.exp %263 : vector<16x16xf32>
    %cst_117 = arith.constant dense<0.000000e+00> : vector<16xf32>
    %265 = vector.multi_reduction <add>, %264, %cst_117 [1] : vector<16x16xf32> to vector<16xf32>
    %266 = vector.shape_cast %265 : vector<16xf32> to vector<16x1xf32>
    %267 = tpu.reciprocal %266 {approx = true} : vector<16x1xf32> -> vector<16x1xf32>
    %268 = vector.broadcast %267 : vector<16x1xf32> to vector<16x16xf32>
    %269 = arith.mulf %264, %268 : vector<16x16xf32>
    %270 = vector.broadcast %252 : vector<1x64xf32> to vector<16x64xf32>
    %271 = arith.mulf %226, %270 : vector<16x64xf32>
    %cst_118 = arith.constant dense<0.000000e+00> : vector<16x64xf32>
    %272 = tpu.matmul %269, %271, %cst_118 {dimension_numbers = #tpu.dot_dimension_numbers<[1], [0], [0], [1], [0, 0, 1, 1], [], []>} : vector<16x16xf32>, vector<16x64xf32>, vector<16x64xf32> -> vector<16x64xf32>
    %273 = arith.addf %250, %272 : vector<16x64xf32>
    %c2_119 = arith.constant 2 : index
    %c0_120 = arith.constant 0 : index
    %c0_121 = arith.constant 0 : index
    %274 = vector.load %arg5[%c2_119, %c0_120, %c0_121] : memref<4x1x64xf32, #tpu.memory_space<vmem>>, vector<1x1x64xf32>
    %275 = vector.shape_cast %274 : vector<1x1x64xf32> to vector<1x64xf32>
    %276 = vector.broadcast %275 : vector<1x64xf32> to vector<16x64xf32>
    %277 = arith.mulf %224, %276 : vector<16x64xf32>
    %278 = tpu.transpose %225, [1, 0] : vector<16x64xf32> -> vector<64x16xf32>
    %cst_122 = arith.constant dense<0.000000e+00> : vector<16x16xf32>
    %279 = tpu.matmul %277, %278, %cst_122 {dimension_numbers = #tpu.dot_dimension_numbers<[1], [0], [0], [1], [0, 0, 1, 1], [], []>} : vector<16x64xf32>, vector<64x16xf32>, vector<16x16xf32> -> vector<16x16xf32>
    %cst_123 = arith.constant 2.500000e-01 : f32
    %280 = vector.broadcast %cst_123 : f32 to vector<16x16xf32>
    %281 = arith.mulf %279, %280 : vector<16x16xf32>
    %282 = arith.addf %281, %25 : vector<16x16xf32>
    %cst_124 = arith.constant dense<0xFF800000> : vector<16xf32>
    %283 = vector.multi_reduction <maximumf>, %282, %cst_124 [1] : vector<16x16xf32> to vector<16xf32>
    %284 = vector.shape_cast %283 : vector<16xf32> to vector<16x1xf32>
    %285 = vector.broadcast %284 : vector<16x1xf32> to vector<16x16xf32>
    %286 = arith.subf %282, %285 : vector<16x16xf32>
    %287 = math.exp %286 : vector<16x16xf32>
    %cst_125 = arith.constant dense<0.000000e+00> : vector<16xf32>
    %288 = vector.multi_reduction <add>, %287, %cst_125 [1] : vector<16x16xf32> to vector<16xf32>
    %289 = vector.shape_cast %288 : vector<16xf32> to vector<16x1xf32>
    %290 = tpu.reciprocal %289 {approx = true} : vector<16x1xf32> -> vector<16x1xf32>
    %291 = vector.broadcast %290 : vector<16x1xf32> to vector<16x16xf32>
    %292 = arith.mulf %287, %291 : vector<16x16xf32>
    %293 = vector.broadcast %275 : vector<1x64xf32> to vector<16x64xf32>
    %294 = arith.mulf %226, %293 : vector<16x64xf32>
    %cst_126 = arith.constant dense<0.000000e+00> : vector<16x64xf32>
    %295 = tpu.matmul %292, %294, %cst_126 {dimension_numbers = #tpu.dot_dimension_numbers<[1], [0], [0], [1], [0, 0, 1, 1], [], []>} : vector<16x16xf32>, vector<16x64xf32>, vector<16x64xf32> -> vector<16x64xf32>
    %296 = arith.addf %273, %295 : vector<16x64xf32>
    %c3_127 = arith.constant 3 : index
    %c0_128 = arith.constant 0 : index
    %c0_129 = arith.constant 0 : index
    %297 = vector.load %arg5[%c3_127, %c0_128, %c0_129] : memref<4x1x64xf32, #tpu.memory_space<vmem>>, vector<1x1x64xf32>
    %298 = vector.shape_cast %297 : vector<1x1x64xf32> to vector<1x64xf32>
    %299 = vector.broadcast %298 : vector<1x64xf32> to vector<16x64xf32>
    %300 = arith.mulf %224, %299 : vector<16x64xf32>
    %301 = tpu.transpose %225, [1, 0] : vector<16x64xf32> -> vector<64x16xf32>
    %cst_130 = arith.constant dense<0.000000e+00> : vector<16x16xf32>
    %302 = tpu.matmul %300, %301, %cst_130 {dimension_numbers = #tpu.dot_dimension_numbers<[1], [0], [0], [1], [0, 0, 1, 1], [], []>} : vector<16x64xf32>, vector<64x16xf32>, vector<16x16xf32> -> vector<16x16xf32>
    %cst_131 = arith.constant 2.500000e-01 : f32
    %303 = vector.broadcast %cst_131 : f32 to vector<16x16xf32>
    %304 = arith.mulf %302, %303 : vector<16x16xf32>
    %305 = arith.addf %304, %25 : vector<16x16xf32>
    %cst_132 = arith.constant dense<0xFF800000> : vector<16xf32>
    %306 = vector.multi_reduction <maximumf>, %305, %cst_132 [1] : vector<16x16xf32> to vector<16xf32>
    %307 = vector.shape_cast %306 : vector<16xf32> to vector<16x1xf32>
    %308 = vector.broadcast %307 : vector<16x1xf32> to vector<16x16xf32>
    %309 = arith.subf %305, %308 : vector<16x16xf32>
    %310 = math.exp %309 : vector<16x16xf32>
    %cst_133 = arith.constant dense<0.000000e+00> : vector<16xf32>
    %311 = vector.multi_reduction <add>, %310, %cst_133 [1] : vector<16x16xf32> to vector<16xf32>
    %312 = vector.shape_cast %311 : vector<16xf32> to vector<16x1xf32>
    %313 = tpu.reciprocal %312 {approx = true} : vector<16x1xf32> -> vector<16x1xf32>
    %314 = vector.broadcast %313 : vector<16x1xf32> to vector<16x16xf32>
    %315 = arith.mulf %310, %314 : vector<16x16xf32>
    %316 = vector.broadcast %298 : vector<1x64xf32> to vector<16x64xf32>
    %317 = arith.mulf %226, %316 : vector<16x64xf32>
    %cst_134 = arith.constant dense<0.000000e+00> : vector<16x64xf32>
    %318 = tpu.matmul %315, %317, %cst_134 {dimension_numbers = #tpu.dot_dimension_numbers<[1], [0], [0], [1], [0, 0, 1, 1], [], []>} : vector<16x16xf32>, vector<16x64xf32>, vector<16x64xf32> -> vector<16x64xf32>
    %319 = arith.addf %296, %318 : vector<16x64xf32>
    %c1_135 = arith.constant 1 : index
    %c0_136 = arith.constant 0 : index
    %c0_137 = arith.constant 0 : index
    %320 = vector.load %arg10[%c1_135, %c0_136, %c0_137] : memref<2x64x64xf32, #tpu.memory_space<vmem>>, vector<1x64x64xf32>
    %321 = vector.shape_cast %320 : vector<1x64x64xf32> to vector<64x64xf32>
    %cst_138 = arith.constant dense<0.000000e+00> : vector<16x64xf32>
    %322 = tpu.matmul %319, %321, %cst_138 {dimension_numbers = #tpu.dot_dimension_numbers<[1], [0], [0], [1], [0, 0, 1, 1], [], []>} : vector<16x64xf32>, vector<64x64xf32>, vector<16x64xf32> -> vector<16x64xf32>
    %c1_139 = arith.constant 1 : index
    %c0_140 = arith.constant 0 : index
    %c0_141 = arith.constant 0 : index
    %323 = vector.load %arg11[%c1_139, %c0_140, %c0_141] : memref<2x1x64xf32, #tpu.memory_space<vmem>>, vector<1x1x64xf32>
    %324 = vector.shape_cast %323 : vector<1x1x64xf32> to vector<1x64xf32>
    %325 = vector.broadcast %324 : vector<1x64xf32> to vector<16x64xf32>
    %326 = arith.addf %322, %325 : vector<16x64xf32>
    %327 = arith.addf %216, %326 : vector<16x64xf32>
    %c1_142 = arith.constant 1 : index
    %c0_143 = arith.constant 0 : index
    %c0_144 = arith.constant 0 : index
    %328 = vector.load %arg12[%c1_142, %c0_143, %c0_144] : memref<2x1x64xf32, #tpu.memory_space<vmem>>, vector<1x1x64xf32>
    %329 = vector.shape_cast %328 : vector<1x1x64xf32> to vector<1x64xf32>
    %c1_145 = arith.constant 1 : index
    %c0_146 = arith.constant 0 : index
    %c0_147 = arith.constant 0 : index
    %330 = vector.load %arg13[%c1_145, %c0_146, %c0_147] : memref<2x1x64xf32, #tpu.memory_space<vmem>>, vector<1x1x64xf32>
    %331 = vector.shape_cast %330 : vector<1x1x64xf32> to vector<1x64xf32>
    %cst_148 = arith.constant dense<0.000000e+00> : vector<16xf32>
    %332 = vector.multi_reduction <add>, %327, %cst_148 [1] : vector<16x64xf32> to vector<16xf32>
    %333 = vector.shape_cast %332 : vector<16xf32> to vector<16x1xf32>
    %cst_149 = arith.constant 6.400000e+01 : f32
    %334 = vector.broadcast %cst_149 : f32 to vector<16x1xf32>
    %335 = arith.divf %333, %334 : vector<16x1xf32>
    %336 = vector.broadcast %335 : vector<16x1xf32> to vector<16x64xf32>
    %337 = arith.subf %327, %336 : vector<16x64xf32>
    %338 = arith.mulf %337, %337 : vector<16x64xf32>
    %cst_150 = arith.constant dense<0.000000e+00> : vector<16xf32>
    %339 = vector.multi_reduction <add>, %338, %cst_150 [1] : vector<16x64xf32> to vector<16xf32>
    %340 = vector.shape_cast %339 : vector<16xf32> to vector<16x1xf32>
    %cst_151 = arith.constant 6.400000e+01 : f32
    %341 = vector.broadcast %cst_151 : f32 to vector<16x1xf32>
    %342 = arith.divf %340, %341 : vector<16x1xf32>
    %343 = vector.broadcast %335 : vector<16x1xf32> to vector<16x64xf32>
    %344 = arith.subf %327, %343 : vector<16x64xf32>
    %cst_152 = arith.constant 9.99999996E-13 : f32
    %345 = vector.broadcast %cst_152 : f32 to vector<16x1xf32>
    %346 = arith.addf %342, %345 : vector<16x1xf32>
    %347 = math.rsqrt %346 : vector<16x1xf32>
    %348 = vector.broadcast %347 : vector<16x1xf32> to vector<16x64xf32>
    %349 = arith.mulf %344, %348 : vector<16x64xf32>
    %350 = vector.broadcast %329 : vector<1x64xf32> to vector<16x64xf32>
    %351 = arith.mulf %349, %350 : vector<16x64xf32>
    %352 = vector.broadcast %331 : vector<1x64xf32> to vector<16x64xf32>
    %353 = arith.addf %351, %352 : vector<16x64xf32>
    %c1_153 = arith.constant 1 : index
    %c0_154 = arith.constant 0 : index
    %c0_155 = arith.constant 0 : index
    %354 = vector.load %arg14[%c1_153, %c0_154, %c0_155] : memref<2x64x128xf32, #tpu.memory_space<vmem>>, vector<1x64x128xf32>
    %355 = vector.shape_cast %354 : vector<1x64x128xf32> to vector<64x128xf32>
    %cst_156 = arith.constant dense<0.000000e+00> : vector<16x128xf32>
    %356 = tpu.matmul %353, %355, %cst_156 {dimension_numbers = #tpu.dot_dimension_numbers<[1], [0], [0], [1], [0, 0, 1, 1], [], []>} : vector<16x64xf32>, vector<64x128xf32>, vector<16x128xf32> -> vector<16x128xf32>
    %c1_157 = arith.constant 1 : index
    %c0_158 = arith.constant 0 : index
    %c0_159 = arith.constant 0 : index
    %357 = vector.load %arg15[%c1_157, %c0_158, %c0_159] : memref<2x1x128xf32, #tpu.memory_space<vmem>>, vector<1x1x128xf32>
    %358 = vector.shape_cast %357 : vector<1x1x128xf32> to vector<1x128xf32>
    %359 = vector.broadcast %358 : vector<1x128xf32> to vector<16x128xf32>
    %360 = arith.addf %356, %359 : vector<16x128xf32>
    %cst_160 = arith.constant 5.000000e-01 : f32
    %361 = vector.broadcast %cst_160 : f32 to vector<16x128xf32>
    %362 = arith.mulf %361, %360 : vector<16x128xf32>
    %cst_161 = arith.constant 4.471500e-02 : f32
    %363 = vector.broadcast %cst_161 : f32 to vector<16x128xf32>
    %364 = arith.mulf %363, %360 : vector<16x128xf32>
    %365 = arith.mulf %364, %360 : vector<16x128xf32>
    %366 = arith.mulf %365, %360 : vector<16x128xf32>
    %367 = arith.addf %360, %366 : vector<16x128xf32>
    %cst_162 = arith.constant 0.797884583 : f32
    %368 = vector.broadcast %cst_162 : f32 to vector<16x128xf32>
    %369 = arith.mulf %368, %367 : vector<16x128xf32>
    %370 = math.tanh %369 : vector<16x128xf32>
    %cst_163 = arith.constant 1.000000e+00 : f32
    %371 = vector.broadcast %cst_163 : f32 to vector<16x128xf32>
    %372 = arith.addf %371, %370 : vector<16x128xf32>
    %373 = arith.mulf %362, %372 : vector<16x128xf32>
    %c1_164 = arith.constant 1 : index
    %c0_165 = arith.constant 0 : index
    %c0_166 = arith.constant 0 : index
    %374 = vector.load %arg16[%c1_164, %c0_165, %c0_166] : memref<2x128x64xf32, #tpu.memory_space<vmem>>, vector<1x128x64xf32>
    %375 = vector.shape_cast %374 : vector<1x128x64xf32> to vector<128x64xf32>
    %cst_167 = arith.constant dense<0.000000e+00> : vector<16x64xf32>
    %376 = tpu.matmul %373, %375, %cst_167 {dimension_numbers = #tpu.dot_dimension_numbers<[1], [0], [0], [1], [0, 0, 1, 1], [], []>} : vector<16x128xf32>, vector<128x64xf32>, vector<16x64xf32> -> vector<16x64xf32>
    %c1_168 = arith.constant 1 : index
    %c0_169 = arith.constant 0 : index
    %c0_170 = arith.constant 0 : index
    %377 = vector.load %arg17[%c1_168, %c0_169, %c0_170] : memref<2x1x64xf32, #tpu.memory_space<vmem>>, vector<1x1x64xf32>
    %378 = vector.shape_cast %377 : vector<1x1x64xf32> to vector<1x64xf32>
    %379 = vector.broadcast %378 : vector<1x64xf32> to vector<16x64xf32>
    %380 = arith.addf %376, %379 : vector<16x64xf32>
    %381 = arith.addf %353, %380 : vector<16x64xf32>
    %c1_171 = arith.constant 1 : index
    %c0_172 = arith.constant 0 : index
    %c0_173 = arith.constant 0 : index
    %382 = vector.load %arg18[%c1_171, %c0_172, %c0_173] : memref<2x1x64xf32, #tpu.memory_space<vmem>>, vector<1x1x64xf32>
    %383 = vector.shape_cast %382 : vector<1x1x64xf32> to vector<1x64xf32>
    %c1_174 = arith.constant 1 : index
    %c0_175 = arith.constant 0 : index
    %c0_176 = arith.constant 0 : index
    %384 = vector.load %arg19[%c1_174, %c0_175, %c0_176] : memref<2x1x64xf32, #tpu.memory_space<vmem>>, vector<1x1x64xf32>
    %385 = vector.shape_cast %384 : vector<1x1x64xf32> to vector<1x64xf32>
    %cst_177 = arith.constant dense<0.000000e+00> : vector<16xf32>
    %386 = vector.multi_reduction <add>, %381, %cst_177 [1] : vector<16x64xf32> to vector<16xf32>
    %387 = vector.shape_cast %386 : vector<16xf32> to vector<16x1xf32>
    %cst_178 = arith.constant 6.400000e+01 : f32
    %388 = vector.broadcast %cst_178 : f32 to vector<16x1xf32>
    %389 = arith.divf %387, %388 : vector<16x1xf32>
    %390 = vector.broadcast %389 : vector<16x1xf32> to vector<16x64xf32>
    %391 = arith.subf %381, %390 : vector<16x64xf32>
    %392 = arith.mulf %391, %391 : vector<16x64xf32>
    %cst_179 = arith.constant dense<0.000000e+00> : vector<16xf32>
    %393 = vector.multi_reduction <add>, %392, %cst_179 [1] : vector<16x64xf32> to vector<16xf32>
    %394 = vector.shape_cast %393 : vector<16xf32> to vector<16x1xf32>
    %cst_180 = arith.constant 6.400000e+01 : f32
    %395 = vector.broadcast %cst_180 : f32 to vector<16x1xf32>
    %396 = arith.divf %394, %395 : vector<16x1xf32>
    %397 = vector.broadcast %389 : vector<16x1xf32> to vector<16x64xf32>
    %398 = arith.subf %381, %397 : vector<16x64xf32>
    %cst_181 = arith.constant 9.99999996E-13 : f32
    %399 = vector.broadcast %cst_181 : f32 to vector<16x1xf32>
    %400 = arith.addf %396, %399 : vector<16x1xf32>
    %401 = math.rsqrt %400 : vector<16x1xf32>
    %402 = vector.broadcast %401 : vector<16x1xf32> to vector<16x64xf32>
    %403 = arith.mulf %398, %402 : vector<16x64xf32>
    %404 = vector.broadcast %383 : vector<1x64xf32> to vector<16x64xf32>
    %405 = arith.mulf %403, %404 : vector<16x64xf32>
    %406 = vector.broadcast %385 : vector<1x64xf32> to vector<16x64xf32>
    %407 = arith.addf %405, %406 : vector<16x64xf32>
    %c0_182 = arith.constant 0 : index
    %c0_183 = arith.constant 0 : index
    %408 = vector.load %arg3[%c0_182, %c0_183] : memref<2x16xf32, #tpu.memory_space<vmem>>, vector<2x16xf32>
    %cst_184 = arith.constant dense<0.000000e+00> : vector<2x64xf32>
    %409 = tpu.matmul %408, %407, %cst_184 {dimension_numbers = #tpu.dot_dimension_numbers<[1], [0], [0], [1], [0, 0, 1, 1], [], []>} : vector<2x16xf32>, vector<16x64xf32>, vector<2x64xf32> -> vector<2x64xf32>
    %c0_185 = arith.constant 0 : index
    %c0_186 = arith.constant 0 : index
    %410 = vector.load %arg20[%c0_185, %c0_186] : memref<64x4xf32, #tpu.memory_space<vmem>>, vector<64x4xf32>
    %cst_187 = arith.constant dense<0.000000e+00> : vector<2x4xf32>
    %411 = tpu.matmul %409, %410, %cst_187 {dimension_numbers = #tpu.dot_dimension_numbers<[1], [0], [0], [1], [0, 0, 1, 1], [], []>} : vector<2x64xf32>, vector<64x4xf32>, vector<2x4xf32> -> vector<2x4xf32>
    %c0_188 = arith.constant 0 : index
    %c0_189 = arith.constant 0 : index
    %412 = vector.load %arg4[%c0_188, %c0_189] : memref<2x384xf32, #tpu.memory_space<vmem>>, vector<2x384xf32>
    %c0_190 = arith.constant 0 : index
    %c0_191 = arith.constant 0 : index
    %413 = vector.load %arg21[%c0_190, %c0_191] : memref<384x4xf32, #tpu.memory_space<vmem>>, vector<384x4xf32>
    %cst_192 = arith.constant dense<0.000000e+00> : vector<2x4xf32>
    %414 = tpu.matmul %412, %413, %cst_192 {dimension_numbers = #tpu.dot_dimension_numbers<[1], [0], [0], [1], [0, 0, 1, 1], [], []>} : vector<2x384xf32>, vector<384x4xf32>, vector<2x4xf32> -> vector<2x4xf32>
    %415 = arith.addf %411, %414 : vector<2x4xf32>
    %c0_193 = arith.constant 0 : index
    %c0_194 = arith.constant 0 : index
    %416 = vector.load %arg22[%c0_193, %c0_194] : memref<1x4xf32, #tpu.memory_space<vmem>>, vector<1x4xf32>
    %417 = vector.broadcast %416 : vector<1x4xf32> to vector<2x4xf32>
    %418 = arith.addf %415, %417 : vector<2x4xf32>
    %c0_195 = arith.constant 0 : index
    %c0_196 = arith.constant 0 : index
    %419 = vector.load %arg23[%c0_195, %c0_196] : memref<2x4xf32, #tpu.memory_space<vmem>>, vector<2x4xf32>
    tpu.vector_store %arg23[%c0_195, %c0_196], %418 {strides = array<i32>} : memref<2x4xf32, #tpu.memory_space<vmem>>, vector<2x4xf32>,
    return
  }
  func.func @transform_0(%arg0: i32) -> (i32, i32) {
    %c0_i32 = arith.constant 0 : i32
    %c0_i32_0 = arith.constant 0 : i32
    %c0_i32_1 = arith.constant 0 : i32
    return %c0_i32, %c0_i32_0 : i32, i32
  }
  func.func @transform_1(%arg0: i32) -> (i32, i32) {
    %c0_i32 = arith.constant 0 : i32
    %c0_i32_0 = arith.constant 0 : i32
    %c0_i32_1 = arith.constant 0 : i32
    return %c0_i32, %c0_i32_0 : i32, i32
  }
  func.func @transform_2(%arg0: i32) -> (i32, i32) {
    %c0_i32 = arith.constant 0 : i32
    %c0_i32_0 = arith.constant 0 : i32
    %c0_i32_1 = arith.constant 0 : i32
    return %c0_i32, %c0_i32_0 : i32, i32
  }
  func.func @transform_3(%arg0: i32) -> (i32, i32) {
    %c0_i32 = arith.constant 0 : i32
    %c0_i32_0 = arith.constant 0 : i32
    %c0_i32_1 = arith.constant 0 : i32
    return %c0_i32, %c0_i32_0 : i32, i32
  }
  func.func @transform_4(%arg0: i32) -> (i32, i32, i32) {
    %c0_i32 = arith.constant 0 : i32
    %c0_i32_0 = arith.constant 0 : i32
    %c0_i32_1 = arith.constant 0 : i32
    %c0_i32_2 = arith.constant 0 : i32
    return %c0_i32, %c0_i32_0, %c0_i32_1 : i32, i32, i32
  }
  func.func @transform_5(%arg0: i32) -> (i32, i32) {
    %c0_i32 = arith.constant 0 : i32
    %c0_i32_0 = arith.constant 0 : i32
    %c0_i32_1 = arith.constant 0 : i32
    return %c0_i32, %c0_i32_0 : i32, i32
  }
  func.func @transform_6(%arg0: i32) -> (i32, i32) {
    %c0_i32 = arith.constant 0 : i32
    %c0_i32_0 = arith.constant 0 : i32
    %c0_i32_1 = arith.constant 0 : i32
    return %c0_i32, %c0_i32_0 : i32, i32
  }
  func.func @transform_7(%arg0: i32) -> (i32, i32, i32) {
    %c0_i32 = arith.constant 0 : i32
    %c0_i32_0 = arith.constant 0 : i32
    %c0_i32_1 = arith.constant 0 : i32
    %c0_i32_2 = arith.constant 0 : i32
    return %c0_i32, %c0_i32_0, %c0_i32_1 : i32, i32, i32
  }
  func.func @transform_8(%arg0: i32) -> (i32, i32, i32) {
    %c0_i32 = arith.constant 0 : i32
    %c0_i32_0 = arith.constant 0 : i32
    %c0_i32_1 = arith.constant 0 : i32
    %c0_i32_2 = arith.constant 0 : i32
    return %c0_i32, %c0_i32_0, %c0_i32_1 : i32, i32, i32
  }
  func.func @transform_9(%arg0: i32) -> (i32, i32, i32) {
    %c0_i32 = arith.constant 0 : i32
    %c0_i32_0 = arith.constant 0 : i32
    %c0_i32_1 = arith.constant 0 : i32
    %c0_i32_2 = arith.constant 0 : i32
    return %c0_i32, %c0_i32_0, %c0_i32_1 : i32, i32, i32
  }
  func.func @transform_10(%arg0: i32) -> (i32, i32, i32) {
    %c0_i32 = arith.constant 0 : i32
    %c0_i32_0 = arith.constant 0 : i32
    %c0_i32_1 = arith.constant 0 : i32
    %c0_i32_2 = arith.constant 0 : i32
    return %c0_i32, %c0_i32_0, %c0_i32_1 : i32, i32, i32
  }
  func.func @transform_11(%arg0: i32) -> (i32, i32, i32) {
    %c0_i32 = arith.constant 0 : i32
    %c0_i32_0 = arith.constant 0 : i32
    %c0_i32_1 = arith.constant 0 : i32
    %c0_i32_2 = arith.constant 0 : i32
    return %c0_i32, %c0_i32_0, %c0_i32_1 : i32, i32, i32
  }
  func.func @transform_12(%arg0: i32) -> (i32, i32, i32) {
    %c0_i32 = arith.constant 0 : i32
    %c0_i32_0 = arith.constant 0 : i32
    %c0_i32_1 = arith.constant 0 : i32
    %c0_i32_2 = arith.constant 0 : i32
    return %c0_i32, %c0_i32_0, %c0_i32_1 : i32, i32, i32
  }
  func.func @transform_13(%arg0: i32) -> (i32, i32, i32) {
    %c0_i32 = arith.constant 0 : i32
    %c0_i32_0 = arith.constant 0 : i32
    %c0_i32_1 = arith.constant 0 : i32
    %c0_i32_2 = arith.constant 0 : i32
    return %c0_i32, %c0_i32_0, %c0_i32_1 : i32, i32, i32
  }
  func.func @transform_14(%arg0: i32) -> (i32, i32, i32) {
    %c0_i32 = arith.constant 0 : i32
    %c0_i32_0 = arith.constant 0 : i32
    %c0_i32_1 = arith.constant 0 : i32
    %c0_i32_2 = arith.constant 0 : i32
    return %c0_i32, %c0_i32_0, %c0_i32_1 : i32, i32, i32
  }
  func.func @transform_15(%arg0: i32) -> (i32, i32, i32) {
    %c0_i32 = arith.constant 0 : i32
    %c0_i32_0 = arith.constant 0 : i32
    %c0_i32_1 = arith.constant 0 : i32
    %c0_i32_2 = arith.constant 0 : i32
    return %c0_i32, %c0_i32_0, %c0_i32_1 : i32, i32, i32
  }
  func.func @transform_16(%arg0: i32) -> (i32, i32, i32) {
    %c0_i32 = arith.constant 0 : i32
    %c0_i32_0 = arith.constant 0 : i32
    %c0_i32_1 = arith.constant 0 : i32
    %c0_i32_2 = arith.constant 0 : i32
    return %c0_i32, %c0_i32_0, %c0_i32_1 : i32, i32, i32
  }
  func.func @transform_17(%arg0: i32) -> (i32, i32, i32) {
    %c0_i32 = arith.constant 0 : i32
    %c0_i32_0 = arith.constant 0 : i32
    %c0_i32_1 = arith.constant 0 : i32
    %c0_i32_2 = arith.constant 0 : i32
    return %c0_i32, %c0_i32_0, %c0_i32_1 : i32, i32, i32
  }
  func.func @transform_18(%arg0: i32) -> (i32, i32, i32) {
    %c0_i32 = arith.constant 0 : i32
    %c0_i32_0 = arith.constant 0 : i32
    %c0_i32_1 = arith.constant 0 : i32
    %c0_i32_2 = arith.constant 0 : i32
    return %c0_i32, %c0_i32_0, %c0_i32_1 : i32, i32, i32
  }
  func.func @transform_19(%arg0: i32) -> (i32, i32) {
    %c0_i32 = arith.constant 0 : i32
    %c0_i32_0 = arith.constant 0 : i32
    %c0_i32_1 = arith.constant 0 : i32
    return %c0_i32, %c0_i32_0 : i32, i32
  }
  func.func @transform_20(%arg0: i32) -> (i32, i32) {
    %c0_i32 = arith.constant 0 : i32
    %c0_i32_0 = arith.constant 0 : i32
    %c0_i32_1 = arith.constant 0 : i32
    return %c0_i32, %c0_i32_0 : i32, i32
  }
  func.func @transform_21(%arg0: i32) -> (i32, i32) {
    %c0_i32 = arith.constant 0 : i32
    %c0_i32_0 = arith.constant 0 : i32
    %c0_i32_1 = arith.constant 0 : i32
    return %c0_i32, %c0_i32_0 : i32, i32
  }
  func.func @transform_22(%arg0: i32) -> (i32, i32) {
    %c0_i32 = arith.constant 0 : i32
    %c0_i32_0 = arith.constant 0 : i32
    %c0_i32_1 = arith.constant 0 : i32
    return %c0_i32, %c0_i32_0 : i32, i32
  }
}

</mosaic_0001>

<llo_original>
// kernel: genre_classifier_forward.1
$region0: #{genre_classifier_forward.1}
  #allocation0 [shape = 'u32[]', space=smem, size = 0x4, offset = 0x4, fixed_abs, tag = 'smem constant byte address 0x4 - core index']
  #allocation1 [shape = 'u32[144,128]{1,0:T(1,128)}', space=vmem, size = 0x12000, scoped, tag = 'internal scratch']
  %s0 = inlined_call_operand.vmem [shape: f32[16,64], index: 0, kind: input, shape index: {}]
  %s1 = inlined_call_operand.vmem [shape: f32[16,16], index: 1, kind: input, shape index: {}]
  %s2 = inlined_call_operand.vmem [shape: f32[2,16], index: 2, kind: input, shape index: {}]
  %s3 = inlined_call_operand.vmem [shape: f32[2,384], index: 3, kind: input, shape index: {}]
  %s4 = inlined_call_operand.vmem [shape: f32[4,1,64], index: 4, kind: input, shape index: {}]
  %s5 = inlined_call_operand.vmem [shape: f32[1,64], index: 5, kind: input, shape index: {}]
  %s6 = inlined_call_operand.vmem [shape: f32[1,64], index: 6, kind: input, shape index: {}]
  %s7 = inlined_call_operand.vmem [shape: f32[2,64,384], index: 7, kind: input, shape index: {}]
  %s8 = inlined_call_operand.vmem [shape: f32[2,1,384], index: 8, kind: input, shape index: {}]
  %s9 = inlined_call_operand.vmem [shape: f32[2,64,64], index: 9, kind: input, shape index: {}]
  %s10 = inlined_call_operand.vmem [shape: f32[2,1,64], index: 10, kind: input, shape index: {}]
  %s11 = inlined_call_operand.vmem [shape: f32[2,1,64], index: 11, kind: input, shape index: {}]
  %s12 = inlined_call_operand.vmem [shape: f32[2,1,64], index: 12, kind: input, shape index: {}]
  %s13 = inlined_call_operand.vmem [shape: f32[2,64,128], index: 13, kind: input, shape index: {}]
  %s14 = inlined_call_operand.vmem [shape: f32[2,1,128], index: 14, kind: input, shape index: {}]
  %s15 = inlined_call_operand.vmem [shape: f32[2,128,64], index: 15, kind: input, shape index: {}]
  %s16 = inlined_call_operand.vmem [shape: f32[2,1,64], index: 16, kind: input, shape index: {}]
  %s17 = inlined_call_operand.vmem [shape: f32[2,1,64], index: 17, kind: input, shape index: {}]
  %s18 = inlined_call_operand.vmem [shape: f32[2,1,64], index: 18, kind: input, shape index: {}]
  %s19 = inlined_call_operand.vmem [shape: f32[64,4], index: 19, kind: input, shape index: {}]
  %s20 = inlined_call_operand.vmem [shape: f32[384,4], index: 20, kind: input, shape index: {}]
  %s21 = inlined_call_operand.vmem [shape: f32[1,4], index: 21, kind: input, shape index: {}]
  %s22 = inlined_call_operand.hbm [shape: f32[2,4], index: 22, kind: output, shape index: {}]
  %s23 = sld [smem:[#allocation0]]
  $region98: #{genre_classifier_forward.1} parent=0
    _
  %s25 = ssub.s32 1, %s23
  %s26 = scalar_select 0, %s25, %s23
  $region1: #{genre_classifier_forward.1} parent=0
    #allocation2 [shape = 'u8[1024]{0}', space=vmem, size = 0x400, scoped, tag = 'output window, operand 0, single buffered']
    #allocation3 [shape = 's32[1]{0}', space=sflag, size = 0x4, scoped, tag = 'scoped memory for genre_classifier_forward.1']
    %27 = vsyncpa [#allocation3], 0
    // Predicated region
    $region2: #{genre_classifier_forward.1} parent=1 // pred_check
      _
    $region3: #{genre_classifier_forward.1} parent=1 // pred_check_branch
      %29 = sbr.rel (0) target = $region5
    $region4: #{genre_classifier_forward.1} parent=1 // pred_region
      _
    $region5: #{genre_classifier_forward.1} parent=1 // pred_fallthru
      _
    // Predicated region
    $region6: #{genre_classifier_forward.1} parent=1 // pred_check
      _
    $region7: #{genre_classifier_forward.1} parent=1 // pred_check_branch
      %31 = sbr.rel (0) target = $region9
    $region8: #{genre_classifier_forward.1} parent=1 // pred_region
      _
    $region9: #{genre_classifier_forward.1} parent=1 // pred_fallthru
      _
    // Predicated region
    $region10: #{genre_classifier_forward.1} parent=1 // pred_check
      _
    $region11: #{genre_classifier_forward.1} parent=1 // pred_check_branch
      %33 = sbr.rel (0) target = $region13
    $region12: #{genre_classifier_forward.1} parent=1 // pred_region
      _
    $region13: #{genre_classifier_forward.1} parent=1 // pred_fallthru
      _
    // Predicated region
    $region14: #{genre_classifier_forward.1} parent=1 // pred_check
      _
    $region15: #{genre_classifier_forward.1} parent=1 // pred_check_branch
      %35 = sbr.rel (0) target = $region17
    $region16: #{genre_classifier_forward.1} parent=1 // pred_region
      _
    $region17: #{genre_classifier_forward.1} parent=1 // pred_fallthru
      _
    // Predicated region
    $region18: #{genre_classifier_forward.1} parent=1 // pred_check
      _
    $region19: #{genre_classifier_forward.1} parent=1 // pred_check_branch
      %37 = sbr.rel (0) target = $region21
    $region20: #{genre_classifier_forward.1} parent=1 // pred_region
      _
    $region21: #{genre_classifier_forward.1} parent=1 // pred_fallthru
      _
    // Predicated region
    $region22: #{genre_classifier_forward.1} parent=1 // pred_check
      _
    $region23: #{genre_classifier_forward.1} parent=1 // pred_check_branch
      %39 = sbr.rel (0) target = $region25
    $region24: #{genre_classifier_forward.1} parent=1 // pred_region
      _
    $region25: #{genre_classifier_forward.1} parent=1 // pred_fallthru
      _
    // Predicated region
    $region26: #{genre_classifier_forward.1} parent=1 // pred_check
      _
    $region27: #{genre_classifier_forward.1} parent=1 // pred_check_branch
      %41 = sbr.rel (0) target = $region29
    $region28: #{genre_classifier_forward.1} parent=1 // pred_region
      _
    $region29: #{genre_classifier_forward.1} parent=1 // pred_fallthru
      _
    // Predicated region
    $region30: #{genre_classifier_forward.1} parent=1 // pred_check
      _
    $region31: #{genre_classifier_forward.1} parent=1 // pred_check_branch
      %43 = sbr.rel (0) target = $region33
    $region32: #{genre_classifier_forward.1} parent=1 // pred_region
      _
    $region33: #{genre_classifier_forward.1} parent=1 // pred_fallthru
      _
    // Predicated region
    $region34: #{genre_classifier_forward.1} parent=1 // pred_check
      _
    $region35: #{genre_classifier_forward.1} parent=1 // pred_check_branch
      %45 = sbr.rel (0) target = $region37
    $region36: #{genre_classifier_forward.1} parent=1 // pred_region
      _
    $region37: #{genre_classifier_forward.1} parent=1 // pred_fallthru
      _
    // Predicated region
    $region38: #{genre_classifier_forward.1} parent=1 // pred_check
      _
    $region39: #{genre_classifier_forward.1} parent=1 // pred_check_branch
      %47 = sbr.rel (0) target = $region41
    $region40: #{genre_classifier_forward.1} parent=1 // pred_region
      _
    $region41: #{genre_classifier_forward.1} parent=1 // pred_fallthru
      _
    // Predicated region
    $region42: #{genre_classifier_forward.1} parent=1 // pred_check
      _
    $region43: #{genre_classifier_forward.1} parent=1 // pred_check_branch
      %49 = sbr.rel (0) target = $region45
    $region44: #{genre_classifier_forward.1} parent=1 // pred_region
      _
    $region45: #{genre_classifier_forward.1} parent=1 // pred_fallthru
      _
    // Predicated region
    $region46: #{genre_classifier_forward.1} parent=1 // pred_check
      _
    $region47: #{genre_classifier_forward.1} parent=1 // pred_check_branch
      %51 = sbr.rel (0) target = $region49
    $region48: #{genre_classifier_forward.1} parent=1 // pred_region
      _
    $region49: #{genre_classifier_forward.1} parent=1 // pred_fallthru
      _
    // Predicated region
    $region50: #{genre_classifier_forward.1} parent=1 // pred_check
      _
    $region51: #{genre_classifier_forward.1} parent=1 // pred_check_branch
      %53 = sbr.rel (0) target = $region53
    $region52: #{genre_classifier_forward.1} parent=1 // pred_region
      _
    $region53: #{genre_classifier_forward.1} parent=1 // pred_fallthru
      _
    // Predicated region
    $region54: #{genre_classifier_forward.1} parent=1 // pred_check
      _
    $region55: #{genre_classifier_forward.1} parent=1 // pred_check_branch
      %55 = sbr.rel (0) target = $region57
    $region56: #{genre_classifier_forward.1} parent=1 // pred_region
      _
    $region57: #{genre_classifier_forward.1} parent=1 // pred_fallthru
      _
    // Predicated region
    $region58: #{genre_classifier_forward.1} parent=1 // pred_check
      _
    $region59: #{genre_classifier_forward.1} parent=1 // pred_check_branch
      %57 = sbr.rel (0) target = $region61
    $region60: #{genre_classifier_forward.1} parent=1 // pred_region
      _
    $region61: #{genre_classifier_forward.1} parent=1 // pred_fallthru
      _
    // Predicated region
    $region62: #{genre_classifier_forward.1} parent=1 // pred_check
      _
    $region63: #{genre_classifier_forward.1} parent=1 // pred_check_branch
      %59 = sbr.rel (0) target = $region65
    $region64: #{genre_classifier_forward.1} parent=1 // pred_region
      _
    $region65: #{genre_classifier_forward.1} parent=1 // pred_fallthru
      _
    // Predicated region
    $region66: #{genre_classifier_forward.1} parent=1 // pred_check
      _
    $region67: #{genre_classifier_forward.1} parent=1 // pred_check_branch
      %61 = sbr.rel (0) target = $region69
    $region68: #{genre_classifier_forward.1} parent=1 // pred_region
      _
    $region69: #{genre_classifier_forward.1} parent=1 // pred_fallthru
      _
    // Predicated region
    $region70: #{genre_classifier_forward.1} parent=1 // pred_check
      _
    $region71: #{genre_classifier_forward.1} parent=1 // pred_check_branch
      %63 = sbr.rel (0) target = $region73
    $region72: #{genre_classifier_forward.1} parent=1 // pred_region
      _
    $region73: #{genre_classifier_forward.1} parent=1 // pred_fallthru
      _
    // Predicated region
    $region74: #{genre_classifier_forward.1} parent=1 // pred_check
      _
    $region75: #{genre_classifier_forward.1} parent=1 // pred_check_branch
      %65 = sbr.rel (0) target = $region77
    $region76: #{genre_classifier_forward.1} parent=1 // pred_region
      _
    $region77: #{genre_classifier_forward.1} parent=1 // pred_fallthru
      _
    // Predicated region
    $region78: #{genre_classifier_forward.1} parent=1 // pred_check
      _
    $region79: #{genre_classifier_forward.1} parent=1 // pred_check_branch
      %67 = sbr.rel (0) target = $region81
    $region80: #{genre_classifier_forward.1} parent=1 // pred_region
      _
    $region81: #{genre_classifier_forward.1} parent=1 // pred_fallthru
      _
    // Predicated region
    $region82: #{genre_classifier_forward.1} parent=1 // pred_check
      _
    $region83: #{genre_classifier_forward.1} parent=1 // pred_check_branch
      %69 = sbr.rel (0) target = $region85
    $region84: #{genre_classifier_forward.1} parent=1 // pred_region
      _
    $region85: #{genre_classifier_forward.1} parent=1 // pred_fallthru
      _
    // Predicated region
    $region86: #{genre_classifier_forward.1} parent=1 // pred_check
      _
    $region87: #{genre_classifier_forward.1} parent=1 // pred_check_branch
      %71 = sbr.rel (0) target = $region89
    $region88: #{genre_classifier_forward.1} parent=1 // pred_region
      _
    $region89: #{genre_classifier_forward.1} parent=1 // pred_fallthru
      _
    %v72 = vld [vmem:[%s0] sm:$0xff]
    %v73 = vld [vmem:[%s0 + $0x8] sm:$0xff]
    %v74 = vld [vmem:[%s5] sm:$0x1]
    %v75 = vld [vmem:[%s6] sm:$0x1]
    %vm76 = vcmask 523264
    %v77 = vsel %vm76, %v72, 0.0
    %78 = vadd.xlane.f32.xlu0 %v77
    %v79 = vpop.xlane.xlu0 %78
    %v80 = vsel %vm76, %v73, 0.0
    %81 = vadd.xlane.f32.xlu0 %v80
    %v82 = vpop.xlane.xlu0 %81
    %v83 = vrcp.pop 64.0
    %v84 = vmul.f32 %v79, %v83
    %v85 = vmul.f32 %v82, %v83
    %v86 = vsub.f32 %v72, %v84
    %v87 = vsub.f32 %v73, %v85
    %v88 = vmul.f32 %v86, %v86
    %v89 = vmul.f32 %v87, %v87
    %v90 = vsel %vm76, %v88, 0.0
    %91 = vadd.xlane.f32.xlu0 %v90
    %v92 = vpop.xlane.xlu0 %91
    %v93 = vsel %vm76, %v89, 0.0
    %94 = vadd.xlane.f32.xlu0 %v93
    %v95 = vpop.xlane.xlu0 %94
    %v96 = vmul.f32 %v92, %v83
    %v97 = vmul.f32 %v95, %v83
    %v98 = vadd.f32 %v96, 1e-12
    %v99 = vadd.f32 %v97, 1e-12
    %v100 = vrsqrt.pop %v98
    %v101 = vrsqrt.pop %v99
    %v102 = vmul.f32 %v86, %v100
    %v103 = vmul.f32 %v87, %v101
    %v105 = vlaneseq
    %v106 = vshrl.u32 %v105, 7
    %v107 = vsub.s32 0, %v106
    %v108 = vrot.slane %v74, %v107
    %v110 = vmul.f32 %v102, %v108
    %v111 = vmul.f32 %v103, %v108
    %v113 = vlaneseq
    %v114 = vshrl.u32 %v113, 7
    %v115 = vsub.s32 0, %v114
    %v116 = vrot.slane %v75, %v115
    %v118 = vadd.f32 %v110, %v116
    %v119 = vadd.f32 %v111, %v116
    %v120 = vld [vmem:[%s1] sm:$0xff]
    %v121 = vld [vmem:[%s1 + $0x8] sm:$0xff]
    %v122 = vld [vmem:[%s7] sm:$0xff]
    %v123 = vld [vmem:[%s7 + $0x8] sm:$0xff]
    %v124 = vld [vmem:[%s7 + $0x10] sm:$0xff]
    %v125 = vld [vmem:[%s7 + $0x18] sm:$0xff]
    %v126 = vld [vmem:[%s7 + $0x20] sm:$0xff]
    %v127 = vld [vmem:[%s7 + $0x28] sm:$0xff]
    %v128 = vld [vmem:[%s7 + $0x30] sm:$0xff]
    %v129 = vld [vmem:[%s7 + $0x38] sm:$0xff]
    %v130 = vld [vmem:[%s7 + $0x40] sm:$0xff]
    %v131 = vld [vmem:[%s7 + $0x48] sm:$0xff]
    %v132 = vld [vmem:[%s7 + $0x50] sm:$0xff]
    %v133 = vld [vmem:[%s7 + $0x58] sm:$0xff]
    %v134 = vld [vmem:[%s7 + $0x60] sm:$0xff]
    %v135 = vld [vmem:[%s7 + $0x68] sm:$0xff]
    %v136 = vld [vmem:[%s7 + $0x70] sm:$0xff]
    %v137 = vld [vmem:[%s7 + $0x78] sm:$0xff]
    %v138 = vld [vmem:[%s7 + $0x80] sm:$0xff]
    %v139 = vld [vmem:[%s7 + $0x88] sm:$0xff]
    %v140 = vld [vmem:[%s7 + $0x90] sm:$0xff]
    %v141 = vld [vmem:[%s7 + $0x98] sm:$0xff]
    %v142 = vld [vmem:[%s7 + $0xa0] sm:$0xff]
    %v143 = vld [vmem:[%s7 + $0xa8] sm:$0xff]
    %v144 = vld [vmem:[%s7 + $0xb0] sm:$0xff]
    %v145 = vld [vmem:[%s7 + $0xb8] sm:$0xff]
    %v146 = vld [vmem:[%s8] sm:$0x7]
    %v148 = vlaneseq
    %v149 = vshrl.u32 %v148, 7
    %v150 = vsub.s32 0, %v149
    %v151 = vrot.slane %v146, %v150
    %v152 = vlaneseq
    %v153 = vshrl.u32 %v152, 7
    %v154 = vsub.s32 1, %v153
    %v155 = vrot.slane %v146, %v154
    %v156 = vlaneseq
    %v157 = vshrl.u32 %v156, 7
    %v158 = vsub.s32 2, %v157
    %v159 = vrot.slane %v146, %v158
    %v164 = vsel %vm76, %v118, 0
    %v167 = vsel %vm76, %v119, 0
    %169 = vmatprep.subr.mxu0 %v123
    %170 = vmatpush1.msra.mxu0 %v122
    %171 = vmatprep.subr.mxu0 %v126
    %172 = vmatpush1.msra.mxu0 %v125
    %173 = vmatprep.subr.mxu0 %v129
    %174 = vmatpush1.msra.mxu0 %v128
    %175 = vmatprep.subr.mxu0 %v132
    %176 = vmatpush1.msra.mxu0 %v131
    %177 = vmatprep.subr.mxu0 %v135
    %178 = vmatpush1.msra.mxu0 %v134
    %179 = vmatprep.subr.mxu0 %v138
    %180 = vmatpush1.msra.mxu0 %v137
    %181 = vmatprep.subr.mxu0 %v141
    %182 = vmatpush1.msra.mxu0 %v140
    %183 = vmatprep.subr.mxu0 %v144
    %184 = vmatpush1.msra.mxu0 %v143
    %185 = vmatprep.subr.mxu0 0.0
    %186 = vmatpush1.msra.mxu0 0.0
    %187 = vmatprep.subr.mxu0 0.0
    %188 = vmatpush1.msra.mxu0 0.0
    %189 = vmatprep.subr.mxu0 0.0
    %190 = vmatpush1.msra.mxu0 0.0
    %191 = vmatprep.subr.mxu0 0.0
    %192 = vmatpush1.msra.mxu0 0.0
    %193 = vmatprep.subr.mxu0 0.0
    %194 = vmatpush1.msra.mxu0 0.0
    %195 = vmatprep.subr.mxu0 0.0
    %196 = vmatpush1.msra.mxu0 0.0
    %197 = vmatprep.subr.mxu0 0.0
    %198 = vmatpush1.msra.mxu0 0.0
    %199 = vmatprep.subr.mxu0 0.0
    %200 = vmatpush1.msra.mxu0 0.0
    %201 = vmatprep.subr.mxu0 0.0
    %202 = vmatpush1.msra.mxu0 0.0
    %203 = vmatprep.subr.mxu0 0.0
    %204 = vmatpush1.msra.mxu0 0.0
    %205 = vmatprep.subr.mxu0 0.0
    %206 = vmatpush1.msra.mxu0 0.0
    %207 = vmatprep.subr.mxu0 0.0
    %208 = vmatpush1.msra.mxu0 0.0
    %209 = vmatprep.subr.mxu0 0.0
    %210 = vmatpush1.msra.mxu0 0.0
    %211 = vmatprep.subr.mxu0 0.0
    %212 = vmatpush1.msra.mxu0 0.0
    %213 = vmatprep.subr.mxu0 0.0
    %214 = vmatpush1.msra.mxu0 0.0
    %215 = vmatprep.subr.mxu0 0.0
    %216 = vmatpush1.msra.mxu0 0.0
    %217 = vmatprep.subr.mxu0 0.0
    %218 = vmatpush1.msra.mxu0 0.0
    %219 = vmatprep.subr.mxu0 0.0
    %220 = vmatpush1.msra.mxu0 0.0
    %221 = vmatprep.subr.mxu0 0.0
    %222 = vmatpush1.msra.mxu0 0.0
    %223 = vmatprep.subr.mxu0 0.0
    %224 = vmatpush1.msra.mxu0 0.0
    %225 = vmatprep.subr.mxu0 0.0
    %226 = vmatpush1.msra.mxu0 0.0
    %227 = vmatprep.subr.mxu0 0.0
    %228 = vmatpush1.msra.mxu0 0.0
    %229 = vmatprep.subr.mxu0 0.0
    %230 = vmatpush1.msra.mxu0 0.0
    %231 = vmatprep.subr.mxu0 0.0
    %232 = vmatpush1.msra.mxu0 0.0
    %233 = vmatprep.mubr.f32.mxu0 0.0
    %234 = vmatmul.mubr.f32.gmra.mrb[0].mxu0 %v164
    %v235 = vpop.f32.mrb[0].mxu0
    %v236 = vadd.f32 %v151, %v235
    %v237 = vpop.f32.mrb[0].mxu0
    %v238 = vadd.f32 %v155, %v237
    %239 = vmatprep.mubr.f32.mxu0 0.0
    %240 = vmatmul.mubr.f32.gmra.mrb[0].mxu0 %v167
    %v241 = vpop.f32.mrb[0].mxu0
    %v242 = vadd.f32 %v151, %v241
    %v243 = vpop.f32.mrb[0].mxu0
    %v244 = vadd.f32 %v155, %v243
    %245 = vdwg.mxu0
    %246 = vmatprep.subr.mxu0 0.0
    %247 = vmatpush1.msra.mxu0 %v124
    %248 = vmatprep.subr.mxu0 0.0
    %249 = vmatpush1.msra.mxu0 %v127
    %250 = vmatprep.subr.mxu0 0.0
    %251 = vmatpush1.msra.mxu0 %v130
    %252 = vmatprep.subr.mxu0 0.0
    %253 = vmatpush1.msra.mxu0 %v133
    %254 = vmatprep.subr.mxu0 0.0
    %255 = vmatpush1.msra.mxu0 %v136
    %256 = vmatprep.subr.mxu0 0.0
    %257 = vmatpush1.msra.mxu0 %v139
    %258 = vmatprep.subr.mxu0 0.0
    %259 = vmatpush1.msra.mxu0 %v142
    %260 = vmatprep.subr.mxu0 0.0
    %261 = vmatpush1.msra.mxu0 %v145
    %262 = vmatprep.subr.mxu0 0.0
    %263 = vmatpush1.msra.mxu0 0.0
    %264 = vmatprep.subr.mxu0 0.0
    %265 = vmatpush1.msra.mxu0 0.0
    %266 = vmatprep.subr.mxu0 0.0
    %267 = vmatpush1.msra.mxu0 0.0
    %268 = vmatprep.subr.mxu0 0.0
    %269 = vmatpush1.msra.mxu0 0.0
    %270 = vmatprep.subr.mxu0 0.0
    %271 = vmatpush1.msra.mxu0 0.0
    %272 = vmatprep.subr.mxu0 0.0
    %273 = vmatpush1.msra.mxu0 0.0
    %274 = vmatprep.subr.mxu0 0.0
    %275 = vmatpush1.msra.mxu0 0.0
    %276 = vmatprep.subr.mxu0 0.0
    %277 = vmatpush1.msra.mxu0 0.0
    %278 = vmatprep.subr.mxu0 0.0
    %279 = vmatpush1.msra.mxu0 0.0
    %280 = vmatprep.subr.mxu0 0.0
    %281 = vmatpush1.msra.mxu0 0.0
    %282 = vmatprep.subr.mxu0 0.0
    %283 = vmatpush1.msra.mxu0 0.0
    %284 = vmatprep.subr.mxu0 0.0
    %285 = vmatpush1.msra.mxu0 0.0
    %286 = vmatprep.subr.mxu0 0.0
    %287 = vmatpush1.msra.mxu0 0.0
    %288 = vmatprep.subr.mxu0 0.0
    %289 = vmatpush1.msra.mxu0 0.0
    %290 = vmatprep.subr.mxu0 0.0
    %291 = vmatpush1.msra.mxu0 0.0
    %292 = vmatprep.subr.mxu0 0.0
    %293 = vmatpush1.msra.mxu0 0.0
    %294 = vmatprep.subr.mxu0 0.0
    %295 = vmatpush1.msra.mxu0 0.0
    %296 = vmatprep.subr.mxu0 0.0
    %297 = vmatpush1.msra.mxu0 0.0
    %298 = vmatprep.subr.mxu0 0.0
    %299 = vmatpush1.msra.mxu0 0.0
    %300 = vmatprep.subr.mxu0 0.0
    %301 = vmatpush1.msra.mxu0 0.0
    %302 = vmatprep.subr.mxu0 0.0
    %303 = vmatpush1.msra.mxu0 0.0
    %304 = vmatprep.subr.mxu0 0.0
    %305 = vmatpush1.msra.mxu0 0.0
    %306 = vmatprep.subr.mxu0 0.0
    %307 = vmatpush1.msra.mxu0 0.0
    %308 = vmatprep.subr.mxu0 0.0
    %309 = vmatpush1.msra.mxu0 0.0
    %310 = vmatprep.mubr.f32.mxu0 0.0
    %311 = vmatmul.mubr.f32.gmra.mrb[0].mxu0 %v164
    %v312 = vpop.f32.mrb[0].mxu0
    %v313 = vadd.f32 %v159, %v312
    %v314 = vpop.f32.mrb[0].mxu0
    %315 = vmatprep.mubr.f32.mxu0 0.0
    %316 = vmatmul.mubr.f32.gmra.mrb[0].mxu0 %v167
    %v317 = vpop.f32.mrb[0].mxu0
    %v318 = vadd.f32 %v159, %v317
    %v319 = vpop.f32.mrb[0].mxu0
    %320 = vdwg.mxu0
    %v321 = vld [vmem:[%s4] sm:$0x1]
    %v323 = vlaneseq
    %v324 = vshrl.u32 %v323, 7
    %v325 = vsub.s32 0, %v324
    %v326 = vrot.slane %v321, %v325
    %v328 = vmul.f32 %v236, %v326
    %v329 = vmul.f32 %v242, %v326
    %v331 = vsel %vm76, %v328, 0
    %v334 = vsel %vm76, %v329, 0
    %v337 = vsel %vm76, %v238, 0
    %v340 = vsel %vm76, %v244, 0
    %342 = vmatprep.subr.mxu0 0.0
    %343 = vmatpush1.xpose.msra.mxu0 %v337
    %344 = vmatprep.subr.mxu0 0.0
    %345 = vmatpush1.xpose.msra.mxu0 %v340
    %346 = vmatprep.subr.mxu0 0.0
    %347 = vmatpush1.xpose.msra.mxu0 0.0
    %348 = vmatprep.subr.mxu0 0.0
    %349 = vmatpush1.xpose.msra.mxu0 0.0
    %350 = vmatprep.subr.mxu0 0.0
    %351 = vmatpush1.xpose.msra.mxu0 0.0
    %352 = vmatprep.subr.mxu0 0.0
    %353 = vmatpush1.xpose.msra.mxu0 0.0
    %354 = vmatprep.subr.mxu0 0.0
    %355 = vmatpush1.xpose.msra.mxu0 0.0
    %356 = vmatprep.subr.mxu0 0.0
    %357 = vmatpush1.xpose.msra.mxu0 0.0
    %358 = vmatprep.subr.mxu0 0.0
    %359 = vmatpush1.xpose.msra.mxu0 0.0
    %360 = vmatprep.subr.mxu0 0.0
    %361 = vmatpush1.xpose.msra.mxu0 0.0
    %362 = vmatprep.subr.mxu0 0.0
    %363 = vmatpush1.xpose.msra.mxu0 0.0
    %364 = vmatprep.subr.mxu0 0.0
    %365 = vmatpush1.xpose.msra.mxu0 0.0
    %366 = vmatprep.subr.mxu0 0.0
    %367 = vmatpush1.xpose.msra.mxu0 0.0
    %368 = vmatprep.subr.mxu0 0.0
    %369 = vmatpush1.xpose.msra.mxu0 0.0
    %370 = vmatprep.subr.mxu0 0.0
    %371 = vmatpush1.xpose.msra.mxu0 0.0
    %372 = vmatprep.subr.mxu0 0.0
    %373 = vmatpush1.xpose.msra.mxu0 0.0
    %374 = vmatprep.subr.mxu0 0.0
    %375 = vmatpush1.xpose.msra.mxu0 0.0
    %376 = vmatprep.subr.mxu0 0.0
    %377 = vmatpush1.xpose.msra.mxu0 0.0
    %378 = vmatprep.subr.mxu0 0.0
    %379 = vmatpush1.xpose.msra.mxu0 0.0
    %380 = vmatprep.subr.mxu0 0.0
    %381 = vmatpush1.xpose.msra.mxu0 0.0
    %382 = vmatprep.subr.mxu0 0.0
    %383 = vmatpush1.xpose.msra.mxu0 0.0
    %384 = vmatprep.subr.mxu0 0.0
    %385 = vmatpush1.xpose.msra.mxu0 0.0
    %386 = vmatprep.subr.mxu0 0.0
    %387 = vmatpush1.xpose.msra.mxu0 0.0
    %388 = vmatprep.subr.mxu0 0.0
    %389 = vmatpush1.xpose.msra.mxu0 0.0
    %390 = vmatprep.subr.mxu0 0.0
    %391 = vmatpush1.xpose.msra.mxu0 0.0
    %392 = vmatprep.subr.mxu0 0.0
    %393 = vmatpush1.xpose.msra.mxu0 0.0
    %394 = vmatprep.subr.mxu0 0.0
    %395 = vmatpush1.xpose.msra.mxu0 0.0
    %396 = vmatprep.subr.mxu0 0.0
    %397 = vmatpush1.xpose.msra.mxu0 0.0
    %398 = vmatprep.subr.mxu0 0.0
    %399 = vmatpush1.xpose.msra.mxu0 0.0
    %400 = vmatprep.subr.mxu0 0.0
    %401 = vmatpush1.xpose.msra.mxu0 0.0
    %402 = vmatprep.subr.mxu0 0.0
    %403 = vmatpush1.xpose.msra.mxu0 0.0
    %404 = vmatprep.subr.mxu0 0.0
    %405 = vmatpush1.xpose.msra.mxu0 0.0
    %406 = vmatprep.mubr.f32.mxu0 0.0
    %407 = vmatmul.mubr.f32.gmra.mrb[0].mxu0 %v331
    %v408 = vpop.f32.mrb[0].mxu0
    %v409 = vadd.f32 0.0, %v408
    %v410 = vpop.f32.mrb[0].mxu0
    %411 = vmatprep.mubr.f32.mxu0 0.0
    %412 = vmatmul.mubr.f32.gmra.mrb[0].mxu0 %v334
    %v413 = vpop.f32.mrb[0].mxu0
    %v414 = vadd.f32 0.0, %v413
    %v415 = vpop.f32.mrb[0].mxu0
    %416 = vdwg.mxu0
    %v417 = vmul.f32 %v409, 0.25
    %v418 = vmul.f32 %v414, 0.25
    %v419 = vadd.f32 %v417, %v120
    %v420 = vadd.f32 %v418, %v121
    %vm421 = vcmask 130048
    %v422 = vsel %vm421, %v419, -inf
    %423 = vmax.xlane.f32.xlu0 %v422
    %v424 = vpop.xlane.xlu0 %423
    %v425 = vsel %vm421, %v420, -inf
    %426 = vmax.xlane.f32.xlu0 %v425
    %v427 = vpop.xlane.xlu0 %426
    %v428 = vsub.f32 %v419, %v424
    %v429 = vsub.f32 %v420, %v427
    %v430 = vmul.f32 %v428, 1.442695
    %v431 = vpow.pop %v430
    %v432 = vmul.f32 %v429, 1.442695
    %v433 = vpow.pop %v432
    %v434 = vsel %vm421, %v431, 0.0
    %435 = vadd.xlane.f32.xlu0 %v434
    %v436 = vpop.xlane.xlu0 %435
    %v437 = vsel %vm421, %v433, 0.0
    %438 = vadd.xlane.f32.xlu0 %v437
    %v439 = vpop.xlane.xlu0 %438
    %v440 = vrcp.pop %v436
    %v441 = vrcp.pop %v439
    %v442 = vmul.f32 %v431, %v440
    %v443 = vmul.f32 %v433, %v441
    %v444 = vmul.f32 %v313, %v326
    %v445 = vmul.f32 %v318, %v326
    %s446 = scalar_lea.vmem %s4, 1
    %v447 = vld [vmem:[%s446] sm:$0x1]
    %v449 = vlaneseq
    %v450 = vshrl.u32 %v449, 7
    %v451 = vsub.s32 0, %v450
    %v452 = vrot.slane %v447, %v451
    %v454 = vmul.f32 %v236, %v452
    %v455 = vmul.f32 %v242, %v452
    %v457 = vsel %vm76, %v454, 0
    %v460 = vsel %vm76, %v455, 0
    %462 = vmatprep.subr.mxu0 0.0
    %463 = vmatpush1.xpose.msra.mxu0 %v337
    %464 = vmatprep.subr.mxu0 0.0
    %465 = vmatpush1.xpose.msra.mxu0 %v340
    %466 = vmatprep.subr.mxu0 0.0
    %467 = vmatpush1.xpose.msra.mxu0 0.0
    %468 = vmatprep.subr.mxu0 0.0
    %469 = vmatpush1.xpose.msra.mxu0 0.0
    %470 = vmatprep.subr.mxu0 0.0
    %471 = vmatpush1.xpose.msra.mxu0 0.0
    %472 = vmatprep.subr.mxu0 0.0
    %473 = vmatpush1.xpose.msra.mxu0 0.0
    %474 = vmatprep.subr.mxu0 0.0
    %475 = vmatpush1.xpose.msra.mxu0 0.0
    %476 = vmatprep.subr.mxu0 0.0
    %477 = vmatpush1.xpose.msra.mxu0 0.0
    %478 = vmatprep.subr.mxu0 0.0
    %479 = vmatpush1.xpose.msra.mxu0 0.0
    %480 = vmatprep.subr.mxu0 0.0
    %481 = vmatpush1.xpose.msra.mxu0 0.0
    %482 = vmatprep.subr.mxu0 0.0
    %483 = vmatpush1.xpose.msra.mxu0 0.0
    %484 = vmatprep.subr.mxu0 0.0
    %485 = vmatpush1.xpose.msra.mxu0 0.0
    %486 = vmatprep.subr.mxu0 0.0
    %487 = vmatpush1.xpose.msra.mxu0 0.0
    %488 = vmatprep.subr.mxu0 0.0
    %489 = vmatpush1.xpose.msra.mxu0 0.0
    %490 = vmatprep.subr.mxu0 0.0
    %491 = vmatpush1.xpose.msra.mxu0 0.0
    %492 = vmatprep.subr.mxu0 0.0
    %493 = vmatpush1.xpose.msra.mxu0 0.0
    %494 = vmatprep.subr.mxu0 0.0
    %495 = vmatpush1.xpose.msra.mxu0 0.0
    %496 = vmatprep.subr.mxu0 0.0
    %497 = vmatpush1.xpose.msra.mxu0 0.0
    %498 = vmatprep.subr.mxu0 0.0
    %499 = vmatpush1.xpose.msra.mxu0 0.0
    %500 = vmatprep.subr.mxu0 0.0
    %501 = vmatpush1.xpose.msra.mxu0 0.0
    %502 = vmatprep.subr.mxu0 0.0
    %503 = vmatpush1.xpose.msra.mxu0 0.0
    %504 = vmatprep.subr.mxu0 0.0
    %505 = vmatpush1.xpose.msra.mxu0 0.0
    %506 = vmatprep.subr.mxu0 0.0
    %507 = vmatpush1.xpose.msra.mxu0 0.0
    %508 = vmatprep.subr.mxu0 0.0
    %509 = vmatpush1.xpose.msra.mxu0 0.0
    %510 = vmatprep.subr.mxu0 0.0
    %511 = vmatpush1.xpose.msra.mxu0 0.0
    %512 = vmatprep.subr.mxu0 0.0
    %513 = vmatpush1.xpose.msra.mxu0 0.0
    %514 = vmatprep.subr.mxu0 0.0
    %515 = vmatpush1.xpose.msra.mxu0 0.0
    %516 = vmatprep.subr.mxu0 0.0
    %517 = vmatpush1.xpose.msra.mxu0 0.0
    %518 = vmatprep.subr.mxu0 0.0
    %519 = vmatpush1.xpose.msra.mxu0 0.0
    %520 = vmatprep.subr.mxu0 0.0
    %521 = vmatpush1.xpose.msra.mxu0 0.0
    %522 = vmatprep.subr.mxu0 0.0
    %523 = vmatpush1.xpose.msra.mxu0 0.0
    %524 = vmatprep.subr.mxu0 0.0
    %525 = vmatpush1.xpose.msra.mxu0 0.0
    %526 = vmatprep.mubr.f32.mxu0 0.0
    %527 = vmatmul.mubr.f32.gmra.mrb[0].mxu0 %v457
    %v528 = vpop.f32.mrb[0].mxu0
    %v529 = vadd.f32 0.0, %v528
    %v530 = vpop.f32.mrb[0].mxu0
    %531 = vmatprep.mubr.f32.mxu0 0.0
    %532 = vmatmul.mubr.f32.gmra.mrb[0].mxu0 %v460
    %v533 = vpop.f32.mrb[0].mxu0
    %v534 = vadd.f32 0.0, %v533
    %v535 = vpop.f32.mrb[0].mxu0
    %536 = vdwg.mxu0
    %v537 = vmul.f32 %v529, 0.25
    %v538 = vmul.f32 %v534, 0.25
    %v539 = vadd.f32 %v537, %v120
    %v540 = vadd.f32 %v538, %v121
    %v541 = vsel %vm421, %v539, -inf
    %542 = vmax.xlane.f32.xlu0 %v541
    %v543 = vpop.xlane.xlu0 %542
    %v544 = vsel %vm421, %v540, -inf
    %545 = vmax.xlane.f32.xlu0 %v544
    %v546 = vpop.xlane.xlu0 %545
    %v547 = vsub.f32 %v539, %v543
    %v548 = vsub.f32 %v540, %v546
    %v549 = vmul.f32 %v547, 1.442695
    %v550 = vpow.pop %v549
    %v551 = vmul.f32 %v548, 1.442695
    %v552 = vpow.pop %v551
    %v553 = vsel %vm421, %v550, 0.0
    %554 = vadd.xlane.f32.xlu0 %v553
    %v555 = vpop.xlane.xlu0 %554
    %v556 = vsel %vm421, %v552, 0.0
    %557 = vadd.xlane.f32.xlu0 %v556
    %v558 = vpop.xlane.xlu0 %557
    %v559 = vrcp.pop %v555
    %v560 = vrcp.pop %v558
    %v561 = vmul.f32 %v550, %v559
    %v562 = vmul.f32 %v552, %v560
    %v563 = vmul.f32 %v313, %v452
    %v564 = vmul.f32 %v318, %v452
    %v566 = vsel %vm421, %v561, 0
    %v569 = vsel %vm421, %v562, 0
    %571 = vmatprep.subr.mxu0 0.0
    %572 = vmatpush1.msra.mxu0 %v563
    %573 = vmatprep.subr.mxu0 0.0
    %574 = vmatpush1.msra.mxu0 %v564
    %575 = vmatprep.subr.mxu0 0.0
    %576 = vmatpush1.msra.mxu0 0.0
    %577 = vmatprep.subr.mxu0 0.0
    %578 = vmatpush1.msra.mxu0 0.0
    %579 = vmatprep.subr.mxu0 0.0
    %580 = vmatpush1.msra.mxu0 0.0
    %581 = vmatprep.subr.mxu0 0.0
    %582 = vmatpush1.msra.mxu0 0.0
    %583 = vmatprep.subr.mxu0 0.0
    %584 = vmatpush1.msra.mxu0 0.0
    %585 = vmatprep.subr.mxu0 0.0
    %586 = vmatpush1.msra.mxu0 0.0
    %587 = vmatprep.subr.mxu0 0.0
    %588 = vmatpush1.msra.mxu0 0.0
    %589 = vmatprep.subr.mxu0 0.0
    %590 = vmatpush1.msra.mxu0 0.0
    %591 = vmatprep.subr.mxu0 0.0
    %592 = vmatpush1.msra.mxu0 0.0
    %593 = vmatprep.subr.mxu0 0.0
    %594 = vmatpush1.msra.mxu0 0.0
    %595 = vmatprep.subr.mxu0 0.0
    %596 = vmatpush1.msra.mxu0 0.0
    %597 = vmatprep.subr.mxu0 0.0
    %598 = vmatpush1.msra.mxu0 0.0
    %599 = vmatprep.subr.mxu0 0.0
    %600 = vmatpush1.msra.mxu0 0.0
    %601 = vmatprep.subr.mxu0 0.0
    %602 = vmatpush1.msra.mxu0 0.0
    %603 = vmatprep.subr.mxu0 0.0
    %604 = vmatpush1.msra.mxu0 0.0
    %605 = vmatprep.subr.mxu0 0.0
    %606 = vmatpush1.msra.mxu0 0.0
    %607 = vmatprep.subr.mxu0 0.0
    %608 = vmatpush1.msra.mxu0 0.0
    %609 = vmatprep.subr.mxu0 0.0
    %610 = vmatpush1.msra.mxu0 0.0
    %611 = vmatprep.subr.mxu0 0.0
    %612 = vmatpush1.msra.mxu0 0.0
    %613 = vmatprep.subr.mxu0 0.0
    %614 = vmatpush1.msra.mxu0 0.0
    %615 = vmatprep.subr.mxu0 0.0
    %616 = vmatpush1.msra.mxu0 0.0
    %617 = vmatprep.subr.mxu0 0.0
    %618 = vmatpush1.msra.mxu0 0.0
    %619 = vmatprep.subr.mxu0 0.0
    %620 = vmatpush1.msra.mxu0 0.0
    %621 = vmatprep.subr.mxu0 0.0
    %622 = vmatpush1.msra.mxu0 0.0
    %623 = vmatprep.subr.mxu0 0.0
    %624 = vmatpush1.msra.mxu0 0.0
    %625 = vmatprep.subr.mxu0 0.0
    %626 = vmatpush1.msra.mxu0 0.0
    %627 = vmatprep.subr.mxu0 0.0
    %628 = vmatpush1.msra.mxu0 0.0
    %629 = vmatprep.subr.mxu0 0.0
    %630 = vmatpush1.msra.mxu0 0.0
    %631 = vmatprep.subr.mxu0 0.0
    %632 = vmatpush1.msra.mxu0 0.0
    %633 = vmatprep.subr.mxu0 0.0
    %634 = vmatpush1.msra.mxu0 0.0
    %635 = vmatprep.mubr.f32.mxu0 0.0
    %636 = vmatmul.mubr.f32.gmra.mrb[0].mxu0 %v566
    %v637 = vpop.f32.mrb[0].mxu0
    %v638 = vadd.f32 0.0, %v637
    %v639 = vpop.f32.mrb[0].mxu0
    %640 = vmatprep.mubr.f32.mxu0 0.0
    %641 = vmatmul.mubr.f32.gmra.mrb[0].mxu0 %v569
    %v642 = vpop.f32.mrb[0].mxu0
    %v643 = vadd.f32 0.0, %v642
    %v644 = vpop.f32.mrb[0].mxu0
    %645 = vdwg.mxu0
    %v647 = vsel %vm421, %v442, 0
    %v650 = vsel %vm421, %v443, 0
    %652 = vmatprep.subr.mxu0 0.0
    %653 = vmatpush1.msra.mxu0 %v444
    %654 = vmatprep.subr.mxu0 0.0
    %655 = vmatpush1.msra.mxu0 %v445
    %656 = vmatprep.subr.mxu0 0.0
    %657 = vmatpush1.msra.mxu0 0.0
    %658 = vmatprep.subr.mxu0 0.0
    %659 = vmatpush1.msra.mxu0 0.0
    %660 = vmatprep.subr.mxu0 0.0
    %661 = vmatpush1.msra.mxu0 0.0
    %662 = vmatprep.subr.mxu0 0.0
    %663 = vmatpush1.msra.mxu0 0.0
    %664 = vmatprep.subr.mxu0 0.0
    %665 = vmatpush1.msra.mxu0 0.0
    %666 = vmatprep.subr.mxu0 0.0
    %667 = vmatpush1.msra.mxu0 0.0
    %668 = vmatprep.subr.mxu0 0.0
    %669 = vmatpush1.msra.mxu0 0.0
    %670 = vmatprep.subr.mxu0 0.0
    %671 = vmatpush1.msra.mxu0 0.0
    %672 = vmatprep.subr.mxu0 0.0
    %673 = vmatpush1.msra.mxu0 0.0
    %674 = vmatprep.subr.mxu0 0.0
    %675 = vmatpush1.msra.mxu0 0.0
    %676 = vmatprep.subr.mxu0 0.0
    %677 = vmatpush1.msra.mxu0 0.0
    %678 = vmatprep.subr.mxu0 0.0
    %679 = vmatpush1.msra.mxu0 0.0
    %680 = vmatprep.subr.mxu0 0.0
    %681 = vmatpush1.msra.mxu0 0.0
    %682 = vmatprep.subr.mxu0 0.0
    %683 = vmatpush1.msra.mxu0 0.0
    %684 = vmatprep.subr.mxu0 0.0
    %685 = vmatpush1.msra.mxu0 0.0
    %686 = vmatprep.subr.mxu0 0.0
    %687 = vmatpush1.msra.mxu0 0.0
    %688 = vmatprep.subr.mxu0 0.0
    %689 = vmatpush1.msra.mxu0 0.0
    %690 = vmatprep.subr.mxu0 0.0
    %691 = vmatpush1.msra.mxu0 0.0
    %692 = vmatprep.subr.mxu0 0.0
    %693 = vmatpush1.msra.mxu0 0.0
    %694 = vmatprep.subr.mxu0 0.0
    %695 = vmatpush1.msra.mxu0 0.0
    %696 = vmatprep.subr.mxu0 0.0
    %697 = vmatpush1.msra.mxu0 0.0
    %698 = vmatprep.subr.mxu0 0.0
    %699 = vmatpush1.msra.mxu0 0.0
    %700 = vmatprep.subr.mxu0 0.0
    %701 = vmatpush1.msra.mxu0 0.0
    %702 = vmatprep.subr.mxu0 0.0
    %703 = vmatpush1.msra.mxu0 0.0
    %704 = vmatprep.subr.mxu0 0.0
    %705 = vmatpush1.msra.mxu0 0.0
    %706 = vmatprep.subr.mxu0 0.0
    %707 = vmatpush1.msra.mxu0 0.0
    %708 = vmatprep.subr.mxu0 0.0
    %709 = vmatpush1.msra.mxu0 0.0
    %710 = vmatprep.subr.mxu0 0.0
    %711 = vmatpush1.msra.mxu0 0.0
    %712 = vmatprep.subr.mxu0 0.0
    %713 = vmatpush1.msra.mxu0 0.0
    %714 = vmatprep.subr.mxu0 0.0
    %715 = vmatpush1.msra.mxu0 0.0
    %716 = vmatprep.mubr.f32.mxu0 0.0
    %717 = vmatmul.mubr.f32.gmra.mrb[0].mxu0 %v647
    %v718 = vpop.f32.mrb[0].mxu0
    %v719 = vadd.f32 %v638, %v718
    %v720 = vpop.f32.mrb[0].mxu0
    %721 = vmatprep.mubr.f32.mxu0 0.0
    %722 = vmatmul.mubr.f32.gmra.mrb[0].mxu0 %v650
    %v723 = vpop.f32.mrb[0].mxu0
    %v724 = vadd.f32 %v643, %v723
    %v725 = vpop.f32.mrb[0].mxu0
    %726 = vdwg.mxu0
    %s727 = scalar_lea.vmem %s4, 2
    %v728 = vld [vmem:[%s727] sm:$0x1]
    %v730 = vlaneseq
    %v731 = vshrl.u32 %v730, 7
    %v732 = vsub.s32 0, %v731
    %v733 = vrot.slane %v728, %v732
    %v735 = vmul.f32 %v236, %v733
    %v736 = vmul.f32 %v242, %v733
    %v738 = vsel %vm76, %v735, 0
    %v741 = vsel %vm76, %v736, 0
    %743 = vmatprep.subr.mxu0 0.0
    %744 = vmatpush1.xpose.msra.mxu0 %v337
    %745 = vmatprep.subr.mxu0 0.0
    %746 = vmatpush1.xpose.msra.mxu0 %v340
    %747 = vmatprep.subr.mxu0 0.0
    %748 = vmatpush1.xpose.msra.mxu0 0.0
    %749 = vmatprep.subr.mxu0 0.0
    %750 = vmatpush1.xpose.msra.mxu0 0.0
    %751 = vmatprep.subr.mxu0 0.0
    %752 = vmatpush1.xpose.msra.mxu0 0.0
    %753 = vmatprep.subr.mxu0 0.0
    %754 = vmatpush1.xpose.msra.mxu0 0.0
    %755 = vmatprep.subr.mxu0 0.0
    %756 = vmatpush1.xpose.msra.mxu0 0.0
    %757 = vmatprep.subr.mxu0 0.0
    %758 = vmatpush1.xpose.msra.mxu0 0.0
    %759 = vmatprep.subr.mxu0 0.0
    %760 = vmatpush1.xpose.msra.mxu0 0.0
    %761 = vmatprep.subr.mxu0 0.0
    %762 = vmatpush1.xpose.msra.mxu0 0.0
    %763 = vmatprep.subr.mxu0 0.0
    %764 = vmatpush1.xpose.msra.mxu0 0.0
    %765 = vmatprep.subr.mxu0 0.0
    %766 = vmatpush1.xpose.msra.mxu0 0.0
    %767 = vmatprep.subr.mxu0 0.0
    %768 = vmatpush1.xpose.msra.mxu0 0.0
    %769 = vmatprep.subr.mxu0 0.0
    %770 = vmatpush1.xpose.msra.mxu0 0.0
    %771 = vmatprep.subr.mxu0 0.0
    %772 = vmatpush1.xpose.msra.mxu0 0.0
    %773 = vmatprep.subr.mxu0 0.0
    %774 = vmatpush1.xpose.msra.mxu0 0.0
    %775 = vmatprep.subr.mxu0 0.0
    %776 = vmatpush1.xpose.msra.mxu0 0.0
    %777 = vmatprep.subr.mxu0 0.0
    %778 = vmatpush1.xpose.msra.mxu0 0.0
    %779 = vmatprep.subr.mxu0 0.0
    %780 = vmatpush1.xpose.msra.mxu0 0.0
    %781 = vmatprep.subr.mxu0 0.0
    %782 = vmatpush1.xpose.msra.mxu0 0.0
    %783 = vmatprep.subr.mxu0 0.0
    %784 = vmatpush1.xpose.msra.mxu0 0.0
    %785 = vmatprep.subr.mxu0 0.0
    %786 = vmatpush1.xpose.msra.mxu0 0.0
    %787 = vmatprep.subr.mxu0 0.0
    %788 = vmatpush1.xpose.msra.mxu0 0.0
    %789 = vmatprep.subr.mxu0 0.0
    %790 = vmatpush1.xpose.msra.mxu0 0.0
    %791 = vmatprep.subr.mxu0 0.0
    %792 = vmatpush1.xpose.msra.mxu0 0.0
    %793 = vmatprep.subr.mxu0 0.0
    %794 = vmatpush1.xpose.msra.mxu0 0.0
    %795 = vmatprep.subr.mxu0 0.0
    %796 = vmatpush1.xpose.msra.mxu0 0.0
    %797 = vmatprep.subr.mxu0 0.0
    %798 = vmatpush1.xpose.msra.mxu0 0.0
    %799 = vmatprep.subr.mxu0 0.0
    %800 = vmatpush1.xpose.msra.mxu0 0.0
    %801 = vmatprep.subr.mxu0 0.0
    %802 = vmatpush1.xpose.msra.mxu0 0.0
    %803 = vmatprep.subr.mxu0 0.0
    %804 = vmatpush1.xpose.msra.mxu0 0.0
    %805 = vmatprep.subr.mxu0 0.0
    %806 = vmatpush1.xpose.msra.mxu0 0.0
    %807 = vmatprep.mubr.f32.mxu0 0.0
    %808 = vmatmul.mubr.f32.gmra.mrb[0].mxu0 %v738
    %v809 = vpop.f32.mrb[0].mxu0
    %v810 = vadd.f32 0.0, %v809
    %v811 = vpop.f32.mrb[0].mxu0
    %812 = vmatprep.mubr.f32.mxu0 0.0
    %813 = vmatmul.mubr.f32.gmra.mrb[0].mxu0 %v741
    %v814 = vpop.f32.mrb[0].mxu0
    %v815 = vadd.f32 0.0, %v814
    %v816 = vpop.f32.mrb[0].mxu0
    %817 = vdwg.mxu0
    %v818 = vmul.f32 %v810, 0.25
    %v819 = vmul.f32 %v815, 0.25
    %v820 = vadd.f32 %v818, %v120
    %v821 = vadd.f32 %v819, %v121
    %v822 = vsel %vm421, %v820, -inf
    %823 = vmax.xlane.f32.xlu0 %v822
    %v824 = vpop.xlane.xlu0 %823
    %v825 = vsel %vm421, %v821, -inf
    %826 = vmax.xlane.f32.xlu0 %v825
    %v827 = vpop.xlane.xlu0 %826
    %v828 = vsub.f32 %v820, %v824
    %v829 = vsub.f32 %v821, %v827
    %v830 = vmul.f32 %v828, 1.442695
    %v831 = vpow.pop %v830
    %v832 = vmul.f32 %v829, 1.442695
    %v833 = vpow.pop %v832
    %v834 = vsel %vm421, %v831, 0.0
    %835 = vadd.xlane.f32.xlu0 %v834
    %v836 = vpop.xlane.xlu0 %835
    %v837 = vsel %vm421, %v833, 0.0
    %838 = vadd.xlane.f32.xlu0 %v837
    %v839 = vpop.xlane.xlu0 %838
    %v840 = vrcp.pop %v836
    %v841 = vrcp.pop %v839
    %v842 = vmul.f32 %v831, %v840
    %v843 = vmul.f32 %v833, %v841
    %v844 = vmul.f32 %v313, %v733
    %v845 = vmul.f32 %v318, %v733
    %v847 = vsel %vm421, %v842, 0
    %v850 = vsel %vm421, %v843, 0
    %852 = vmatprep.subr.mxu0 0.0
    %853 = vmatpush1.msra.mxu0 %v844
    %854 = vmatprep.subr.mxu0 0.0
    %855 = vmatpush1.msra.mxu0 %v845
    %856 = vmatprep.subr.mxu0 0.0
    %857 = vmatpush1.msra.mxu0 0.0
    %858 = vmatprep.subr.mxu0 0.0
    %859 = vmatpush1.msra.mxu0 0.0
    %860 = vmatprep.subr.mxu0 0.0
    %861 = vmatpush1.msra.mxu0 0.0
    %862 = vmatprep.subr.mxu0 0.0
    %863 = vmatpush1.msra.mxu0 0.0
    %864 = vmatprep.subr.mxu0 0.0
    %865 = vmatpush1.msra.mxu0 0.0
    %866 = vmatprep.subr.mxu0 0.0
    %867 = vmatpush1.msra.mxu0 0.0
    %868 = vmatprep.subr.mxu0 0.0
    %869 = vmatpush1.msra.mxu0 0.0
    %870 = vmatprep.subr.mxu0 0.0
    %871 = vmatpush1.msra.mxu0 0.0
    %872 = vmatprep.subr.mxu0 0.0
    %873 = vmatpush1.msra.mxu0 0.0
    %874 = vmatprep.subr.mxu0 0.0
    %875 = vmatpush1.msra.mxu0 0.0
    %876 = vmatprep.subr.mxu0 0.0
    %877 = vmatpush1.msra.mxu0 0.0
    %878 = vmatprep.subr.mxu0 0.0
    %879 = vmatpush1.msra.mxu0 0.0
    %880 = vmatprep.subr.mxu0 0.0
    %881 = vmatpush1.msra.mxu0 0.0
    %882 = vmatprep.subr.mxu0 0.0
    %883 = vmatpush1.msra.mxu0 0.0
    %884 = vmatprep.subr.mxu0 0.0
    %885 = vmatpush1.msra.mxu0 0.0
    %886 = vmatprep.subr.mxu0 0.0
    %887 = vmatpush1.msra.mxu0 0.0
    %888 = vmatprep.subr.mxu0 0.0
    %889 = vmatpush1.msra.mxu0 0.0
    %890 = vmatprep.subr.mxu0 0.0
    %891 = vmatpush1.msra.mxu0 0.0
    %892 = vmatprep.subr.mxu0 0.0
    %893 = vmatpush1.msra.mxu0 0.0
    %894 = vmatprep.subr.mxu0 0.0
    %895 = vmatpush1.msra.mxu0 0.0
    %896 = vmatprep.subr.mxu0 0.0
    %897 = vmatpush1.msra.mxu0 0.0
    %898 = vmatprep.subr.mxu0 0.0
    %899 = vmatpush1.msra.mxu0 0.0
    %900 = vmatprep.subr.mxu0 0.0
    %901 = vmatpush1.msra.mxu0 0.0
    %902 = vmatprep.subr.mxu0 0.0
    %903 = vmatpush1.msra.mxu0 0.0
    %904 = vmatprep.subr.mxu0 0.0
    %905 = vmatpush1.msra.mxu0 0.0
    %906 = vmatprep.subr.mxu0 0.0
    %907 = vmatpush1.msra.mxu0 0.0
    %908 = vmatprep.subr.mxu0 0.0
    %909 = vmatpush1.msra.mxu0 0.0
    %910 = vmatprep.subr.mxu0 0.0
    %911 = vmatpush1.msra.mxu0 0.0
    %912 = vmatprep.subr.mxu0 0.0
    %913 = vmatpush1.msra.mxu0 0.0
    %914 = vmatprep.subr.mxu0 0.0
    %915 = vmatpush1.msra.mxu0 0.0
    %916 = vmatprep.mubr.f32.mxu0 0.0
    %917 = vmatmul.mubr.f32.gmra.mrb[0].mxu0 %v847
    %v918 = vpop.f32.mrb[0].mxu0
    %v919 = vadd.f32 0.0, %v918
    %v920 = vpop.f32.mrb[0].mxu0
    %921 = vmatprep.mubr.f32.mxu0 0.0
    %922 = vmatmul.mubr.f32.gmra.mrb[0].mxu0 %v850
    %v923 = vpop.f32.mrb[0].mxu0
    %v924 = vadd.f32 0.0, %v923
    %v925 = vpop.f32.mrb[0].mxu0
    %926 = vdwg.mxu0
    %v927 = vadd.f32 %v719, %v919
    %v928 = vadd.f32 %v724, %v924
    %s929 = scalar_lea.vmem %s4, 3
    %v930 = vld [vmem:[%s929] sm:$0x1]
    %v932 = vlaneseq
    %v933 = vshrl.u32 %v932, 7
    %v934 = vsub.s32 0, %v933
    %v935 = vrot.slane %v930, %v934
    %v937 = vmul.f32 %v236, %v935
    %v938 = vmul.f32 %v242, %v935
    %v940 = vsel %vm76, %v937, 0
    %v943 = vsel %vm76, %v938, 0
    %945 = vmatprep.subr.mxu0 0.0
    %946 = vmatpush1.xpose.msra.mxu0 %v337
    %947 = vmatprep.subr.mxu0 0.0
    %948 = vmatpush1.xpose.msra.mxu0 %v340
    %949 = vmatprep.subr.mxu0 0.0
    %950 = vmatpush1.xpose.msra.mxu0 0.0
    %951 = vmatprep.subr.mxu0 0.0
    %952 = vmatpush1.xpose.msra.mxu0 0.0
    %953 = vmatprep.subr.mxu0 0.0
    %954 = vmatpush1.xpose.msra.mxu0 0.0
    %955 = vmatprep.subr.mxu0 0.0
    %956 = vmatpush1.xpose.msra.mxu0 0.0
    %957 = vmatprep.subr.mxu0 0.0
    %958 = vmatpush1.xpose.msra.mxu0 0.0
    %959 = vmatprep.subr.mxu0 0.0
    %960 = vmatpush1.xpose.msra.mxu0 0.0
    %961 = vmatprep.subr.mxu0 0.0
    %962 = vmatpush1.xpose.msra.mxu0 0.0
    %963 = vmatprep.subr.mxu0 0.0
    %964 = vmatpush1.xpose.msra.mxu0 0.0
    %965 = vmatprep.subr.mxu0 0.0
    %966 = vmatpush1.xpose.msra.mxu0 0.0
    %967 = vmatprep.subr.mxu0 0.0
    %968 = vmatpush1.xpose.msra.mxu0 0.0
    %969 = vmatprep.subr.mxu0 0.0
    %970 = vmatpush1.xpose.msra.mxu0 0.0
    %971 = vmatprep.subr.mxu0 0.0
    %972 = vmatpush1.xpose.msra.mxu0 0.0
    %973 = vmatprep.subr.mxu0 0.0
    %974 = vmatpush1.xpose.msra.mxu0 0.0
    %975 = vmatprep.subr.mxu0 0.0
    %976 = vmatpush1.xpose.msra.mxu0 0.0
    %977 = vmatprep.subr.mxu0 0.0
    %978 = vmatpush1.xpose.msra.mxu0 0.0
    %979 = vmatprep.subr.mxu0 0.0
    %980 = vmatpush1.xpose.msra.mxu0 0.0
    %981 = vmatprep.subr.mxu0 0.0
    %982 = vmatpush1.xpose.msra.mxu0 0.0
    %983 = vmatprep.subr.mxu0 0.0
    %984 = vmatpush1.xpose.msra.mxu0 0.0
    %985 = vmatprep.subr.mxu0 0.0
    %986 = vmatpush1.xpose.msra.mxu0 0.0
    %987 = vmatprep.subr.mxu0 0.0
    %988 = vmatpush1.xpose.msra.mxu0 0.0
    %989 = vmatprep.subr.mxu0 0.0
    %990 = vmatpush1.xpose.msra.mxu0 0.0
    %991 = vmatprep.subr.mxu0 0.0
    %992 = vmatpush1.xpose.msra.mxu0 0.0
    %993 = vmatprep.subr.mxu0 0.0
    %994 = vmatpush1.xpose.msra.mxu0 0.0
    %995 = vmatprep.subr.mxu0 0.0
    %996 = vmatpush1.xpose.msra.mxu0 0.0
    %997 = vmatprep.subr.mxu0 0.0
    %998 = vmatpush1.xpose.msra.mxu0 0.0
    %999 = vmatprep.subr.mxu0 0.0
    %1000 = vmatpush1.xpose.msra.mxu0 0.0
    %1001 = vmatprep.subr.mxu0 0.0
    %1002 = vmatpush1.xpose.msra.mxu0 0.0
    %1003 = vmatprep.subr.mxu0 0.0
    %1004 = vmatpush1.xpose.msra.mxu0 0.0
    %1005 = vmatprep.subr.mxu0 0.0
    %1006 = vmatpush1.xpose.msra.mxu0 0.0
    %1007 = vmatprep.subr.mxu0 0.0
    %1008 = vmatpush1.xpose.msra.mxu0 0.0
    %1009 = vmatprep.mubr.f32.mxu0 0.0
    %1010 = vmatmul.mubr.f32.gmra.mrb[0].mxu0 %v940
    %v1011 = vpop.f32.mrb[0].mxu0
    %v1012 = vadd.f32 0.0, %v1011
    %v1013 = vpop.f32.mrb[0].mxu0
    %1014 = vmatprep.mubr.f32.mxu0 0.0
    %1015 = vmatmul.mubr.f32.gmra.mrb[0].mxu0 %v943
    %v1016 = vpop.f32.mrb[0].mxu0
    %v1017 = vadd.f32 0.0, %v1016
    %v1018 = vpop.f32.mrb[0].mxu0
    %1019 = vdwg.mxu0
    %v1020 = vmul.f32 %v1012, 0.25
    %v1021 = vmul.f32 %v1017, 0.25
    %v1022 = vadd.f32 %v1020, %v120
    %v1023 = vadd.f32 %v1021, %v121
    %v1024 = vsel %vm421, %v1022, -inf
    %1025 = vmax.xlane.f32.xlu0 %v1024
    %v1026 = vpop.xlane.xlu0 %1025
    %v1027 = vsel %vm421, %v1023, -inf
    %1028 = vmax.xlane.f32.xlu0 %v1027
    %v1029 = vpop.xlane.xlu0 %1028
    %v1030 = vsub.f32 %v1022, %v1026
    %v1031 = vsub.f32 %v1023, %v1029
    %v1032 = vmul.f32 %v1030, 1.442695
    %v1033 = vpow.pop %v1032
    %v1034 = vmul.f32 %v1031, 1.442695
    %v1035 = vpow.pop %v1034
    %v1036 = vsel %vm421, %v1033, 0.0
    %1037 = vadd.xlane.f32.xlu0 %v1036
    %v1038 = vpop.xlane.xlu0 %1037
    %v1039 = vsel %vm421, %v1035, 0.0
    %1040 = vadd.xlane.f32.xlu0 %v1039
    %v1041 = vpop.xlane.xlu0 %1040
    %v1042 = vrcp.pop %v1038
    %v1043 = vrcp.pop %v1041
    %v1044 = vmul.f32 %v1033, %v1042
    %v1045 = vmul.f32 %v1035, %v1043
    %v1046 = vmul.f32 %v313, %v935
    %v1047 = vmul.f32 %v318, %v935
    %v1049 = vsel %vm421, %v1044, 0
    %v1052 = vsel %vm421, %v1045, 0
    %1054 = vmatprep.subr.mxu0 0.0
    %1055 = vmatpush1.msra.mxu0 %v1046
    %1056 = vmatprep.subr.mxu0 0.0
    %1057 = vmatpush1.msra.mxu0 %v1047
    %1058 = vmatprep.subr.mxu0 0.0
    %1059 = vmatpush1.msra.mxu0 0.0
    %1060 = vmatprep.subr.mxu0 0.0
    %1061 = vmatpush1.msra.mxu0 0.0
    %1062 = vmatprep.subr.mxu0 0.0
    %1063 = vmatpush1.msra.mxu0 0.0
    %1064 = vmatprep.subr.mxu0 0.0
    %1065 = vmatpush1.msra.mxu0 0.0
    %1066 = vmatprep.subr.mxu0 0.0
    %1067 = vmatpush1.msra.mxu0 0.0
    %1068 = vmatprep.subr.mxu0 0.0
    %1069 = vmatpush1.msra.mxu0 0.0
    %1070 = vmatprep.subr.mxu0 0.0
    %1071 = vmatpush1.msra.mxu0 0.0
    %1072 = vmatprep.subr.mxu0 0.0
    %1073 = vmatpush1.msra.mxu0 0.0
    %1074 = vmatprep.subr.mxu0 0.0
    %1075 = vmatpush1.msra.mxu0 0.0
    %1076 = vmatprep.subr.mxu0 0.0
    %1077 = vmatpush1.msra.mxu0 0.0
    %1078 = vmatprep.subr.mxu0 0.0
    %1079 = vmatpush1.msra.mxu0 0.0
    %1080 = vmatprep.subr.mxu0 0.0
    %1081 = vmatpush1.msra.mxu0 0.0
    %1082 = vmatprep.subr.mxu0 0.0
    %1083 = vmatpush1.msra.mxu0 0.0
    %1084 = vmatprep.subr.mxu0 0.0
    %1085 = vmatpush1.msra.mxu0 0.0
    %1086 = vmatprep.subr.mxu0 0.0
    %1087 = vmatpush1.msra.mxu0 0.0
    %1088 = vmatprep.subr.mxu0 0.0
    %1089 = vmatpush1.msra.mxu0 0.0
    %1090 = vmatprep.subr.mxu0 0.0
    %1091 = vmatpush1.msra.mxu0 0.0
    %1092 = vmatprep.subr.mxu0 0.0
    %1093 = vmatpush1.msra.mxu0 0.0
    %1094 = vmatprep.subr.mxu0 0.0
    %1095 = vmatpush1.msra.mxu0 0.0
    %1096 = vmatprep.subr.mxu0 0.0
    %1097 = vmatpush1.msra.mxu0 0.0
    %1098 = vmatprep.subr.mxu0 0.0
    %1099 = vmatpush1.msra.mxu0 0.0
    %1100 = vmatprep.subr.mxu0 0.0
    %1101 = vmatpush1.msra.mxu0 0.0
    %1102 = vmatprep.subr.mxu0 0.0
    %1103 = vmatpush1.msra.mxu0 0.0
    %1104 = vmatprep.subr.mxu0 0.0
    %1105 = vmatpush1.msra.mxu0 0.0
    %1106 = vmatprep.subr.mxu0 0.0
    %1107 = vmatpush1.msra.mxu0 0.0
    %1108 = vmatprep.subr.mxu0 0.0
    %1109 = vmatpush1.msra.mxu0 0.0
    %1110 = vmatprep.subr.mxu0 0.0
    %1111 = vmatpush1.msra.mxu0 0.0
    %1112 = vmatprep.subr.mxu0 0.0
    %1113 = vmatpush1.msra.mxu0 0.0
    %1114 = vmatprep.subr.mxu0 0.0
    %1115 = vmatpush1.msra.mxu0 0.0
    %1116 = vmatprep.subr.mxu0 0.0
    %1117 = vmatpush1.msra.mxu0 0.0
    %1118 = vmatprep.mubr.f32.mxu0 0.0
    %1119 = vmatmul.mubr.f32.gmra.mrb[0].mxu0 %v1049
    %v1120 = vpop.f32.mrb[0].mxu0
    %v1121 = vadd.f32 0.0, %v1120
    %v1122 = vpop.f32.mrb[0].mxu0
    %1123 = vmatprep.mubr.f32.mxu0 0.0
    %1124 = vmatmul.mubr.f32.gmra.mrb[0].mxu0 %v1052
    %v1125 = vpop.f32.mrb[0].mxu0
    %v1126 = vadd.f32 0.0, %v1125
    %v1127 = vpop.f32.mrb[0].mxu0
    %1128 = vdwg.mxu0
    %v1129 = vadd.f32 %v927, %v1121
    %v1130 = vadd.f32 %v928, %v1126
    %v1131 = vld [vmem:[%s9] sm:$0xff]
    %v1132 = vld [vmem:[%s9 + $0x8] sm:$0xff]
    %v1133 = vld [vmem:[%s9 + $0x10] sm:$0xff]
    %v1134 = vld [vmem:[%s9 + $0x18] sm:$0xff]
    %v1135 = vld [vmem:[%s9 + $0x20] sm:$0xff]
    %v1136 = vld [vmem:[%s9 + $0x28] sm:$0xff]
    %v1137 = vld [vmem:[%s9 + $0x30] sm:$0xff]
    %v1138 = vld [vmem:[%s9 + $0x38] sm:$0xff]
    %v1139 = vld [vmem:[%s10] sm:$0x1]
    %v1141 = vlaneseq
    %v1142 = vshrl.u32 %v1141, 7
    %v1143 = vsub.s32 0, %v1142
    %v1144 = vrot.slane %v1139, %v1143
    %v1147 = vsel %vm76, %v1129, 0
    %v1150 = vsel %vm76, %v1130, 0
    %1152 = vmatprep.subr.mxu0 0.0
    %1153 = vmatpush1.msra.mxu0 %v1131
    %1154 = vmatprep.subr.mxu0 0.0
    %1155 = vmatpush1.msra.mxu0 %v1132
    %1156 = vmatprep.subr.mxu0 0.0
    %1157 = vmatpush1.msra.mxu0 %v1133
    %1158 = vmatprep.subr.mxu0 0.0
    %1159 = vmatpush1.msra.mxu0 %v1134
    %1160 = vmatprep.subr.mxu0 0.0
    %1161 = vmatpush1.msra.mxu0 %v1135
    %1162 = vmatprep.subr.mxu0 0.0
    %1163 = vmatpush1.msra.mxu0 %v1136
    %1164 = vmatprep.subr.mxu0 0.0
    %1165 = vmatpush1.msra.mxu0 %v1137
    %1166 = vmatprep.subr.mxu0 0.0
    %1167 = vmatpush1.msra.mxu0 %v1138
    %1168 = vmatprep.subr.mxu0 0.0
    %1169 = vmatpush1.msra.mxu0 0.0
    %1170 = vmatprep.subr.mxu0 0.0
    %1171 = vmatpush1.msra.mxu0 0.0
    %1172 = vmatprep.subr.mxu0 0.0
    %1173 = vmatpush1.msra.mxu0 0.0
    %1174 = vmatprep.subr.mxu0 0.0
    %1175 = vmatpush1.msra.mxu0 0.0
    %1176 = vmatprep.subr.mxu0 0.0
    %1177 = vmatpush1.msra.mxu0 0.0
    %1178 = vmatprep.subr.mxu0 0.0
    %1179 = vmatpush1.msra.mxu0 0.0
    %1180 = vmatprep.subr.mxu0 0.0
    %1181 = vmatpush1.msra.mxu0 0.0
    %1182 = vmatprep.subr.mxu0 0.0
    %1183 = vmatpush1.msra.mxu0 0.0
    %1184 = vmatprep.subr.mxu0 0.0
    %1185 = vmatpush1.msra.mxu0 0.0
    %1186 = vmatprep.subr.mxu0 0.0
    %1187 = vmatpush1.msra.mxu0 0.0
    %1188 = vmatprep.subr.mxu0 0.0
    %1189 = vmatpush1.msra.mxu0 0.0
    %1190 = vmatprep.subr.mxu0 0.0
    %1191 = vmatpush1.msra.mxu0 0.0
    %1192 = vmatprep.subr.mxu0 0.0
    %1193 = vmatpush1.msra.mxu0 0.0
    %1194 = vmatprep.subr.mxu0 0.0
    %1195 = vmatpush1.msra.mxu0 0.0
    %1196 = vmatprep.subr.mxu0 0.0
    %1197 = vmatpush1.msra.mxu0 0.0
    %1198 = vmatprep.subr.mxu0 0.0
    %1199 = vmatpush1.msra.mxu0 0.0
    %1200 = vmatprep.subr.mxu0 0.0
    %1201 = vmatpush1.msra.mxu0 0.0
    %1202 = vmatprep.subr.mxu0 0.0
    %1203 = vmatpush1.msra.mxu0 0.0
    %1204 = vmatprep.subr.mxu0 0.0
    %1205 = vmatpush1.msra.mxu0 0.0
    %1206 = vmatprep.subr.mxu0 0.0
    %1207 = vmatpush1.msra.mxu0 0.0
    %1208 = vmatprep.subr.mxu0 0.0
    %1209 = vmatpush1.msra.mxu0 0.0
    %1210 = vmatprep.subr.mxu0 0.0
    %1211 = vmatpush1.msra.mxu0 0.0
    %1212 = vmatprep.subr.mxu0 0.0
    %1213 = vmatpush1.msra.mxu0 0.0
    %1214 = vmatprep.subr.mxu0 0.0
    %1215 = vmatpush1.msra.mxu0 0.0
    %1216 = vmatprep.mubr.f32.mxu0 0.0
    %1217 = vmatmul.mubr.f32.gmra.mrb[0].mxu0 %v1147
    %v1218 = vpop.f32.mrb[0].mxu0
    %v1219 = vadd.f32 %v1144, %v1218
    %v1220 = vpop.f32.mrb[0].mxu0
    %1221 = vmatprep.mubr.f32.mxu0 0.0
    %1222 = vmatmul.mubr.f32.gmra.mrb[0].mxu0 %v1150
    %v1223 = vpop.f32.mrb[0].mxu0
    %v1224 = vadd.f32 %v1144, %v1223
    %v1225 = vpop.f32.mrb[0].mxu0
    %1226 = vdwg.mxu0
    %v1227 = vadd.f32 %v118, %v1219
    %v1228 = vadd.f32 %v119, %v1224
    %v1229 = vld [vmem:[%s11] sm:$0x1]
    %v1230 = vld [vmem:[%s12] sm:$0x1]
    %v1231 = vsel %vm76, %v1227, 0.0
    %1232 = vadd.xlane.f32.xlu0 %v1231
    %v1233 = vpop.xlane.xlu0 %1232
    %v1234 = vsel %vm76, %v1228, 0.0
    %1235 = vadd.xlane.f32.xlu0 %v1234
    %v1236 = vpop.xlane.xlu0 %1235
    %v1237 = vmul.f32 %v1233, %v83
    %v1238 = vmul.f32 %v1236, %v83
    %v1239 = vsub.f32 %v1227, %v1237
    %v1240 = vsub.f32 %v1228, %v1238
    %v1241 = vmul.f32 %v1239, %v1239
    %v1242 = vmul.f32 %v1240, %v1240
    %v1243 = vsel %vm76, %v1241, 0.0
    %1244 = vadd.xlane.f32.xlu0 %v1243
    %v1245 = vpop.xlane.xlu0 %1244
    %v1246 = vsel %vm76, %v1242, 0.0
    %1247 = vadd.xlane.f32.xlu0 %v1246
    %v1248 = vpop.xlane.xlu0 %1247
    %v1249 = vmul.f32 %v1245, %v83
    %v1250 = vmul.f32 %v1248, %v83
    %v1251 = vadd.f32 %v1249, 1e-12
    %v1252 = vadd.f32 %v1250, 1e-12
    %v1253 = vrsqrt.pop %v1251
    %v1254 = vrsqrt.pop %v1252
    %v1255 = vmul.f32 %v1239, %v1253
    %v1256 = vmul.f32 %v1240, %v1254
    %v1258 = vlaneseq
    %v1259 = vshrl.u32 %v1258, 7
    %v1260 = vsub.s32 0, %v1259
    %v1261 = vrot.slane %v1229, %v1260
    %v1263 = vmul.f32 %v1255, %v1261
    %v1264 = vmul.f32 %v1256, %v1261
    %v1266 = vlaneseq
    %v1267 = vshrl.u32 %v1266, 7
    %v1268 = vsub.s32 0, %v1267
    %v1269 = vrot.slane %v1230, %v1268
    %v1271 = vadd.f32 %v1263, %v1269
    %v1272 = vadd.f32 %v1264, %v1269
    %v1273 = vld [vmem:[%s13] sm:$0xff]
    %v1274 = vld [vmem:[%s13 + $0x8] sm:$0xff]
    %v1275 = vld [vmem:[%s13 + $0x10] sm:$0xff]
    %v1276 = vld [vmem:[%s13 + $0x18] sm:$0xff]
    %v1277 = vld [vmem:[%s13 + $0x20] sm:$0xff]
    %v1278 = vld [vmem:[%s13 + $0x28] sm:$0xff]
    %v1279 = vld [vmem:[%s13 + $0x30] sm:$0xff]
    %v1280 = vld [vmem:[%s13 + $0x38] sm:$0xff]
    %v1281 = vld [vmem:[%s14] sm:$0x1]
    %v1283 = vlaneseq
    %v1284 = vshrl.u32 %v1283, 7
    %v1285 = vsub.s32 0, %v1284
    %v1286 = vrot.slane %v1281, %v1285
    %v1289 = vsel %vm76, %v1271, 0
    %v1292 = vsel %vm76, %v1272, 0
    %1294 = vmatprep.subr.mxu0 0.0
    %1295 = vmatpush1.msra.mxu0 %v1273
    %1296 = vmatprep.subr.mxu0 0.0
    %1297 = vmatpush1.msra.mxu0 %v1274
    %1298 = vmatprep.subr.mxu0 0.0
    %1299 = vmatpush1.msra.mxu0 %v1275
    %1300 = vmatprep.subr.mxu0 0.0
    %1301 = vmatpush1.msra.mxu0 %v1276
    %1302 = vmatprep.subr.mxu0 0.0
    %1303 = vmatpush1.msra.mxu0 %v1277
    %1304 = vmatprep.subr.mxu0 0.0
    %1305 = vmatpush1.msra.mxu0 %v1278
    %1306 = vmatprep.subr.mxu0 0.0
    %1307 = vmatpush1.msra.mxu0 %v1279
    %1308 = vmatprep.subr.mxu0 0.0
    %1309 = vmatpush1.msra.mxu0 %v1280
    %1310 = vmatprep.subr.mxu0 0.0
    %1311 = vmatpush1.msra.mxu0 0.0
    %1312 = vmatprep.subr.mxu0 0.0
    %1313 = vmatpush1.msra.mxu0 0.0
    %1314 = vmatprep.subr.mxu0 0.0
    %1315 = vmatpush1.msra.mxu0 0.0
    %1316 = vmatprep.subr.mxu0 0.0
    %1317 = vmatpush1.msra.mxu0 0.0
    %1318 = vmatprep.subr.mxu0 0.0
    %1319 = vmatpush1.msra.mxu0 0.0
    %1320 = vmatprep.subr.mxu0 0.0
    %1321 = vmatpush1.msra.mxu0 0.0
    %1322 = vmatprep.subr.mxu0 0.0
    %1323 = vmatpush1.msra.mxu0 0.0
    %1324 = vmatprep.subr.mxu0 0.0
    %1325 = vmatpush1.msra.mxu0 0.0
    %1326 = vmatprep.subr.mxu0 0.0
    %1327 = vmatpush1.msra.mxu0 0.0
    %1328 = vmatprep.subr.mxu0 0.0
    %1329 = vmatpush1.msra.mxu0 0.0
    %1330 = vmatprep.subr.mxu0 0.0
    %1331 = vmatpush1.msra.mxu0 0.0
    %1332 = vmatprep.subr.mxu0 0.0
    %1333 = vmatpush1.msra.mxu0 0.0
    %1334 = vmatprep.subr.mxu0 0.0
    %1335 = vmatpush1.msra.mxu0 0.0
    %1336 = vmatprep.subr.mxu0 0.0
    %1337 = vmatpush1.msra.mxu0 0.0
    %1338 = vmatprep.subr.mxu0 0.0
    %1339 = vmatpush1.msra.mxu0 0.0
    %1340 = vmatprep.subr.mxu0 0.0
    %1341 = vmatpush1.msra.mxu0 0.0
    %1342 = vmatprep.subr.mxu0 0.0
    %1343 = vmatpush1.msra.mxu0 0.0
    %1344 = vmatprep.subr.mxu0 0.0
    %1345 = vmatpush1.msra.mxu0 0.0
    %1346 = vmatprep.subr.mxu0 0.0
    %1347 = vmatpush1.msra.mxu0 0.0
    %1348 = vmatprep.subr.mxu0 0.0
    %1349 = vmatpush1.msra.mxu0 0.0
    %1350 = vmatprep.subr.mxu0 0.0
    %1351 = vmatpush1.msra.mxu0 0.0
    %1352 = vmatprep.subr.mxu0 0.0
    %1353 = vmatpush1.msra.mxu0 0.0
    %1354 = vmatprep.subr.mxu0 0.0
    %1355 = vmatpush1.msra.mxu0 0.0
    %1356 = vmatprep.subr.mxu0 0.0
    %1357 = vmatpush1.msra.mxu0 0.0
    %1358 = vmatprep.mubr.f32.mxu0 0.0
    %1359 = vmatmul.mubr.f32.gmra.mrb[0].mxu0 %v1289
    %v1360 = vpop.f32.mrb[0].mxu0
    %v1361 = vadd.f32 %v1286, %v1360
    %v1362 = vpop.f32.mrb[0].mxu0
    %1363 = vmatprep.mubr.f32.mxu0 0.0
    %1364 = vmatmul.mubr.f32.gmra.mrb[0].mxu0 %v1292
    %v1365 = vpop.f32.mrb[0].mxu0
    %v1366 = vadd.f32 %v1286, %v1365
    %v1367 = vpop.f32.mrb[0].mxu0
    %1368 = vdwg.mxu0
    %v1369 = vmul.f32 %v1361, 0.5
    %v1370 = vmul.f32 %v1366, 0.5
    %v1371 = vmul.f32 %v1361, 0.044715
    %v1372 = vmul.f32 %v1366, 0.044715
    %v1373 = vmul.f32 %v1371, %v1361
    %v1374 = vmul.f32 %v1372, %v1366
    %v1375 = vmul.f32 %v1373, %v1361
    %v1376 = vmul.f32 %v1374, %v1366
    %v1377 = vadd.f32 %v1361, %v1375
    %v1378 = vadd.f32 %v1366, %v1376
    %v1379 = vmul.f32 %v1377, 0.7978846
    %v1380 = vmul.f32 %v1378, 0.7978846
    %v1381 = vtanh.pop %v1379
    %v1382 = vtanh.pop %v1380
    %v1383 = vadd.f32 %v1381, 1.0
    %v1384 = vadd.f32 %v1382, 1.0
    %v1385 = vmul.f32 %v1369, %v1383
    %v1386 = vmul.f32 %v1370, %v1384
    %v1387 = vld [vmem:[%s15] sm:$0xff]
    %v1388 = vld [vmem:[%s15 + $0x8] sm:$0xff]
    %v1389 = vld [vmem:[%s15 + $0x10] sm:$0xff]
    %v1390 = vld [vmem:[%s15 + $0x18] sm:$0xff]
    %v1391 = vld [vmem:[%s15 + $0x20] sm:$0xff]
    %v1392 = vld [vmem:[%s15 + $0x28] sm:$0xff]
    %v1393 = vld [vmem:[%s15 + $0x30] sm:$0xff]
    %v1394 = vld [vmem:[%s15 + $0x38] sm:$0xff]
    %v1395 = vld [vmem:[%s15 + $0x40] sm:$0xff]
    %v1396 = vld [vmem:[%s15 + $0x48] sm:$0xff]
    %v1397 = vld [vmem:[%s15 + $0x50] sm:$0xff]
    %v1398 = vld [vmem:[%s15 + $0x58] sm:$0xff]
    %v1399 = vld [vmem:[%s15 + $0x60] sm:$0xff]
    %v1400 = vld [vmem:[%s15 + $0x68] sm:$0xff]
    %v1401 = vld [vmem:[%s15 + $0x70] sm:$0xff]
    %v1402 = vld [vmem:[%s15 + $0x78] sm:$0xff]
    %v1403 = vld [vmem:[%s16] sm:$0x1]
    %v1405 = vlaneseq
    %v1406 = vshrl.u32 %v1405, 7
    %v1407 = vsub.s32 0, %v1406
    %v1408 = vrot.slane %v1403, %v1407
    %1410 = vmatprep.subr.mxu0 0.0
    %1411 = vmatpush1.msra.mxu0 %v1387
    %1412 = vmatprep.subr.mxu0 0.0
    %1413 = vmatpush1.msra.mxu0 %v1388
    %1414 = vmatprep.subr.mxu0 0.0
    %1415 = vmatpush1.msra.mxu0 %v1389
    %1416 = vmatprep.subr.mxu0 0.0
    %1417 = vmatpush1.msra.mxu0 %v1390
    %1418 = vmatprep.subr.mxu0 0.0
    %1419 = vmatpush1.msra.mxu0 %v1391
    %1420 = vmatprep.subr.mxu0 0.0
    %1421 = vmatpush1.msra.mxu0 %v1392
    %1422 = vmatprep.subr.mxu0 0.0
    %1423 = vmatpush1.msra.mxu0 %v1393
    %1424 = vmatprep.subr.mxu0 0.0
    %1425 = vmatpush1.msra.mxu0 %v1394
    %1426 = vmatprep.subr.mxu0 0.0
    %1427 = vmatpush1.msra.mxu0 %v1395
    %1428 = vmatprep.subr.mxu0 0.0
    %1429 = vmatpush1.msra.mxu0 %v1396
    %1430 = vmatprep.subr.mxu0 0.0
    %1431 = vmatpush1.msra.mxu0 %v1397
    %1432 = vmatprep.subr.mxu0 0.0
    %1433 = vmatpush1.msra.mxu0 %v1398
    %1434 = vmatprep.subr.mxu0 0.0
    %1435 = vmatpush1.msra.mxu0 %v1399
    %1436 = vmatprep.subr.mxu0 0.0
    %1437 = vmatpush1.msra.mxu0 %v1400
    %1438 = vmatprep.subr.mxu0 0.0
    %1439 = vmatpush1.msra.mxu0 %v1401
    %1440 = vmatprep.subr.mxu0 0.0
    %1441 = vmatpush1.msra.mxu0 %v1402
    %1442 = vmatprep.subr.mxu0 0.0
    %1443 = vmatpush1.msra.mxu0 0.0
    %1444 = vmatprep.subr.mxu0 0.0
    %1445 = vmatpush1.msra.mxu0 0.0
    %1446 = vmatprep.subr.mxu0 0.0
    %1447 = vmatpush1.msra.mxu0 0.0
    %1448 = vmatprep.subr.mxu0 0.0
    %1449 = vmatpush1.msra.mxu0 0.0
    %1450 = vmatprep.subr.mxu0 0.0
    %1451 = vmatpush1.msra.mxu0 0.0
    %1452 = vmatprep.subr.mxu0 0.0
    %1453 = vmatpush1.msra.mxu0 0.0
    %1454 = vmatprep.subr.mxu0 0.0
    %1455 = vmatpush1.msra.mxu0 0.0
    %1456 = vmatprep.subr.mxu0 0.0
    %1457 = vmatpush1.msra.mxu0 0.0
    %1458 = vmatprep.subr.mxu0 0.0
    %1459 = vmatpush1.msra.mxu0 0.0
    %1460 = vmatprep.subr.mxu0 0.0
    %1461 = vmatpush1.msra.mxu0 0.0
    %1462 = vmatprep.subr.mxu0 0.0
    %1463 = vmatpush1.msra.mxu0 0.0
    %1464 = vmatprep.subr.mxu0 0.0
    %1465 = vmatpush1.msra.mxu0 0.0
    %1466 = vmatprep.subr.mxu0 0.0
    %1467 = vmatpush1.msra.mxu0 0.0
    %1468 = vmatprep.subr.mxu0 0.0
    %1469 = vmatpush1.msra.mxu0 0.0
    %1470 = vmatprep.subr.mxu0 0.0
    %1471 = vmatpush1.msra.mxu0 0.0
    %1472 = vmatprep.subr.mxu0 0.0
    %1473 = vmatpush1.msra.mxu0 0.0
    %1474 = vmatprep.mubr.f32.mxu0 0.0
    %1475 = vmatmul.mubr.f32.gmra.mrb[0].mxu0 %v1385
    %v1476 = vpop.f32.mrb[0].mxu0
    %v1477 = vadd.f32 %v1408, %v1476
    %v1478 = vpop.f32.mrb[0].mxu0
    %1479 = vmatprep.mubr.f32.mxu0 0.0
    %1480 = vmatmul.mubr.f32.gmra.mrb[0].mxu0 %v1386
    %v1481 = vpop.f32.mrb[0].mxu0
    %v1482 = vadd.f32 %v1408, %v1481
    %v1483 = vpop.f32.mrb[0].mxu0
    %1484 = vdwg.mxu0
    %v1485 = vadd.f32 %v1271, %v1477
    %v1486 = vadd.f32 %v1272, %v1482
    %v1487 = vld [vmem:[%s17] sm:$0x1]
    %v1488 = vld [vmem:[%s18] sm:$0x1]
    %v1489 = vsel %vm76, %v1485, 0.0
    %1490 = vadd.xlane.f32.xlu0 %v1489
    %v1491 = vpop.xlane.xlu0 %1490
    %v1492 = vsel %vm76, %v1486, 0.0
    %1493 = vadd.xlane.f32.xlu0 %v1492
    %v1494 = vpop.xlane.xlu0 %1493
    %v1495 = vmul.f32 %v1491, %v83
    %v1496 = vmul.f32 %v1494, %v83
    %v1497 = vsub.f32 %v1485, %v1495
    %v1498 = vsub.f32 %v1486, %v1496
    %v1499 = vmul.f32 %v1497, %v1497
    %v1500 = vmul.f32 %v1498, %v1498
    %v1501 = vsel %vm76, %v1499, 0.0
    %1502 = vadd.xlane.f32.xlu0 %v1501
    %v1503 = vpop.xlane.xlu0 %1502
    %v1504 = vsel %vm76, %v1500, 0.0
    %1505 = vadd.xlane.f32.xlu0 %v1504
    %v1506 = vpop.xlane.xlu0 %1505
    %v1507 = vmul.f32 %v1503, %v83
    %v1508 = vmul.f32 %v1506, %v83
    %v1509 = vadd.f32 %v1507, 1e-12
    %v1510 = vadd.f32 %v1508, 1e-12
    %v1511 = vrsqrt.pop %v1509
    %v1512 = vrsqrt.pop %v1510
    %v1513 = vmul.f32 %v1497, %v1511
    %v1514 = vmul.f32 %v1498, %v1512
    %v1516 = vlaneseq
    %v1517 = vshrl.u32 %v1516, 7
    %v1518 = vsub.s32 0, %v1517
    %v1519 = vrot.slane %v1487, %v1518
    %v1521 = vmul.f32 %v1513, %v1519
    %v1522 = vmul.f32 %v1514, %v1519
    %v1524 = vlaneseq
    %v1525 = vshrl.u32 %v1524, 7
    %v1526 = vsub.s32 0, %v1525
    %v1527 = vrot.slane %v1488, %v1526
    %v1529 = vadd.f32 %v1521, %v1527
    %v1530 = vadd.f32 %v1522, %v1527
    %s1531 = scalar_lea.vmem %s7, 192
    %v1532 = vld [vmem:[%s1531] sm:$0xff]
    %v1533 = vld [vmem:[%s1531 + $0x8] sm:$0xff]
    %v1534 = vld [vmem:[%s1531 + $0x10] sm:$0xff]
    %v1535 = vld [vmem:[%s1531 + $0x18] sm:$0xff]
    %v1536 = vld [vmem:[%s1531 + $0x20] sm:$0xff]
    %v1537 = vld [vmem:[%s1531 + $0x28] sm:$0xff]
    %v1538 = vld [vmem:[%s1531 + $0x30] sm:$0xff]
    %v1539 = vld [vmem:[%s1531 + $0x38] sm:$0xff]
    %v1540 = vld [vmem:[%s1531 + $0x40] sm:$0xff]
    %v1541 = vld [vmem:[%s1531 + $0x48] sm:$0xff]
    %v1542 = vld [vmem:[%s1531 + $0x50] sm:$0xff]
    %v1543 = vld [vmem:[%s1531 + $0x58] sm:$0xff]
    %v1544 = vld [vmem:[%s1531 + $0x60] sm:$0xff]
    %v1545 = vld [vmem:[%s1531 + $0x68] sm:$0xff]
    %v1546 = vld [vmem:[%s1531 + $0x70] sm:$0xff]
    %v1547 = vld [vmem:[%s1531 + $0x78] sm:$0xff]
    %v1548 = vld [vmem:[%s1531 + $0x80] sm:$0xff]
    %v1549 = vld [vmem:[%s1531 + $0x88] sm:$0xff]
    %v1550 = vld [vmem:[%s1531 + $0x90] sm:$0xff]
    %v1551 = vld [vmem:[%s1531 + $0x98] sm:$0xff]
    %v1552 = vld [vmem:[%s1531 + $0xa0] sm:$0xff]
    %v1553 = vld [vmem:[%s1531 + $0xa8] sm:$0xff]
    %v1554 = vld [vmem:[%s1531 + $0xb0] sm:$0xff]
    %v1555 = vld [vmem:[%s1531 + $0xb8] sm:$0xff]
    %s1556 = scalar_lea.vmem %s8, 3
    %v1557 = vld [vmem:[%s1556] sm:$0x7]
    %v1559 = vlaneseq
    %v1560 = vshrl.u32 %v1559, 7
    %v1561 = vsub.s32 0, %v1560
    %v1562 = vrot.slane %v1557, %v1561
    %v1563 = vlaneseq
    %v1564 = vshrl.u32 %v1563, 7
    %v1565 = vsub.s32 1, %v1564
    %v1566 = vrot.slane %v1557, %v1565
    %v1567 = vlaneseq
    %v1568 = vshrl.u32 %v1567, 7
    %v1569 = vsub.s32 2, %v1568
    %v1570 = vrot.slane %v1557, %v1569
    %v1575 = vsel %vm76, %v1529, 0
    %v1578 = vsel %vm76, %v1530, 0
    %1580 = vmatprep.subr.mxu0 %v1533
    %1581 = vmatpush1.msra.mxu0 %v1532
    %1582 = vmatprep.subr.mxu0 %v1536
    %1583 = vmatpush1.msra.mxu0 %v1535
    %1584 = vmatprep.subr.mxu0 %v1539
    %1585 = vmatpush1.msra.mxu0 %v1538
    %1586 = vmatprep.subr.mxu0 %v1542
    %1587 = vmatpush1.msra.mxu0 %v1541
    %1588 = vmatprep.subr.mxu0 %v1545
    %1589 = vmatpush1.msra.mxu0 %v1544
    %1590 = vmatprep.subr.mxu0 %v1548
    %1591 = vmatpush1.msra.mxu0 %v1547
    %1592 = vmatprep.subr.mxu0 %v1551
    %1593 = vmatpush1.msra.mxu0 %v1550
    %1594 = vmatprep.subr.mxu0 %v1554
    %1595 = vmatpush1.msra.mxu0 %v1553
    %1596 = vmatprep.subr.mxu0 0.0
    %1597 = vmatpush1.msra.mxu0 0.0
    %1598 = vmatprep.subr.mxu0 0.0
    %1599 = vmatpush1.msra.mxu0 0.0
    %1600 = vmatprep.subr.mxu0 0.0
    %1601 = vmatpush1.msra.mxu0 0.0
    %1602 = vmatprep.subr.mxu0 0.0
    %1603 = vmatpush1.msra.mxu0 0.0
    %1604 = vmatprep.subr.mxu0 0.0
    %1605 = vmatpush1.msra.mxu0 0.0
    %1606 = vmatprep.subr.mxu0 0.0
    %1607 = vmatpush1.msra.mxu0 0.0
    %1608 = vmatprep.subr.mxu0 0.0
    %1609 = vmatpush1.msra.mxu0 0.0
    %1610 = vmatprep.subr.mxu0 0.0
    %1611 = vmatpush1.msra.mxu0 0.0
    %1612 = vmatprep.subr.mxu0 0.0
    %1613 = vmatpush1.msra.mxu0 0.0
    %1614 = vmatprep.subr.mxu0 0.0
    %1615 = vmatpush1.msra.mxu0 0.0
    %1616 = vmatprep.subr.mxu0 0.0
    %1617 = vmatpush1.msra.mxu0 0.0
    %1618 = vmatprep.subr.mxu0 0.0
    %1619 = vmatpush1.msra.mxu0 0.0
    %1620 = vmatprep.subr.mxu0 0.0
    %1621 = vmatpush1.msra.mxu0 0.0
    %1622 = vmatprep.subr.mxu0 0.0
    %1623 = vmatpush1.msra.mxu0 0.0
    %1624 = vmatprep.subr.mxu0 0.0
    %1625 = vmatpush1.msra.mxu0 0.0
    %1626 = vmatprep.subr.mxu0 0.0
    %1627 = vmatpush1.msra.mxu0 0.0
    %1628 = vmatprep.subr.mxu0 0.0
    %1629 = vmatpush1.msra.mxu0 0.0
    %1630 = vmatprep.subr.mxu0 0.0
    %1631 = vmatpush1.msra.mxu0 0.0
    %1632 = vmatprep.subr.mxu0 0.0
    %1633 = vmatpush1.msra.mxu0 0.0
    %1634 = vmatprep.subr.mxu0 0.0
    %1635 = vmatpush1.msra.mxu0 0.0
    %1636 = vmatprep.subr.mxu0 0.0
    %1637 = vmatpush1.msra.mxu0 0.0
    %1638 = vmatprep.subr.mxu0 0.0
    %1639 = vmatpush1.msra.mxu0 0.0
    %1640 = vmatprep.subr.mxu0 0.0
    %1641 = vmatpush1.msra.mxu0 0.0
    %1642 = vmatprep.subr.mxu0 0.0
    %1643 = vmatpush1.msra.mxu0 0.0
    %1644 = vmatprep.mubr.f32.mxu0 0.0
    %1645 = vmatmul.mubr.f32.gmra.mrb[0].mxu0 %v1575
    %v1646 = vpop.f32.mrb[0].mxu0
    %v1647 = vadd.f32 %v1562, %v1646
    %v1648 = vpop.f32.mrb[0].mxu0
    %v1649 = vadd.f32 %v1566, %v1648
    %1650 = vmatprep.mubr.f32.mxu0 0.0
    %1651 = vmatmul.mubr.f32.gmra.mrb[0].mxu0 %v1578
    %v1652 = vpop.f32.mrb[0].mxu0
    %v1653 = vadd.f32 %v1562, %v1652
    %v1654 = vpop.f32.mrb[0].mxu0
    %v1655 = vadd.f32 %v1566, %v1654
    %1656 = vdwg.mxu0
    %1657 = vmatprep.subr.mxu0 0.0
    %1658 = vmatpush1.msra.mxu0 %v1534
    %1659 = vmatprep.subr.mxu0 0.0
    %1660 = vmatpush1.msra.mxu0 %v1537
    %1661 = vmatprep.subr.mxu0 0.0
    %1662 = vmatpush1.msra.mxu0 %v1540
    %1663 = vmatprep.subr.mxu0 0.0
    %1664 = vmatpush1.msra.mxu0 %v1543
    %1665 = vmatprep.subr.mxu0 0.0
    %1666 = vmatpush1.msra.mxu0 %v1546
    %1667 = vmatprep.subr.mxu0 0.0
    %1668 = vmatpush1.msra.mxu0 %v1549
    %1669 = vmatprep.subr.mxu0 0.0
    %1670 = vmatpush1.msra.mxu0 %v1552
    %1671 = vmatprep.subr.mxu0 0.0
    %1672 = vmatpush1.msra.mxu0 %v1555
    %1673 = vmatprep.subr.mxu0 0.0
    %1674 = vmatpush1.msra.mxu0 0.0
    %1675 = vmatprep.subr.mxu0 0.0
    %1676 = vmatpush1.msra.mxu0 0.0
    %1677 = vmatprep.subr.mxu0 0.0
    %1678 = vmatpush1.msra.mxu0 0.0
    %1679 = vmatprep.subr.mxu0 0.0
    %1680 = vmatpush1.msra.mxu0 0.0
    %1681 = vmatprep.subr.mxu0 0.0
    %1682 = vmatpush1.msra.mxu0 0.0
    %1683 = vmatprep.subr.mxu0 0.0
    %1684 = vmatpush1.msra.mxu0 0.0
    %1685 = vmatprep.subr.mxu0 0.0
    %1686 = vmatpush1.msra.mxu0 0.0
    %1687 = vmatprep.subr.mxu0 0.0
    %1688 = vmatpush1.msra.mxu0 0.0
    %1689 = vmatprep.subr.mxu0 0.0
    %1690 = vmatpush1.msra.mxu0 0.0
    %1691 = vmatprep.subr.mxu0 0.0
    %1692 = vmatpush1.msra.mxu0 0.0
    %1693 = vmatprep.subr.mxu0 0.0
    %1694 = vmatpush1.msra.mxu0 0.0
    %1695 = vmatprep.subr.mxu0 0.0
    %1696 = vmatpush1.msra.mxu0 0.0
    %1697 = vmatprep.subr.mxu0 0.0
    %1698 = vmatpush1.msra.mxu0 0.0
    %1699 = vmatprep.subr.mxu0 0.0
    %1700 = vmatpush1.msra.mxu0 0.0
    %1701 = vmatprep.subr.mxu0 0.0
    %1702 = vmatpush1.msra.mxu0 0.0
    %1703 = vmatprep.subr.mxu0 0.0
    %1704 = vmatpush1.msra.mxu0 0.0
    %1705 = vmatprep.subr.mxu0 0.0
    %1706 = vmatpush1.msra.mxu0 0.0
    %1707 = vmatprep.subr.mxu0 0.0
    %1708 = vmatpush1.msra.mxu0 0.0
    %1709 = vmatprep.subr.mxu0 0.0
    %1710 = vmatpush1.msra.mxu0 0.0
    %1711 = vmatprep.subr.mxu0 0.0
    %1712 = vmatpush1.msra.mxu0 0.0
    %1713 = vmatprep.subr.mxu0 0.0
    %1714 = vmatpush1.msra.mxu0 0.0
    %1715 = vmatprep.subr.mxu0 0.0
    %1716 = vmatpush1.msra.mxu0 0.0
    %1717 = vmatprep.subr.mxu0 0.0
    %1718 = vmatpush1.msra.mxu0 0.0
    %1719 = vmatprep.subr.mxu0 0.0
    %1720 = vmatpush1.msra.mxu0 0.0
    %1721 = vmatprep.mubr.f32.mxu0 0.0
    %1722 = vmatmul.mubr.f32.gmra.mrb[0].mxu0 %v1575
    %v1723 = vpop.f32.mrb[0].mxu0
    %v1724 = vadd.f32 %v1570, %v1723
    %v1725 = vpop.f32.mrb[0].mxu0
    %1726 = vmatprep.mubr.f32.mxu0 0.0
    %1727 = vmatmul.mubr.f32.gmra.mrb[0].mxu0 %v1578
    %v1728 = vpop.f32.mrb[0].mxu0
    %v1729 = vadd.f32 %v1570, %v1728
    %v1730 = vpop.f32.mrb[0].mxu0
    %1731 = vdwg.mxu0
    %v1732 = vmul.f32 %v1647, %v326
    %v1733 = vmul.f32 %v1653, %v326
    %v1735 = vsel %vm76, %v1732, 0
    %v1738 = vsel %vm76, %v1733, 0
    %v1741 = vsel %vm76, %v1649, 0
    %v1744 = vsel %vm76, %v1655, 0
    %1746 = vmatprep.subr.mxu0 0.0
    %1747 = vmatpush1.xpose.msra.mxu0 %v1741
    %1748 = vmatprep.subr.mxu0 0.0
    %1749 = vmatpush1.xpose.msra.mxu0 %v1744
    %1750 = vmatprep.subr.mxu0 0.0
    %1751 = vmatpush1.xpose.msra.mxu0 0.0
    %1752 = vmatprep.subr.mxu0 0.0
    %1753 = vmatpush1.xpose.msra.mxu0 0.0
    %1754 = vmatprep.subr.mxu0 0.0
    %1755 = vmatpush1.xpose.msra.mxu0 0.0
    %1756 = vmatprep.subr.mxu0 0.0
    %1757 = vmatpush1.xpose.msra.mxu0 0.0
    %1758 = vmatprep.subr.mxu0 0.0
    %1759 = vmatpush1.xpose.msra.mxu0 0.0
    %1760 = vmatprep.subr.mxu0 0.0
    %1761 = vmatpush1.xpose.msra.mxu0 0.0
    %1762 = vmatprep.subr.mxu0 0.0
    %1763 = vmatpush1.xpose.msra.mxu0 0.0
    %1764 = vmatprep.subr.mxu0 0.0
    %1765 = vmatpush1.xpose.msra.mxu0 0.0
    %1766 = vmatprep.subr.mxu0 0.0
    %1767 = vmatpush1.xpose.msra.mxu0 0.0
    %1768 = vmatprep.subr.mxu0 0.0
    %1769 = vmatpush1.xpose.msra.mxu0 0.0
    %1770 = vmatprep.subr.mxu0 0.0
    %1771 = vmatpush1.xpose.msra.mxu0 0.0
    %1772 = vmatprep.subr.mxu0 0.0
    %1773 = vmatpush1.xpose.msra.mxu0 0.0
    %1774 = vmatprep.subr.mxu0 0.0
    %1775 = vmatpush1.xpose.msra.mxu0 0.0
    %1776 = vmatprep.subr.mxu0 0.0
    %1777 = vmatpush1.xpose.msra.mxu0 0.0
    %1778 = vmatprep.subr.mxu0 0.0
    %1779 = vmatpush1.xpose.msra.mxu0 0.0
    %1780 = vmatprep.subr.mxu0 0.0
    %1781 = vmatpush1.xpose.msra.mxu0 0.0
    %1782 = vmatprep.subr.mxu0 0.0
    %1783 = vmatpush1.xpose.msra.mxu0 0.0
    %1784 = vmatprep.subr.mxu0 0.0
    %1785 = vmatpush1.xpose.msra.mxu0 0.0
    %1786 = vmatprep.subr.mxu0 0.0
    %1787 = vmatpush1.xpose.msra.mxu0 0.0
    %1788 = vmatprep.subr.mxu0 0.0
    %1789 = vmatpush1.xpose.msra.mxu0 0.0
    %1790 = vmatprep.subr.mxu0 0.0
    %1791 = vmatpush1.xpose.msra.mxu0 0.0
    %1792 = vmatprep.subr.mxu0 0.0
    %1793 = vmatpush1.xpose.msra.mxu0 0.0
    %1794 = vmatprep.subr.mxu0 0.0
    %1795 = vmatpush1.xpose.msra.mxu0 0.0
    %1796 = vmatprep.subr.mxu0 0.0
    %1797 = vmatpush1.xpose.msra.mxu0 0.0
    %1798 = vmatprep.subr.mxu0 0.0
    %1799 = vmatpush1.xpose.msra.mxu0 0.0
    %1800 = vmatprep.subr.mxu0 0.0
    %1801 = vmatpush1.xpose.msra.mxu0 0.0
    %1802 = vmatprep.subr.mxu0 0.0
    %1803 = vmatpush1.xpose.msra.mxu0 0.0
    %1804 = vmatprep.subr.mxu0 0.0
    %1805 = vmatpush1.xpose.msra.mxu0 0.0
    %1806 = vmatprep.subr.mxu0 0.0
    %1807 = vmatpush1.xpose.msra.mxu0 0.0
    %1808 = vmatprep.subr.mxu0 0.0
    %1809 = vmatpush1.xpose.msra.mxu0 0.0
    %1810 = vmatprep.mubr.f32.mxu0 0.0
    %1811 = vmatmul.mubr.f32.gmra.mrb[0].mxu0 %v1735
    %v1812 = vpop.f32.mrb[0].mxu0
    %v1813 = vadd.f32 0.0, %v1812
    %v1814 = vpop.f32.mrb[0].mxu0
    %1815 = vmatprep.mubr.f32.mxu0 0.0
    %1816 = vmatmul.mubr.f32.gmra.mrb[0].mxu0 %v1738
    %v1817 = vpop.f32.mrb[0].mxu0
    %v1818 = vadd.f32 0.0, %v1817
    %v1819 = vpop.f32.mrb[0].mxu0
    %1820 = vdwg.mxu0
    %v1821 = vmul.f32 %v1813, 0.25
    %v1822 = vmul.f32 %v1818, 0.25
    %v1823 = vadd.f32 %v1821, %v120
    %v1824 = vadd.f32 %v1822, %v121
    %v1825 = vsel %vm421, %v1823, -inf
    %1826 = vmax.xlane.f32.xlu0 %v1825
    %v1827 = vpop.xlane.xlu0 %1826
    %v1828 = vsel %vm421, %v1824, -inf
    %1829 = vmax.xlane.f32.xlu0 %v1828
    %v1830 = vpop.xlane.xlu0 %1829
    %v1831 = vsub.f32 %v1823, %v1827
    %v1832 = vsub.f32 %v1824, %v1830
    %v1833 = vmul.f32 %v1831, 1.442695
    %v1834 = vpow.pop %v1833
    %v1835 = vmul.f32 %v1832, 1.442695
    %v1836 = vpow.pop %v1835
    %v1837 = vsel %vm421, %v1834, 0.0
    %1838 = vadd.xlane.f32.xlu0 %v1837
    %v1839 = vpop.xlane.xlu0 %1838
    %v1840 = vsel %vm421, %v1836, 0.0
    %1841 = vadd.xlane.f32.xlu0 %v1840
    %v1842 = vpop.xlane.xlu0 %1841
    %v1843 = vrcp.pop %v1839
    %v1844 = vrcp.pop %v1842
    %v1845 = vmul.f32 %v1834, %v1843
    %v1846 = vmul.f32 %v1836, %v1844
    %v1847 = vmul.f32 %v1724, %v326
    %v1848 = vmul.f32 %v1729, %v326
    %v1849 = vmul.f32 %v1647, %v452
    %v1850 = vmul.f32 %v1653, %v452
    %v1852 = vsel %vm76, %v1849, 0
    %v1855 = vsel %vm76, %v1850, 0
    %1857 = vmatprep.subr.mxu0 0.0
    %1858 = vmatpush1.xpose.msra.mxu0 %v1741
    %1859 = vmatprep.subr.mxu0 0.0
    %1860 = vmatpush1.xpose.msra.mxu0 %v1744
    %1861 = vmatprep.subr.mxu0 0.0
    %1862 = vmatpush1.xpose.msra.mxu0 0.0
    %1863 = vmatprep.subr.mxu0 0.0
    %1864 = vmatpush1.xpose.msra.mxu0 0.0
    %1865 = vmatprep.subr.mxu0 0.0
    %1866 = vmatpush1.xpose.msra.mxu0 0.0
    %1867 = vmatprep.subr.mxu0 0.0
    %1868 = vmatpush1.xpose.msra.mxu0 0.0
    %1869 = vmatprep.subr.mxu0 0.0
    %1870 = vmatpush1.xpose.msra.mxu0 0.0
    %1871 = vmatprep.subr.mxu0 0.0
    %1872 = vmatpush1.xpose.msra.mxu0 0.0
    %1873 = vmatprep.subr.mxu0 0.0
    %1874 = vmatpush1.xpose.msra.mxu0 0.0
    %1875 = vmatprep.subr.mxu0 0.0
    %1876 = vmatpush1.xpose.msra.mxu0 0.0
    %1877 = vmatprep.subr.mxu0 0.0
    %1878 = vmatpush1.xpose.msra.mxu0 0.0
    %1879 = vmatprep.subr.mxu0 0.0
    %1880 = vmatpush1.xpose.msra.mxu0 0.0
    %1881 = vmatprep.subr.mxu0 0.0
    %1882 = vmatpush1.xpose.msra.mxu0 0.0
    %1883 = vmatprep.subr.mxu0 0.0
    %1884 = vmatpush1.xpose.msra.mxu0 0.0
    %1885 = vmatprep.subr.mxu0 0.0
    %1886 = vmatpush1.xpose.msra.mxu0 0.0
    %1887 = vmatprep.subr.mxu0 0.0
    %1888 = vmatpush1.xpose.msra.mxu0 0.0
    %1889 = vmatprep.subr.mxu0 0.0
    %1890 = vmatpush1.xpose.msra.mxu0 0.0
    %1891 = vmatprep.subr.mxu0 0.0
    %1892 = vmatpush1.xpose.msra.mxu0 0.0
    %1893 = vmatprep.subr.mxu0 0.0
    %1894 = vmatpush1.xpose.msra.mxu0 0.0
    %1895 = vmatprep.subr.mxu0 0.0
    %1896 = vmatpush1.xpose.msra.mxu0 0.0
    %1897 = vmatprep.subr.mxu0 0.0
    %1898 = vmatpush1.xpose.msra.mxu0 0.0
    %1899 = vmatprep.subr.mxu0 0.0
    %1900 = vmatpush1.xpose.msra.mxu0 0.0
    %1901 = vmatprep.subr.mxu0 0.0
    %1902 = vmatpush1.xpose.msra.mxu0 0.0
    %1903 = vmatprep.subr.mxu0 0.0
    %1904 = vmatpush1.xpose.msra.mxu0 0.0
    %1905 = vmatprep.subr.mxu0 0.0
    %1906 = vmatpush1.xpose.msra.mxu0 0.0
    %1907 = vmatprep.subr.mxu0 0.0
    %1908 = vmatpush1.xpose.msra.mxu0 0.0
    %1909 = vmatprep.subr.mxu0 0.0
    %1910 = vmatpush1.xpose.msra.mxu0 0.0
    %1911 = vmatprep.subr.mxu0 0.0
    %1912 = vmatpush1.xpose.msra.mxu0 0.0
    %1913 = vmatprep.subr.mxu0 0.0
    %1914 = vmatpush1.xpose.msra.mxu0 0.0
    %1915 = vmatprep.subr.mxu0 0.0
    %1916 = vmatpush1.xpose.msra.mxu0 0.0
    %1917 = vmatprep.subr.mxu0 0.0
    %1918 = vmatpush1.xpose.msra.mxu0 0.0
    %1919 = vmatprep.subr.mxu0 0.0
    %1920 = vmatpush1.xpose.msra.mxu0 0.0
    %1921 = vmatprep.mubr.f32.mxu0 0.0
    %1922 = vmatmul.mubr.f32.gmra.mrb[0].mxu0 %v1852
    %v1923 = vpop.f32.mrb[0].mxu0
    %v1924 = vadd.f32 0.0, %v1923
    %v1925 = vpop.f32.mrb[0].mxu0
    %1926 = vmatprep.mubr.f32.mxu0 0.0
    %1927 = vmatmul.mubr.f32.gmra.mrb[0].mxu0 %v1855
    %v1928 = vpop.f32.mrb[0].mxu0
    %v1929 = vadd.f32 0.0, %v1928
    %v1930 = vpop.f32.mrb[0].mxu0
    %1931 = vdwg.mxu0
    %v1932 = vmul.f32 %v1924, 0.25
    %v1933 = vmul.f32 %v1929, 0.25
    %v1934 = vadd.f32 %v1932, %v120
    %v1935 = vadd.f32 %v1933, %v121
    %v1936 = vsel %vm421, %v1934, -inf
    %1937 = vmax.xlane.f32.xlu0 %v1936
    %v1938 = vpop.xlane.xlu0 %1937
    %v1939 = vsel %vm421, %v1935, -inf
    %1940 = vmax.xlane.f32.xlu0 %v1939
    %v1941 = vpop.xlane.xlu0 %1940
    %v1942 = vsub.f32 %v1934, %v1938
    %v1943 = vsub.f32 %v1935, %v1941
    %v1944 = vmul.f32 %v1942, 1.442695
    %v1945 = vpow.pop %v1944
    %v1946 = vmul.f32 %v1943, 1.442695
    %v1947 = vpow.pop %v1946
    %v1948 = vsel %vm421, %v1945, 0.0
    %1949 = vadd.xlane.f32.xlu0 %v1948
    %v1950 = vpop.xlane.xlu0 %1949
    %v1951 = vsel %vm421, %v1947, 0.0
    %1952 = vadd.xlane.f32.xlu0 %v1951
    %v1953 = vpop.xlane.xlu0 %1952
    %v1954 = vrcp.pop %v1950
    %v1955 = vrcp.pop %v1953
    %v1956 = vmul.f32 %v1945, %v1954
    %v1957 = vmul.f32 %v1947, %v1955
    %v1958 = vmul.f32 %v1724, %v452
    %v1959 = vmul.f32 %v1729, %v452
    %v1961 = vsel %vm421, %v1956, 0
    %v1964 = vsel %vm421, %v1957, 0
    %1966 = vmatprep.subr.mxu0 0.0
    %1967 = vmatpush1.msra.mxu0 %v1958
    %1968 = vmatprep.subr.mxu0 0.0
    %1969 = vmatpush1.msra.mxu0 %v1959
    %1970 = vmatprep.subr.mxu0 0.0
    %1971 = vmatpush1.msra.mxu0 0.0
    %1972 = vmatprep.subr.mxu0 0.0
    %1973 = vmatpush1.msra.mxu0 0.0
    %1974 = vmatprep.subr.mxu0 0.0
    %1975 = vmatpush1.msra.mxu0 0.0
    %1976 = vmatprep.subr.mxu0 0.0
    %1977 = vmatpush1.msra.mxu0 0.0
    %1978 = vmatprep.subr.mxu0 0.0
    %1979 = vmatpush1.msra.mxu0 0.0
    %1980 = vmatprep.subr.mxu0 0.0
    %1981 = vmatpush1.msra.mxu0 0.0
    %1982 = vmatprep.subr.mxu0 0.0
    %1983 = vmatpush1.msra.mxu0 0.0
    %1984 = vmatprep.subr.mxu0 0.0
    %1985 = vmatpush1.msra.mxu0 0.0
    %1986 = vmatprep.subr.mxu0 0.0
    %1987 = vmatpush1.msra.mxu0 0.0
    %1988 = vmatprep.subr.mxu0 0.0
    %1989 = vmatpush1.msra.mxu0 0.0
    %1990 = vmatprep.subr.mxu0 0.0
    %1991 = vmatpush1.msra.mxu0 0.0
    %1992 = vmatprep.subr.mxu0 0.0
    %1993 = vmatpush1.msra.mxu0 0.0
    %1994 = vmatprep.subr.mxu0 0.0
    %1995 = vmatpush1.msra.mxu0 0.0
    %1996 = vmatprep.subr.mxu0 0.0
    %1997 = vmatpush1.msra.mxu0 0.0
    %1998 = vmatprep.subr.mxu0 0.0
    %1999 = vmatpush1.msra.mxu0 0.0
    %2000 = vmatprep.subr.mxu0 0.0
    %2001 = vmatpush1.msra.mxu0 0.0
    %2002 = vmatprep.subr.mxu0 0.0
    %2003 = vmatpush1.msra.mxu0 0.0
    %2004 = vmatprep.subr.mxu0 0.0
    %2005 = vmatpush1.msra.mxu0 0.0
    %2006 = vmatprep.subr.mxu0 0.0
    %2007 = vmatpush1.msra.mxu0 0.0
    %2008 = vmatprep.subr.mxu0 0.0
    %2009 = vmatpush1.msra.mxu0 0.0
    %2010 = vmatprep.subr.mxu0 0.0
    %2011 = vmatpush1.msra.mxu0 0.0
    %2012 = vmatprep.subr.mxu0 0.0
    %2013 = vmatpush1.msra.mxu0 0.0
    %2014 = vmatprep.subr.mxu0 0.0
    %2015 = vmatpush1.msra.mxu0 0.0
    %2016 = vmatprep.subr.mxu0 0.0
    %2017 = vmatpush1.msra.mxu0 0.0
    %2018 = vmatprep.subr.mxu0 0.0
    %2019 = vmatpush1.msra.mxu0 0.0
    %2020 = vmatprep.subr.mxu0 0.0
    %2021 = vmatpush1.msra.mxu0 0.0
    %2022 = vmatprep.subr.mxu0 0.0
    %2023 = vmatpush1.msra.mxu0 0.0
    %2024 = vmatprep.subr.mxu0 0.0
    %2025 = vmatpush1.msra.mxu0 0.0
    %2026 = vmatprep.subr.mxu0 0.0
    %2027 = vmatpush1.msra.mxu0 0.0
    %2028 = vmatprep.subr.mxu0 0.0
    %2029 = vmatpush1.msra.mxu0 0.0
    %2030 = vmatprep.mubr.f32.mxu0 0.0
    %2031 = vmatmul.mubr.f32.gmra.mrb[0].mxu0 %v1961
    %v2032 = vpop.f32.mrb[0].mxu0
    %v2033 = vadd.f32 0.0, %v2032
    %v2034 = vpop.f32.mrb[0].mxu0
    %2035 = vmatprep.mubr.f32.mxu0 0.0
    %2036 = vmatmul.mubr.f32.gmra.mrb[0].mxu0 %v1964
    %v2037 = vpop.f32.mrb[0].mxu0
    %v2038 = vadd.f32 0.0, %v2037
    %v2039 = vpop.f32.mrb[0].mxu0
    %2040 = vdwg.mxu0
    %v2042 = vsel %vm421, %v1845, 0
    %v2045 = vsel %vm421, %v1846, 0
    %2047 = vmatprep.subr.mxu0 0.0
    %2048 = vmatpush1.msra.mxu0 %v1847
    %2049 = vmatprep.subr.mxu0 0.0
    %2050 = vmatpush1.msra.mxu0 %v1848
    %2051 = vmatprep.subr.mxu0 0.0
    %2052 = vmatpush1.msra.mxu0 0.0
    %2053 = vmatprep.subr.mxu0 0.0
    %2054 = vmatpush1.msra.mxu0 0.0
    %2055 = vmatprep.subr.mxu0 0.0
    %2056 = vmatpush1.msra.mxu0 0.0
    %2057 = vmatprep.subr.mxu0 0.0
    %2058 = vmatpush1.msra.mxu0 0.0
    %2059 = vmatprep.subr.mxu0 0.0
    %2060 = vmatpush1.msra.mxu0 0.0
    %2061 = vmatprep.subr.mxu0 0.0
    %2062 = vmatpush1.msra.mxu0 0.0
    %2063 = vmatprep.subr.mxu0 0.0
    %2064 = vmatpush1.msra.mxu0 0.0
    %2065 = vmatprep.subr.mxu0 0.0
    %2066 = vmatpush1.msra.mxu0 0.0
    %2067 = vmatprep.subr.mxu0 0.0
    %2068 = vmatpush1.msra.mxu0 0.0
    %2069 = vmatprep.subr.mxu0 0.0
    %2070 = vmatpush1.msra.mxu0 0.0
    %2071 = vmatprep.subr.mxu0 0.0
    %2072 = vmatpush1.msra.mxu0 0.0
    %2073 = vmatprep.subr.mxu0 0.0
    %2074 = vmatpush1.msra.mxu0 0.0
    %2075 = vmatprep.subr.mxu0 0.0
    %2076 = vmatpush1.msra.mxu0 0.0
    %2077 = vmatprep.subr.mxu0 0.0
    %2078 = vmatpush1.msra.mxu0 0.0
    %2079 = vmatprep.subr.mxu0 0.0
    %2080 = vmatpush1.msra.mxu0 0.0
    %2081 = vmatprep.subr.mxu0 0.0
    %2082 = vmatpush1.msra.mxu0 0.0
    %2083 = vmatprep.subr.mxu0 0.0
    %2084 = vmatpush1.msra.mxu0 0.0
    %2085 = vmatprep.subr.mxu0 0.0
    %2086 = vmatpush1.msra.mxu0 0.0
    %2087 = vmatprep.subr.mxu0 0.0
    %2088 = vmatpush1.msra.mxu0 0.0
    %2089 = vmatprep.subr.mxu0 0.0
    %2090 = vmatpush1.msra.mxu0 0.0
    %2091 = vmatprep.subr.mxu0 0.0
    %2092 = vmatpush1.msra.mxu0 0.0
    %2093 = vmatprep.subr.mxu0 0.0
    %2094 = vmatpush1.msra.mxu0 0.0
    %2095 = vmatprep.subr.mxu0 0.0
    %2096 = vmatpush1.msra.mxu0 0.0
    %2097 = vmatprep.subr.mxu0 0.0
    %2098 = vmatpush1.msra.mxu0 0.0
    %2099 = vmatprep.subr.mxu0 0.0
    %2100 = vmatpush1.msra.mxu0 0.0
    %2101 = vmatprep.subr.mxu0 0.0
    %2102 = vmatpush1.msra.mxu0 0.0
    %2103 = vmatprep.subr.mxu0 0.0
    %2104 = vmatpush1.msra.mxu0 0.0
    %2105 = vmatprep.subr.mxu0 0.0
    %2106 = vmatpush1.msra.mxu0 0.0
    %2107 = vmatprep.subr.mxu0 0.0
    %2108 = vmatpush1.msra.mxu0 0.0
    %2109 = vmatprep.subr.mxu0 0.0
    %2110 = vmatpush1.msra.mxu0 0.0
    %2111 = vmatprep.mubr.f32.mxu0 0.0
    %2112 = vmatmul.mubr.f32.gmra.mrb[0].mxu0 %v2042
    %v2113 = vpop.f32.mrb[0].mxu0
    %v2114 = vadd.f32 %v2033, %v2113
    %v2115 = vpop.f32.mrb[0].mxu0
    %2116 = vmatprep.mubr.f32.mxu0 0.0
    %2117 = vmatmul.mubr.f32.gmra.mrb[0].mxu0 %v2045
    %v2118 = vpop.f32.mrb[0].mxu0
    %v2119 = vadd.f32 %v2038, %v2118
    %v2120 = vpop.f32.mrb[0].mxu0
    %2121 = vdwg.mxu0
    %v2122 = vmul.f32 %v1647, %v733
    %v2123 = vmul.f32 %v1653, %v733
    %v2125 = vsel %vm76, %v2122, 0
    %v2128 = vsel %vm76, %v2123, 0
    %2130 = vmatprep.subr.mxu0 0.0
    %2131 = vmatpush1.xpose.msra.mxu0 %v1741
    %2132 = vmatprep.subr.mxu0 0.0
    %2133 = vmatpush1.xpose.msra.mxu0 %v1744
    %2134 = vmatprep.subr.mxu0 0.0
    %2135 = vmatpush1.xpose.msra.mxu0 0.0
    %2136 = vmatprep.subr.mxu0 0.0
    %2137 = vmatpush1.xpose.msra.mxu0 0.0
    %2138 = vmatprep.subr.mxu0 0.0
    %2139 = vmatpush1.xpose.msra.mxu0 0.0
    %2140 = vmatprep.subr.mxu0 0.0
    %2141 = vmatpush1.xpose.msra.mxu0 0.0
    %2142 = vmatprep.subr.mxu0 0.0
    %2143 = vmatpush1.xpose.msra.mxu0 0.0
    %2144 = vmatprep.subr.mxu0 0.0
    %2145 = vmatpush1.xpose.msra.mxu0 0.0
    %2146 = vmatprep.subr.mxu0 0.0
    %2147 = vmatpush1.xpose.msra.mxu0 0.0
    %2148 = vmatprep.subr.mxu0 0.0
    %2149 = vmatpush1.xpose.msra.mxu0 0.0
    %2150 = vmatprep.subr.mxu0 0.0
    %2151 = vmatpush1.xpose.msra.mxu0 0.0
    %2152 = vmatprep.subr.mxu0 0.0
    %2153 = vmatpush1.xpose.msra.mxu0 0.0
    %2154 = vmatprep.subr.mxu0 0.0
    %2155 = vmatpush1.xpose.msra.mxu0 0.0
    %2156 = vmatprep.subr.mxu0 0.0
    %2157 = vmatpush1.xpose.msra.mxu0 0.0
    %2158 = vmatprep.subr.mxu0 0.0
    %2159 = vmatpush1.xpose.msra.mxu0 0.0
    %2160 = vmatprep.subr.mxu0 0.0
    %2161 = vmatpush1.xpose.msra.mxu0 0.0
    %2162 = vmatprep.subr.mxu0 0.0
    %2163 = vmatpush1.xpose.msra.mxu0 0.0
    %2164 = vmatprep.subr.mxu0 0.0
    %2165 = vmatpush1.xpose.msra.mxu0 0.0
    %2166 = vmatprep.subr.mxu0 0.0
    %2167 = vmatpush1.xpose.msra.mxu0 0.0
    %2168 = vmatprep.subr.mxu0 0.0
    %2169 = vmatpush1.xpose.msra.mxu0 0.0
    %2170 = vmatprep.subr.mxu0 0.0
    %2171 = vmatpush1.xpose.msra.mxu0 0.0
    %2172 = vmatprep.subr.mxu0 0.0
    %2173 = vmatpush1.xpose.msra.mxu0 0.0
    %2174 = vmatprep.subr.mxu0 0.0
    %2175 = vmatpush1.xpose.msra.mxu0 0.0
    %2176 = vmatprep.subr.mxu0 0.0
    %2177 = vmatpush1.xpose.msra.mxu0 0.0
    %2178 = vmatprep.subr.mxu0 0.0
    %2179 = vmatpush1.xpose.msra.mxu0 0.0
    %2180 = vmatprep.subr.mxu0 0.0
    %2181 = vmatpush1.xpose.msra.mxu0 0.0
    %2182 = vmatprep.subr.mxu0 0.0
    %2183 = vmatpush1.xpose.msra.mxu0 0.0
    %2184 = vmatprep.subr.mxu0 0.0
    %2185 = vmatpush1.xpose.msra.mxu0 0.0
    %2186 = vmatprep.subr.mxu0 0.0
    %2187 = vmatpush1.xpose.msra.mxu0 0.0
    %2188 = vmatprep.subr.mxu0 0.0
    %2189 = vmatpush1.xpose.msra.mxu0 0.0
    %2190 = vmatprep.subr.mxu0 0.0
    %2191 = vmatpush1.xpose.msra.mxu0 0.0
    %2192 = vmatprep.subr.mxu0 0.0
    %2193 = vmatpush1.xpose.msra.mxu0 0.0
    %2194 = vmatprep.mubr.f32.mxu0 0.0
    %2195 = vmatmul.mubr.f32.gmra.mrb[0].mxu0 %v2125
    %v2196 = vpop.f32.mrb[0].mxu0
    %v2197 = vadd.f32 0.0, %v2196
    %v2198 = vpop.f32.mrb[0].mxu0
    %2199 = vmatprep.mubr.f32.mxu0 0.0
    %2200 = vmatmul.mubr.f32.gmra.mrb[0].mxu0 %v2128
    %v2201 = vpop.f32.mrb[0].mxu0
    %v2202 = vadd.f32 0.0, %v2201
    %v2203 = vpop.f32.mrb[0].mxu0
    %2204 = vdwg.mxu0
    %v2205 = vmul.f32 %v2197, 0.25
    %v2206 = vmul.f32 %v2202, 0.25
    %v2207 = vadd.f32 %v2205, %v120
    %v2208 = vadd.f32 %v2206, %v121
    %v2209 = vsel %vm421, %v2207, -inf
    %2210 = vmax.xlane.f32.xlu0 %v2209
    %v2211 = vpop.xlane.xlu0 %2210
    %v2212 = vsel %vm421, %v2208, -inf
    %2213 = vmax.xlane.f32.xlu0 %v2212
    %v2214 = vpop.xlane.xlu0 %2213
    %v2215 = vsub.f32 %v2207, %v2211
    %v2216 = vsub.f32 %v2208, %v2214
    %v2217 = vmul.f32 %v2215, 1.442695
    %v2218 = vpow.pop %v2217
    %v2219 = vmul.f32 %v2216, 1.442695
    %v2220 = vpow.pop %v2219
    %v2221 = vsel %vm421, %v2218, 0.0
    %2222 = vadd.xlane.f32.xlu0 %v2221
    %v2223 = vpop.xlane.xlu0 %2222
    %v2224 = vsel %vm421, %v2220, 0.0
    %2225 = vadd.xlane.f32.xlu0 %v2224
    %v2226 = vpop.xlane.xlu0 %2225
    %v2227 = vrcp.pop %v2223
    %v2228 = vrcp.pop %v2226
    %v2229 = vmul.f32 %v2218, %v2227
    %v2230 = vmul.f32 %v2220, %v2228
    %v2231 = vmul.f32 %v1724, %v733
    %v2232 = vmul.f32 %v1729, %v733
    %v2234 = vsel %vm421, %v2229, 0
    %v2237 = vsel %vm421, %v2230, 0
    %2239 = vmatprep.subr.mxu0 0.0
    %2240 = vmatpush1.msra.mxu0 %v2231
    %2241 = vmatprep.subr.mxu0 0.0
    %2242 = vmatpush1.msra.mxu0 %v2232
    %2243 = vmatprep.subr.mxu0 0.0
    %2244 = vmatpush1.msra.mxu0 0.0
    %2245 = vmatprep.subr.mxu0 0.0
    %2246 = vmatpush1.msra.mxu0 0.0
    %2247 = vmatprep.subr.mxu0 0.0
    %2248 = vmatpush1.msra.mxu0 0.0
    %2249 = vmatprep.subr.mxu0 0.0
    %2250 = vmatpush1.msra.mxu0 0.0
    %2251 = vmatprep.subr.mxu0 0.0
    %2252 = vmatpush1.msra.mxu0 0.0
    %2253 = vmatprep.subr.mxu0 0.0
    %2254 = vmatpush1.msra.mxu0 0.0
    %2255 = vmatprep.subr.mxu0 0.0
    %2256 = vmatpush1.msra.mxu0 0.0
    %2257 = vmatprep.subr.mxu0 0.0
    %2258 = vmatpush1.msra.mxu0 0.0
    %2259 = vmatprep.subr.mxu0 0.0
    %2260 = vmatpush1.msra.mxu0 0.0
    %2261 = vmatprep.subr.mxu0 0.0
    %2262 = vmatpush1.msra.mxu0 0.0
    %2263 = vmatprep.subr.mxu0 0.0
    %2264 = vmatpush1.msra.mxu0 0.0
    %2265 = vmatprep.subr.mxu0 0.0
    %2266 = vmatpush1.msra.mxu0 0.0
    %2267 = vmatprep.subr.mxu0 0.0
    %2268 = vmatpush1.msra.mxu0 0.0
    %2269 = vmatprep.subr.mxu0 0.0
    %2270 = vmatpush1.msra.mxu0 0.0
    %2271 = vmatprep.subr.mxu0 0.0
    %2272 = vmatpush1.msra.mxu0 0.0
    %2273 = vmatprep.subr.mxu0 0.0
    %2274 = vmatpush1.msra.mxu0 0.0
    %2275 = vmatprep.subr.mxu0 0.0
    %2276 = vmatpush1.msra.mxu0 0.0
    %2277 = vmatprep.subr.mxu0 0.0
    %2278 = vmatpush1.msra.mxu0 0.0
    %2279 = vmatprep.subr.mxu0 0.0
    %2280 = vmatpush1.msra.mxu0 0.0
    %2281 = vmatprep.subr.mxu0 0.0
    %2282 = vmatpush1.msra.mxu0 0.0
    %2283 = vmatprep.subr.mxu0 0.0
    %2284 = vmatpush1.msra.mxu0 0.0
    %2285 = vmatprep.subr.mxu0 0.0
    %2286 = vmatpush1.msra.mxu0 0.0
    %2287 = vmatprep.subr.mxu0 0.0
    %2288 = vmatpush1.msra.mxu0 0.0
    %2289 = vmatprep.subr.mxu0 0.0
    %2290 = vmatpush1.msra.mxu0 0.0
    %2291 = vmatprep.subr.mxu0 0.0
    %2292 = vmatpush1.msra.mxu0 0.0
    %2293 = vmatprep.subr.mxu0 0.0
    %2294 = vmatpush1.msra.mxu0 0.0
    %2295 = vmatprep.subr.mxu0 0.0
    %2296 = vmatpush1.msra.mxu0 0.0
    %2297 = vmatprep.subr.mxu0 0.0
    %2298 = vmatpush1.msra.mxu0 0.0
    %2299 = vmatprep.subr.mxu0 0.0
    %2300 = vmatpush1.msra.mxu0 0.0
    %2301 = vmatprep.subr.mxu0 0.0
    %2302 = vmatpush1.msra.mxu0 0.0
    %2303 = vmatprep.mubr.f32.mxu0 0.0
    %2304 = vmatmul.mubr.f32.gmra.mrb[0].mxu0 %v2234
    %v2305 = vpop.f32.mrb[0].mxu0
    %v2306 = vadd.f32 0.0, %v2305
    %v2307 = vpop.f32.mrb[0].mxu0
    %2308 = vmatprep.mubr.f32.mxu0 0.0
    %2309 = vmatmul.mubr.f32.gmra.mrb[0].mxu0 %v2237
    %v2310 = vpop.f32.mrb[0].mxu0
    %v2311 = vadd.f32 0.0, %v2310
    %v2312 = vpop.f32.mrb[0].mxu0
    %2313 = vdwg.mxu0
    %v2314 = vadd.f32 %v2114, %v2306
    %v2315 = vadd.f32 %v2119, %v2311
    %v2316 = vmul.f32 %v1647, %v935
    %v2317 = vmul.f32 %v1653, %v935
    %v2319 = vsel %vm76, %v2316, 0
    %v2322 = vsel %vm76, %v2317, 0
    %2324 = vmatprep.subr.mxu0 0.0
    %2325 = vmatpush1.xpose.msra.mxu0 %v1741
    %2326 = vmatprep.subr.mxu0 0.0
    %2327 = vmatpush1.xpose.msra.mxu0 %v1744
    %2328 = vmatprep.subr.mxu0 0.0
    %2329 = vmatpush1.xpose.msra.mxu0 0.0
    %2330 = vmatprep.subr.mxu0 0.0
    %2331 = vmatpush1.xpose.msra.mxu0 0.0
    %2332 = vmatprep.subr.mxu0 0.0
    %2333 = vmatpush1.xpose.msra.mxu0 0.0
    %2334 = vmatprep.subr.mxu0 0.0
    %2335 = vmatpush1.xpose.msra.mxu0 0.0
    %2336 = vmatprep.subr.mxu0 0.0
    %2337 = vmatpush1.xpose.msra.mxu0 0.0
    %2338 = vmatprep.subr.mxu0 0.0
    %2339 = vmatpush1.xpose.msra.mxu0 0.0
    %2340 = vmatprep.subr.mxu0 0.0
    %2341 = vmatpush1.xpose.msra.mxu0 0.0
    %2342 = vmatprep.subr.mxu0 0.0
    %2343 = vmatpush1.xpose.msra.mxu0 0.0
    %2344 = vmatprep.subr.mxu0 0.0
    %2345 = vmatpush1.xpose.msra.mxu0 0.0
    %2346 = vmatprep.subr.mxu0 0.0
    %2347 = vmatpush1.xpose.msra.mxu0 0.0
    %2348 = vmatprep.subr.mxu0 0.0
    %2349 = vmatpush1.xpose.msra.mxu0 0.0
    %2350 = vmatprep.subr.mxu0 0.0
    %2351 = vmatpush1.xpose.msra.mxu0 0.0
    %2352 = vmatprep.subr.mxu0 0.0
    %2353 = vmatpush1.xpose.msra.mxu0 0.0
    %2354 = vmatprep.subr.mxu0 0.0
    %2355 = vmatpush1.xpose.msra.mxu0 0.0
    %2356 = vmatprep.subr.mxu0 0.0
    %2357 = vmatpush1.xpose.msra.mxu0 0.0
    %2358 = vmatprep.subr.mxu0 0.0
    %2359 = vmatpush1.xpose.msra.mxu0 0.0
    %2360 = vmatprep.subr.mxu0 0.0
    %2361 = vmatpush1.xpose.msra.mxu0 0.0
    %2362 = vmatprep.subr.mxu0 0.0
    %2363 = vmatpush1.xpose.msra.mxu0 0.0
    %2364 = vmatprep.subr.mxu0 0.0
    %2365 = vmatpush1.xpose.msra.mxu0 0.0
    %2366 = vmatprep.subr.mxu0 0.0
    %2367 = vmatpush1.xpose.msra.mxu0 0.0
    %2368 = vmatprep.subr.mxu0 0.0
    %2369 = vmatpush1.xpose.msra.mxu0 0.0
    %2370 = vmatprep.subr.mxu0 0.0
    %2371 = vmatpush1.xpose.msra.mxu0 0.0
    %2372 = vmatprep.subr.mxu0 0.0
    %2373 = vmatpush1.xpose.msra.mxu0 0.0
    %2374 = vmatprep.subr.mxu0 0.0
    %2375 = vmatpush1.xpose.msra.mxu0 0.0
    %2376 = vmatprep.subr.mxu0 0.0
    %2377 = vmatpush1.xpose.msra.mxu0 0.0
    %2378 = vmatprep.subr.mxu0 0.0
    %2379 = vmatpush1.xpose.msra.mxu0 0.0
    %2380 = vmatprep.subr.mxu0 0.0
    %2381 = vmatpush1.xpose.msra.mxu0 0.0
    %2382 = vmatprep.subr.mxu0 0.0
    %2383 = vmatpush1.xpose.msra.mxu0 0.0
    %2384 = vmatprep.subr.mxu0 0.0
    %2385 = vmatpush1.xpose.msra.mxu0 0.0
    %2386 = vmatprep.subr.mxu0 0.0
    %2387 = vmatpush1.xpose.msra.mxu0 0.0
    %2388 = vmatprep.mubr.f32.mxu0 0.0
    %2389 = vmatmul.mubr.f32.gmra.mrb[0].mxu0 %v2319
    %v2390 = vpop.f32.mrb[0].mxu0
    %v2391 = vadd.f32 0.0, %v2390
    %v2392 = vpop.f32.mrb[0].mxu0
    %2393 = vmatprep.mubr.f32.mxu0 0.0
    %2394 = vmatmul.mubr.f32.gmra.mrb[0].mxu0 %v2322
    %v2395 = vpop.f32.mrb[0].mxu0
    %v2396 = vadd.f32 0.0, %v2395
    %v2397 = vpop.f32.mrb[0].mxu0
    %2398 = vdwg.mxu0
    %v2399 = vmul.f32 %v2391, 0.25
    %v2400 = vmul.f32 %v2396, 0.25
    %v2401 = vadd.f32 %v2399, %v120
    %v2402 = vadd.f32 %v2400, %v121
    %v2403 = vsel %vm421, %v2401, -inf
    %2404 = vmax.xlane.f32.xlu0 %v2403
    %v2405 = vpop.xlane.xlu0 %2404
    %v2406 = vsel %vm421, %v2402, -inf
    %2407 = vmax.xlane.f32.xlu0 %v2406
    %v2408 = vpop.xlane.xlu0 %2407
    %v2409 = vsub.f32 %v2401, %v2405
    %v2410 = vsub.f32 %v2402, %v2408
    %v2411 = vmul.f32 %v2409, 1.442695
    %v2412 = vpow.pop %v2411
    %v2413 = vmul.f32 %v2410, 1.442695
    %v2414 = vpow.pop %v2413
    %v2415 = vsel %vm421, %v2412, 0.0
    %2416 = vadd.xlane.f32.xlu0 %v2415
    %v2417 = vpop.xlane.xlu0 %2416
    %v2418 = vsel %vm421, %v2414, 0.0
    %2419 = vadd.xlane.f32.xlu0 %v2418
    %v2420 = vpop.xlane.xlu0 %2419
    %v2421 = vrcp.pop %v2417
    %v2422 = vrcp.pop %v2420
    %v2423 = vmul.f32 %v2412, %v2421
    %v2424 = vmul.f32 %v2414, %v2422
    %v2425 = vmul.f32 %v1724, %v935
    %v2426 = vmul.f32 %v1729, %v935
    %v2428 = vsel %vm421, %v2423, 0
    %v2431 = vsel %vm421, %v2424, 0
    %2433 = vmatprep.subr.mxu0 0.0
    %2434 = vmatpush1.msra.mxu0 %v2425
    %2435 = vmatprep.subr.mxu0 0.0
    %2436 = vmatpush1.msra.mxu0 %v2426
    %2437 = vmatprep.subr.mxu0 0.0
    %2438 = vmatpush1.msra.mxu0 0.0
    %2439 = vmatprep.subr.mxu0 0.0
    %2440 = vmatpush1.msra.mxu0 0.0
    %2441 = vmatprep.subr.mxu0 0.0
    %2442 = vmatpush1.msra.mxu0 0.0
    %2443 = vmatprep.subr.mxu0 0.0
    %2444 = vmatpush1.msra.mxu0 0.0
    %2445 = vmatprep.subr.mxu0 0.0
    %2446 = vmatpush1.msra.mxu0 0.0
    %2447 = vmatprep.subr.mxu0 0.0
    %2448 = vmatpush1.msra.mxu0 0.0
    %2449 = vmatprep.subr.mxu0 0.0
    %2450 = vmatpush1.msra.mxu0 0.0
    %2451 = vmatprep.subr.mxu0 0.0
    %2452 = vmatpush1.msra.mxu0 0.0
    %2453 = vmatprep.subr.mxu0 0.0
    %2454 = vmatpush1.msra.mxu0 0.0
    %2455 = vmatprep.subr.mxu0 0.0
    %2456 = vmatpush1.msra.mxu0 0.0
    %2457 = vmatprep.subr.mxu0 0.0
    %2458 = vmatpush1.msra.mxu0 0.0
    %2459 = vmatprep.subr.mxu0 0.0
    %2460 = vmatpush1.msra.mxu0 0.0
    %2461 = vmatprep.subr.mxu0 0.0
    %2462 = vmatpush1.msra.mxu0 0.0
    %2463 = vmatprep.subr.mxu0 0.0
    %2464 = vmatpush1.msra.mxu0 0.0
    %2465 = vmatprep.subr.mxu0 0.0
    %2466 = vmatpush1.msra.mxu0 0.0
    %2467 = vmatprep.subr.mxu0 0.0
    %2468 = vmatpush1.msra.mxu0 0.0
    %2469 = vmatprep.subr.mxu0 0.0
    %2470 = vmatpush1.msra.mxu0 0.0
    %2471 = vmatprep.subr.mxu0 0.0
    %2472 = vmatpush1.msra.mxu0 0.0
    %2473 = vmatprep.subr.mxu0 0.0
    %2474 = vmatpush1.msra.mxu0 0.0
    %2475 = vmatprep.subr.mxu0 0.0
    %2476 = vmatpush1.msra.mxu0 0.0
    %2477 = vmatprep.subr.mxu0 0.0
    %2478 = vmatpush1.msra.mxu0 0.0
    %2479 = vmatprep.subr.mxu0 0.0
    %2480 = vmatpush1.msra.mxu0 0.0
    %2481 = vmatprep.subr.mxu0 0.0
    %2482 = vmatpush1.msra.mxu0 0.0
    %2483 = vmatprep.subr.mxu0 0.0
    %2484 = vmatpush1.msra.mxu0 0.0
    %2485 = vmatprep.subr.mxu0 0.0
    %2486 = vmatpush1.msra.mxu0 0.0
    %2487 = vmatprep.subr.mxu0 0.0
    %2488 = vmatpush1.msra.mxu0 0.0
    %2489 = vmatprep.subr.mxu0 0.0
    %2490 = vmatpush1.msra.mxu0 0.0
    %2491 = vmatprep.subr.mxu0 0.0
    %2492 = vmatpush1.msra.mxu0 0.0
    %2493 = vmatprep.subr.mxu0 0.0
    %2494 = vmatpush1.msra.mxu0 0.0
    %2495 = vmatprep.subr.mxu0 0.0
    %2496 = vmatpush1.msra.mxu0 0.0
    %2497 = vmatprep.mubr.f32.mxu0 0.0
    %2498 = vmatmul.mubr.f32.gmra.mrb[0].mxu0 %v2428
    %v2499 = vpop.f32.mrb[0].mxu0
    %v2500 = vadd.f32 0.0, %v2499
    %v2501 = vpop.f32.mrb[0].mxu0
    %2502 = vmatprep.mubr.f32.mxu0 0.0
    %2503 = vmatmul.mubr.f32.gmra.mrb[0].mxu0 %v2431
    %v2504 = vpop.f32.mrb[0].mxu0
    %v2505 = vadd.f32 0.0, %v2504
    %v2506 = vpop.f32.mrb[0].mxu0
    %2507 = vdwg.mxu0
    %v2508 = vadd.f32 %v2314, %v2500
    %v2509 = vadd.f32 %v2315, %v2505
    %s2510 = scalar_lea.vmem %s9, 64
    %v2511 = vld [vmem:[%s2510] sm:$0xff]
    %v2512 = vld [vmem:[%s2510 + $0x8] sm:$0xff]
    %v2513 = vld [vmem:[%s2510 + $0x10] sm:$0xff]
    %v2514 = vld [vmem:[%s2510 + $0x18] sm:$0xff]
    %v2515 = vld [vmem:[%s2510 + $0x20] sm:$0xff]
    %v2516 = vld [vmem:[%s2510 + $0x28] sm:$0xff]
    %v2517 = vld [vmem:[%s2510 + $0x30] sm:$0xff]
    %v2518 = vld [vmem:[%s2510 + $0x38] sm:$0xff]
    %s2519 = scalar_lea.vmem %s10, 1
    %v2520 = vld [vmem:[%s2519] sm:$0x1]
    %v2522 = vlaneseq
    %v2523 = vshrl.u32 %v2522, 7
    %v2524 = vsub.s32 0, %v2523
    %v2525 = vrot.slane %v2520, %v2524
    %v2528 = vsel %vm76, %v2508, 0
    %v2531 = vsel %vm76, %v2509, 0
    %2533 = vmatprep.subr.mxu0 0.0
    %2534 = vmatpush1.msra.mxu0 %v2511
    %2535 = vmatprep.subr.mxu0 0.0
    %2536 = vmatpush1.msra.mxu0 %v2512
    %2537 = vmatprep.subr.mxu0 0.0
    %2538 = vmatpush1.msra.mxu0 %v2513
    %2539 = vmatprep.subr.mxu0 0.0
    %2540 = vmatpush1.msra.mxu0 %v2514
    %2541 = vmatprep.subr.mxu0 0.0
    %2542 = vmatpush1.msra.mxu0 %v2515
    %2543 = vmatprep.subr.mxu0 0.0
    %2544 = vmatpush1.msra.mxu0 %v2516
    %2545 = vmatprep.subr.mxu0 0.0
    %2546 = vmatpush1.msra.mxu0 %v2517
    %2547 = vmatprep.subr.mxu0 0.0
    %2548 = vmatpush1.msra.mxu0 %v2518
    %2549 = vmatprep.subr.mxu0 0.0
    %2550 = vmatpush1.msra.mxu0 0.0
    %2551 = vmatprep.subr.mxu0 0.0
    %2552 = vmatpush1.msra.mxu0 0.0
    %2553 = vmatprep.subr.mxu0 0.0
    %2554 = vmatpush1.msra.mxu0 0.0
    %2555 = vmatprep.subr.mxu0 0.0
    %2556 = vmatpush1.msra.mxu0 0.0
    %2557 = vmatprep.subr.mxu0 0.0
    %2558 = vmatpush1.msra.mxu0 0.0
    %2559 = vmatprep.subr.mxu0 0.0
    %2560 = vmatpush1.msra.mxu0 0.0
    %2561 = vmatprep.subr.mxu0 0.0
    %2562 = vmatpush1.msra.mxu0 0.0
    %2563 = vmatprep.subr.mxu0 0.0
    %2564 = vmatpush1.msra.mxu0 0.0
    %2565 = vmatprep.subr.mxu0 0.0
    %2566 = vmatpush1.msra.mxu0 0.0
    %2567 = vmatprep.subr.mxu0 0.0
    %2568 = vmatpush1.msra.mxu0 0.0
    %2569 = vmatprep.subr.mxu0 0.0
    %2570 = vmatpush1.msra.mxu0 0.0
    %2571 = vmatprep.subr.mxu0 0.0
    %2572 = vmatpush1.msra.mxu0 0.0
    %2573 = vmatprep.subr.mxu0 0.0
    %2574 = vmatpush1.msra.mxu0 0.0
    %2575 = vmatprep.subr.mxu0 0.0
    %2576 = vmatpush1.msra.mxu0 0.0
    %2577 = vmatprep.subr.mxu0 0.0
    %2578 = vmatpush1.msra.mxu0 0.0
    %2579 = vmatprep.subr.mxu0 0.0
    %2580 = vmatpush1.msra.mxu0 0.0
    %2581 = vmatprep.subr.mxu0 0.0
    %2582 = vmatpush1.msra.mxu0 0.0
    %2583 = vmatprep.subr.mxu0 0.0
    %2584 = vmatpush1.msra.mxu0 0.0
    %2585 = vmatprep.subr.mxu0 0.0
    %2586 = vmatpush1.msra.mxu0 0.0
    %2587 = vmatprep.subr.mxu0 0.0
    %2588 = vmatpush1.msra.mxu0 0.0
    %2589 = vmatprep.subr.mxu0 0.0
    %2590 = vmatpush1.msra.mxu0 0.0
    %2591 = vmatprep.subr.mxu0 0.0
    %2592 = vmatpush1.msra.mxu0 0.0
    %2593 = vmatprep.subr.mxu0 0.0
    %2594 = vmatpush1.msra.mxu0 0.0
    %2595 = vmatprep.subr.mxu0 0.0
    %2596 = vmatpush1.msra.mxu0 0.0
    %2597 = vmatprep.mubr.f32.mxu0 0.0
    %2598 = vmatmul.mubr.f32.gmra.mrb[0].mxu0 %v2528
    %v2599 = vpop.f32.mrb[0].mxu0
    %v2600 = vadd.f32 %v2525, %v2599
    %v2601 = vpop.f32.mrb[0].mxu0
    %2602 = vmatprep.mubr.f32.mxu0 0.0
    %2603 = vmatmul.mubr.f32.gmra.mrb[0].mxu0 %v2531
    %v2604 = vpop.f32.mrb[0].mxu0
    %v2605 = vadd.f32 %v2525, %v2604
    %v2606 = vpop.f32.mrb[0].mxu0
    %2607 = vdwg.mxu0
    %v2608 = vadd.f32 %v1529, %v2600
    %v2609 = vadd.f32 %v1530, %v2605
    %s2610 = scalar_lea.vmem %s11, 1
    %v2611 = vld [vmem:[%s2610] sm:$0x1]
    %s2612 = scalar_lea.vmem %s12, 1
    %v2613 = vld [vmem:[%s2612] sm:$0x1]
    %v2614 = vsel %vm76, %v2608, 0.0
    %2615 = vadd.xlane.f32.xlu0 %v2614
    %v2616 = vpop.xlane.xlu0 %2615
    %v2617 = vsel %vm76, %v2609, 0.0
    %2618 = vadd.xlane.f32.xlu0 %v2617
    %v2619 = vpop.xlane.xlu0 %2618
    %v2620 = vmul.f32 %v2616, %v83
    %v2621 = vmul.f32 %v2619, %v83
    %v2622 = vsub.f32 %v2608, %v2620
    %v2623 = vsub.f32 %v2609, %v2621
    %v2624 = vmul.f32 %v2622, %v2622
    %v2625 = vmul.f32 %v2623, %v2623
    %v2626 = vsel %vm76, %v2624, 0.0
    %2627 = vadd.xlane.f32.xlu0 %v2626
    %v2628 = vpop.xlane.xlu0 %2627
    %v2629 = vsel %vm76, %v2625, 0.0
    %2630 = vadd.xlane.f32.xlu0 %v2629
    %v2631 = vpop.xlane.xlu0 %2630
    %v2632 = vmul.f32 %v2628, %v83
    %v2633 = vmul.f32 %v2631, %v83
    %v2634 = vadd.f32 %v2632, 1e-12
    %v2635 = vadd.f32 %v2633, 1e-12
    %v2636 = vrsqrt.pop %v2634
    %v2637 = vrsqrt.pop %v2635
    %v2638 = vmul.f32 %v2622, %v2636
    %v2639 = vmul.f32 %v2623, %v2637
    %v2641 = vlaneseq
    %v2642 = vshrl.u32 %v2641, 7
    %v2643 = vsub.s32 0, %v2642
    %v2644 = vrot.slane %v2611, %v2643
    %v2646 = vmul.f32 %v2638, %v2644
    %v2647 = vmul.f32 %v2639, %v2644
    %v2649 = vlaneseq
    %v2650 = vshrl.u32 %v2649, 7
    %v2651 = vsub.s32 0, %v2650
    %v2652 = vrot.slane %v2613, %v2651
    %v2654 = vadd.f32 %v2646, %v2652
    %v2655 = vadd.f32 %v2647, %v2652
    %s2656 = scalar_lea.vmem %s13, 64
    %v2657 = vld [vmem:[%s2656] sm:$0xff]
    %v2658 = vld [vmem:[%s2656 + $0x8] sm:$0xff]
    %v2659 = vld [vmem:[%s2656 + $0x10] sm:$0xff]
    %v2660 = vld [vmem:[%s2656 + $0x18] sm:$0xff]
    %v2661 = vld [vmem:[%s2656 + $0x20] sm:$0xff]
    %v2662 = vld [vmem:[%s2656 + $0x28] sm:$0xff]
    %v2663 = vld [vmem:[%s2656 + $0x30] sm:$0xff]
    %v2664 = vld [vmem:[%s2656 + $0x38] sm:$0xff]
    %s2665 = scalar_lea.vmem %s14, 1
    %v2666 = vld [vmem:[%s2665] sm:$0x1]
    %v2668 = vlaneseq
    %v2669 = vshrl.u32 %v2668, 7
    %v2670 = vsub.s32 0, %v2669
    %v2671 = vrot.slane %v2666, %v2670
    %v2674 = vsel %vm76, %v2654, 0
    %v2677 = vsel %vm76, %v2655, 0
    %2679 = vmatprep.subr.mxu0 0.0
    %2680 = vmatpush1.msra.mxu0 %v2657
    %2681 = vmatprep.subr.mxu0 0.0
    %2682 = vmatpush1.msra.mxu0 %v2658
    %2683 = vmatprep.subr.mxu0 0.0
    %2684 = vmatpush1.msra.mxu0 %v2659
    %2685 = vmatprep.subr.mxu0 0.0
    %2686 = vmatpush1.msra.mxu0 %v2660
    %2687 = vmatprep.subr.mxu0 0.0
    %2688 = vmatpush1.msra.mxu0 %v2661
    %2689 = vmatprep.subr.mxu0 0.0
    %2690 = vmatpush1.msra.mxu0 %v2662
    %2691 = vmatprep.subr.mxu0 0.0
    %2692 = vmatpush1.msra.mxu0 %v2663
    %2693 = vmatprep.subr.mxu0 0.0
    %2694 = vmatpush1.msra.mxu0 %v2664
    %2695 = vmatprep.subr.mxu0 0.0
    %2696 = vmatpush1.msra.mxu0 0.0
    %2697 = vmatprep.subr.mxu0 0.0
    %2698 = vmatpush1.msra.mxu0 0.0
    %2699 = vmatprep.subr.mxu0 0.0
    %2700 = vmatpush1.msra.mxu0 0.0
    %2701 = vmatprep.subr.mxu0 0.0
    %2702 = vmatpush1.msra.mxu0 0.0
    %2703 = vmatprep.subr.mxu0 0.0
    %2704 = vmatpush1.msra.mxu0 0.0
    %2705 = vmatprep.subr.mxu0 0.0
    %2706 = vmatpush1.msra.mxu0 0.0
    %2707 = vmatprep.subr.mxu0 0.0
    %2708 = vmatpush1.msra.mxu0 0.0
    %2709 = vmatprep.subr.mxu0 0.0
    %2710 = vmatpush1.msra.mxu0 0.0
    %2711 = vmatprep.subr.mxu0 0.0
    %2712 = vmatpush1.msra.mxu0 0.0
    %2713 = vmatprep.subr.mxu0 0.0
    %2714 = vmatpush1.msra.mxu0 0.0
    %2715 = vmatprep.subr.mxu0 0.0
    %2716 = vmatpush1.msra.mxu0 0.0
    %2717 = vmatprep.subr.mxu0 0.0
    %2718 = vmatpush1.msra.mxu0 0.0
    %2719 = vmatprep.subr.mxu0 0.0
    %2720 = vmatpush1.msra.mxu0 0.0
    %2721 = vmatprep.subr.mxu0 0.0
    %2722 = vmatpush1.msra.mxu0 0.0
    %2723 = vmatprep.subr.mxu0 0.0
    %2724 = vmatpush1.msra.mxu0 0.0
    %2725 = vmatprep.subr.mxu0 0.0
    %2726 = vmatpush1.msra.mxu0 0.0
    %2727 = vmatprep.subr.mxu0 0.0
    %2728 = vmatpush1.msra.mxu0 0.0
    %2729 = vmatprep.subr.mxu0 0.0
    %2730 = vmatpush1.msra.mxu0 0.0
    %2731 = vmatprep.subr.mxu0 0.0
    %2732 = vmatpush1.msra.mxu0 0.0
    %2733 = vmatprep.subr.mxu0 0.0
    %2734 = vmatpush1.msra.mxu0 0.0
    %2735 = vmatprep.subr.mxu0 0.0
    %2736 = vmatpush1.msra.mxu0 0.0
    %2737 = vmatprep.subr.mxu0 0.0
    %2738 = vmatpush1.msra.mxu0 0.0
    %2739 = vmatprep.subr.mxu0 0.0
    %2740 = vmatpush1.msra.mxu0 0.0
    %2741 = vmatprep.subr.mxu0 0.0
    %2742 = vmatpush1.msra.mxu0 0.0
    %2743 = vmatprep.mubr.f32.mxu0 0.0
    %2744 = vmatmul.mubr.f32.gmra.mrb[0].mxu0 %v2674
    %v2745 = vpop.f32.mrb[0].mxu0
    %v2746 = vadd.f32 %v2671, %v2745
    %v2747 = vpop.f32.mrb[0].mxu0
    %2748 = vmatprep.mubr.f32.mxu0 0.0
    %2749 = vmatmul.mubr.f32.gmra.mrb[0].mxu0 %v2677
    %v2750 = vpop.f32.mrb[0].mxu0
    %v2751 = vadd.f32 %v2671, %v2750
    %v2752 = vpop.f32.mrb[0].mxu0
    %2753 = vdwg.mxu0
    %v2754 = vmul.f32 %v2746, 0.5
    %v2755 = vmul.f32 %v2751, 0.5
    %v2756 = vmul.f32 %v2746, 0.044715
    %v2757 = vmul.f32 %v2751, 0.044715
    %v2758 = vmul.f32 %v2756, %v2746
    %v2759 = vmul.f32 %v2757, %v2751
    %v2760 = vmul.f32 %v2758, %v2746
    %v2761 = vmul.f32 %v2759, %v2751
    %v2762 = vadd.f32 %v2746, %v2760
    %v2763 = vadd.f32 %v2751, %v2761
    %v2764 = vmul.f32 %v2762, 0.7978846
    %v2765 = vmul.f32 %v2763, 0.7978846
    %v2766 = vtanh.pop %v2764
    %v2767 = vtanh.pop %v2765
    %v2768 = vadd.f32 %v2766, 1.0
    %v2769 = vadd.f32 %v2767, 1.0
    %v2770 = vmul.f32 %v2754, %v2768
    %v2771 = vmul.f32 %v2755, %v2769
    %s2772 = scalar_lea.vmem %s15, 128
    %v2773 = vld [vmem:[%s2772] sm:$0xff]
    %v2774 = vld [vmem:[%s2772 + $0x8] sm:$0xff]
    %v2775 = vld [vmem:[%s2772 + $0x10] sm:$0xff]
    %v2776 = vld [vmem:[%s2772 + $0x18] sm:$0xff]
    %v2777 = vld [vmem:[%s2772 + $0x20] sm:$0xff]
    %v2778 = vld [vmem:[%s2772 + $0x28] sm:$0xff]
    %v2779 = vld [vmem:[%s2772 + $0x30] sm:$0xff]
    %v2780 = vld [vmem:[%s2772 + $0x38] sm:$0xff]
    %v2781 = vld [vmem:[%s2772 + $0x40] sm:$0xff]
    %v2782 = vld [vmem:[%s2772 + $0x48] sm:$0xff]
    %v2783 = vld [vmem:[%s2772 + $0x50] sm:$0xff]
    %v2784 = vld [vmem:[%s2772 + $0x58] sm:$0xff]
    %v2785 = vld [vmem:[%s2772 + $0x60] sm:$0xff]
    %v2786 = vld [vmem:[%s2772 + $0x68] sm:$0xff]
    %v2787 = vld [vmem:[%s2772 + $0x70] sm:$0xff]
    %v2788 = vld [vmem:[%s2772 + $0x78] sm:$0xff]
    %s2789 = scalar_lea.vmem %s16, 1
    %v2790 = vld [vmem:[%s2789] sm:$0x1]
    %v2792 = vlaneseq
    %v2793 = vshrl.u32 %v2792, 7
    %v2794 = vsub.s32 0, %v2793
    %v2795 = vrot.slane %v2790, %v2794
    %2797 = vmatprep.subr.mxu0 0.0
    %2798 = vmatpush1.msra.mxu0 %v2773
    %2799 = vmatprep.subr.mxu0 0.0
    %2800 = vmatpush1.msra.mxu0 %v2774
    %2801 = vmatprep.subr.mxu0 0.0
    %2802 = vmatpush1.msra.mxu0 %v2775
    %2803 = vmatprep.subr.mxu0 0.0
    %2804 = vmatpush1.msra.mxu0 %v2776
    %2805 = vmatprep.subr.mxu0 0.0
    %2806 = vmatpush1.msra.mxu0 %v2777
    %2807 = vmatprep.subr.mxu0 0.0
    %2808 = vmatpush1.msra.mxu0 %v2778
    %2809 = vmatprep.subr.mxu0 0.0
    %2810 = vmatpush1.msra.mxu0 %v2779
    %2811 = vmatprep.subr.mxu0 0.0
    %2812 = vmatpush1.msra.mxu0 %v2780
    %2813 = vmatprep.subr.mxu0 0.0
    %2814 = vmatpush1.msra.mxu0 %v2781
    %2815 = vmatprep.subr.mxu0 0.0
    %2816 = vmatpush1.msra.mxu0 %v2782
    %2817 = vmatprep.subr.mxu0 0.0
    %2818 = vmatpush1.msra.mxu0 %v2783
    %2819 = vmatprep.subr.mxu0 0.0
    %2820 = vmatpush1.msra.mxu0 %v2784
    %2821 = vmatprep.subr.mxu0 0.0
    %2822 = vmatpush1.msra.mxu0 %v2785
    %2823 = vmatprep.subr.mxu0 0.0
    %2824 = vmatpush1.msra.mxu0 %v2786
    %2825 = vmatprep.subr.mxu0 0.0
    %2826 = vmatpush1.msra.mxu0 %v2787
    %2827 = vmatprep.subr.mxu0 0.0
    %2828 = vmatpush1.msra.mxu0 %v2788
    %2829 = vmatprep.subr.mxu0 0.0
    %2830 = vmatpush1.msra.mxu0 0.0
    %2831 = vmatprep.subr.mxu0 0.0
    %2832 = vmatpush1.msra.mxu0 0.0
    %2833 = vmatprep.subr.mxu0 0.0
    %2834 = vmatpush1.msra.mxu0 0.0
    %2835 = vmatprep.subr.mxu0 0.0
    %2836 = vmatpush1.msra.mxu0 0.0
    %2837 = vmatprep.subr.mxu0 0.0
    %2838 = vmatpush1.msra.mxu0 0.0
    %2839 = vmatprep.subr.mxu0 0.0
    %2840 = vmatpush1.msra.mxu0 0.0
    %2841 = vmatprep.subr.mxu0 0.0
    %2842 = vmatpush1.msra.mxu0 0.0
    %2843 = vmatprep.subr.mxu0 0.0
    %2844 = vmatpush1.msra.mxu0 0.0
    %2845 = vmatprep.subr.mxu0 0.0
    %2846 = vmatpush1.msra.mxu0 0.0
    %2847 = vmatprep.subr.mxu0 0.0
    %2848 = vmatpush1.msra.mxu0 0.0
    %2849 = vmatprep.subr.mxu0 0.0
    %2850 = vmatpush1.msra.mxu0 0.0
    %2851 = vmatprep.subr.mxu0 0.0
    %2852 = vmatpush1.msra.mxu0 0.0
    %2853 = vmatprep.subr.mxu0 0.0
    %2854 = vmatpush1.msra.mxu0 0.0
    %2855 = vmatprep.subr.mxu0 0.0
    %2856 = vmatpush1.msra.mxu0 0.0
    %2857 = vmatprep.subr.mxu0 0.0
    %2858 = vmatpush1.msra.mxu0 0.0
    %2859 = vmatprep.subr.mxu0 0.0
    %2860 = vmatpush1.msra.mxu0 0.0
    %2861 = vmatprep.mubr.f32.mxu0 0.0
    %2862 = vmatmul.mubr.f32.gmra.mrb[0].mxu0 %v2770
    %v2863 = vpop.f32.mrb[0].mxu0
    %v2864 = vadd.f32 %v2795, %v2863
    %v2865 = vpop.f32.mrb[0].mxu0
    %2866 = vmatprep.mubr.f32.mxu0 0.0
    %2867 = vmatmul.mubr.f32.gmra.mrb[0].mxu0 %v2771
    %v2868 = vpop.f32.mrb[0].mxu0
    %v2869 = vadd.f32 %v2795, %v2868
    %v2870 = vpop.f32.mrb[0].mxu0
    %2871 = vdwg.mxu0
    %v2872 = vadd.f32 %v2654, %v2864
    %v2873 = vadd.f32 %v2655, %v2869
    %s2874 = scalar_lea.vmem %s17, 1
    %v2875 = vld [vmem:[%s2874] sm:$0x1]
    %s2876 = scalar_lea.vmem %s18, 1
    %v2877 = vld [vmem:[%s2876] sm:$0x1]
    %v2878 = vsel %vm76, %v2872, 0.0
    %2879 = vadd.xlane.f32.xlu0 %v2878
    %v2880 = vpop.xlane.xlu0 %2879
    %v2881 = vsel %vm76, %v2873, 0.0
    %2882 = vadd.xlane.f32.xlu0 %v2881
    %v2883 = vpop.xlane.xlu0 %2882
    %v2884 = vmul.f32 %v2880, %v83
    %v2885 = vmul.f32 %v2883, %v83
    %v2886 = vsub.f32 %v2872, %v2884
    %v2887 = vsub.f32 %v2873, %v2885
    %v2888 = vmul.f32 %v2886, %v2886
    %v2889 = vmul.f32 %v2887, %v2887
    %v2890 = vsel %vm76, %v2888, 0.0
    %2891 = vadd.xlane.f32.xlu0 %v2890
    %v2892 = vpop.xlane.xlu0 %2891
    %v2893 = vsel %vm76, %v2889, 0.0
    %2894 = vadd.xlane.f32.xlu0 %v2893
    %v2895 = vpop.xlane.xlu0 %2894
    %v2896 = vmul.f32 %v2892, %v83
    %v2897 = vmul.f32 %v2895, %v83
    %v2898 = vadd.f32 %v2896, 1e-12
    %v2899 = vadd.f32 %v2897, 1e-12
    %v2900 = vrsqrt.pop %v2898
    %v2901 = vrsqrt.pop %v2899
    %v2902 = vmul.f32 %v2886, %v2900
    %v2903 = vmul.f32 %v2887, %v2901
    %v2905 = vlaneseq
    %v2906 = vshrl.u32 %v2905, 7
    %v2907 = vsub.s32 0, %v2906
    %v2908 = vrot.slane %v2875, %v2907
    %v2910 = vmul.f32 %v2902, %v2908
    %v2911 = vmul.f32 %v2903, %v2908
    %v2913 = vlaneseq
    %v2914 = vshrl.u32 %v2913, 7
    %v2915 = vsub.s32 0, %v2914
    %v2916 = vrot.slane %v2877, %v2915
    %v2918 = vadd.f32 %v2910, %v2916
    %v2919 = vadd.f32 %v2911, %v2916
    %v2920 = vld [vmem:[%s2] sm:$0x3]
    %v2922 = vsel %vm421, %v2920, 0
    %2924 = vmatprep.subr.mxu0 0.0
    %2925 = vmatpush1.msra.mxu0 %v2918
    %2926 = vmatprep.subr.mxu0 0.0
    %2927 = vmatpush1.msra.mxu0 %v2919
    %2928 = vmatprep.subr.mxu0 0.0
    %2929 = vmatpush1.msra.mxu0 0.0
    %2930 = vmatprep.subr.mxu0 0.0
    %2931 = vmatpush1.msra.mxu0 0.0
    %2932 = vmatprep.subr.mxu0 0.0
    %2933 = vmatpush1.msra.mxu0 0.0
    %2934 = vmatprep.subr.mxu0 0.0
    %2935 = vmatpush1.msra.mxu0 0.0
    %2936 = vmatprep.subr.mxu0 0.0
    %2937 = vmatpush1.msra.mxu0 0.0
    %2938 = vmatprep.subr.mxu0 0.0
    %2939 = vmatpush1.msra.mxu0 0.0
    %2940 = vmatprep.subr.mxu0 0.0
    %2941 = vmatpush1.msra.mxu0 0.0
    %2942 = vmatprep.subr.mxu0 0.0
    %2943 = vmatpush1.msra.mxu0 0.0
    %2944 = vmatprep.subr.mxu0 0.0
    %2945 = vmatpush1.msra.mxu0 0.0
    %2946 = vmatprep.subr.mxu0 0.0
    %2947 = vmatpush1.msra.mxu0 0.0
    %2948 = vmatprep.subr.mxu0 0.0
    %2949 = vmatpush1.msra.mxu0 0.0
    %2950 = vmatprep.subr.mxu0 0.0
    %2951 = vmatpush1.msra.mxu0 0.0
    %2952 = vmatprep.subr.mxu0 0.0
    %2953 = vmatpush1.msra.mxu0 0.0
    %2954 = vmatprep.subr.mxu0 0.0
    %2955 = vmatpush1.msra.mxu0 0.0
    %2956 = vmatprep.subr.mxu0 0.0
    %2957 = vmatpush1.msra.mxu0 0.0
    %2958 = vmatprep.subr.mxu0 0.0
    %2959 = vmatpush1.msra.mxu0 0.0
    %2960 = vmatprep.subr.mxu0 0.0
    %2961 = vmatpush1.msra.mxu0 0.0
    %2962 = vmatprep.subr.mxu0 0.0
    %2963 = vmatpush1.msra.mxu0 0.0
    %2964 = vmatprep.subr.mxu0 0.0
    %2965 = vmatpush1.msra.mxu0 0.0
    %2966 = vmatprep.subr.mxu0 0.0
    %2967 = vmatpush1.msra.mxu0 0.0
    %2968 = vmatprep.subr.mxu0 0.0
    %2969 = vmatpush1.msra.mxu0 0.0
    %2970 = vmatprep.subr.mxu0 0.0
    %2971 = vmatpush1.msra.mxu0 0.0
    %2972 = vmatprep.subr.mxu0 0.0
    %2973 = vmatpush1.msra.mxu0 0.0
    %2974 = vmatprep.subr.mxu0 0.0
    %2975 = vmatpush1.msra.mxu0 0.0
    %2976 = vmatprep.subr.mxu0 0.0
    %2977 = vmatpush1.msra.mxu0 0.0
    %2978 = vmatprep.subr.mxu0 0.0
    %2979 = vmatpush1.msra.mxu0 0.0
    %2980 = vmatprep.subr.mxu0 0.0
    %2981 = vmatpush1.msra.mxu0 0.0
    %2982 = vmatprep.subr.mxu0 0.0
    %2983 = vmatpush1.msra.mxu0 0.0
    %2984 = vmatprep.subr.mxu0 0.0
    %2985 = vmatpush1.msra.mxu0 0.0
    %2986 = vmatprep.subr.mxu0 0.0
    %2987 = vmatpush1.msra.mxu0 0.0
    %2988 = vmatprep.mubr.f32.mxu0 0.0
    %2989 = vmatmul.mubr.f32.gmra.mrb[0].mxu0 %v2922
    %v2990 = vpop.f32.mrb[0].mxu0
    %v2991 = vadd.f32 0.0, %v2990
    %v2992 = vpop.f32.mrb[0].mxu0
    %2993 = vdwg.mxu0
    %v2994 = vld [vmem:[%s19] sm:$0xff]
    %v2995 = vld [vmem:[%s19 + $0x8] sm:$0xff]
    %v2996 = vld [vmem:[%s19 + $0x10] sm:$0xff]
    %v2997 = vld [vmem:[%s19 + $0x18] sm:$0xff]
    %v2998 = vld [vmem:[%s19 + $0x20] sm:$0xff]
    %v2999 = vld [vmem:[%s19 + $0x28] sm:$0xff]
    %v3000 = vld [vmem:[%s19 + $0x30] sm:$0xff]
    %v3001 = vld [vmem:[%s19 + $0x38] sm:$0xff]
    %v3002 = vld [vmem:[%s3] sm:$0x3f]
    %v3003 = vld [vmem:[%s20] sm:$0xff]
    %v3004 = vld [vmem:[%s20 + $0x8] sm:$0xff]
    %v3005 = vld [vmem:[%s20 + $0x10] sm:$0xff]
    %v3006 = vld [vmem:[%s20 + $0x18] sm:$0xff]
    %v3007 = vld [vmem:[%s20 + $0x20] sm:$0xff]
    %v3008 = vld [vmem:[%s20 + $0x28] sm:$0xff]
    %v3009 = vld [vmem:[%s20 + $0x30] sm:$0xff]
    %v3010 = vld [vmem:[%s20 + $0x38] sm:$0xff]
    %v3011 = vld [vmem:[%s20 + $0x40] sm:$0xff]
    %v3012 = vld [vmem:[%s20 + $0x48] sm:$0xff]
    %v3013 = vld [vmem:[%s20 + $0x50] sm:$0xff]
    %v3014 = vld [vmem:[%s20 + $0x58] sm:$0xff]
    %v3015 = vld [vmem:[%s20 + $0x60] sm:$0xff]
    %v3016 = vld [vmem:[%s20 + $0x68] sm:$0xff]
    %v3017 = vld [vmem:[%s20 + $0x70] sm:$0xff]
    %v3018 = vld [vmem:[%s20 + $0x78] sm:$0xff]
    %v3019 = vld [vmem:[%s20 + $0x80] sm:$0xff]
    %v3020 = vld [vmem:[%s20 + $0x88] sm:$0xff]
    %v3021 = vld [vmem:[%s20 + $0x90] sm:$0xff]
    %v3022 = vld [vmem:[%s20 + $0x98] sm:$0xff]
    %v3023 = vld [vmem:[%s20 + $0xa0] sm:$0xff]
    %v3024 = vld [vmem:[%s20 + $0xa8] sm:$0xff]
    %v3025 = vld [vmem:[%s20 + $0xb0] sm:$0xff]
    %v3026 = vld [vmem:[%s20 + $0xb8] sm:$0xff]
    %v3027 = vld [vmem:[%s20 + $0xc0] sm:$0xff]
    %v3028 = vld [vmem:[%s20 + $0xc8] sm:$0xff]
    %v3029 = vld [vmem:[%s20 + $0xd0] sm:$0xff]
    %v3030 = vld [vmem:[%s20 + $0xd8] sm:$0xff]
    %v3031 = vld [vmem:[%s20 + $0xe0] sm:$0xff]
    %v3032 = vld [vmem:[%s20 + $0xe8] sm:$0xff]
    %v3033 = vld [vmem:[%s20 + $0xf0] sm:$0xff]
    %v3034 = vld [vmem:[%s20 + $0xf8] sm:$0xff]
    %v3035 = vld [vmem:[%s20 + $0x100] sm:$0xff]
    %v3036 = vld [vmem:[%s20 + $0x108] sm:$0xff]
    %v3037 = vld [vmem:[%s20 + $0x110] sm:$0xff]
    %v3038 = vld [vmem:[%s20 + $0x118] sm:$0xff]
    %v3039 = vld [vmem:[%s20 + $0x120] sm:$0xff]
    %v3040 = vld [vmem:[%s20 + $0x128] sm:$0xff]
    %v3041 = vld [vmem:[%s20 + $0x130] sm:$0xff]
    %v3042 = vld [vmem:[%s20 + $0x138] sm:$0xff]
    %v3043 = vld [vmem:[%s20 + $0x140] sm:$0xff]
    %v3044 = vld [vmem:[%s20 + $0x148] sm:$0xff]
    %v3045 = vld [vmem:[%s20 + $0x150] sm:$0xff]
    %v3046 = vld [vmem:[%s20 + $0x158] sm:$0xff]
    %v3047 = vld [vmem:[%s20 + $0x160] sm:$0xff]
    %v3048 = vld [vmem:[%s20 + $0x168] sm:$0xff]
    %v3049 = vld [vmem:[%s20 + $0x170] sm:$0xff]
    %v3050 = vld [vmem:[%s20 + $0x178] sm:$0xff]
    %v3052 = vcombine.high %v3002, %v3002
    %v3054 = vunpack.c.l.s4 1983009808
    %v3055 = vunpack.c.0.s8 %v3054
    %v3056 = vlaneseq
    %v3057 = vshrl.u32 %v3056, 7
    %v3058 = vsub.s32 %v3055, %v3057
    %v3059 = vrot.slane %v3002, %v3058
    %v3061 = vunpack.c.l.s4 1983009808
    %v3062 = vunpack.c.0.s8 %v3061
    %v3063 = vlaneseq
    %v3064 = vshrl.u32 %v3063, 7
    %v3065 = vsub.s32 %v3062, %v3064
    %v3066 = vrot.slane %v3052, %v3065
    %v3067 = vcombine.high %v3059, %v3059
    %3071 = vmatprep.subr.mxu0 0.0
    %3072 = vmatpush1.msra.mxu0 %v3003
    %3073 = vmatprep.subr.mxu0 0.0
    %3074 = vmatpush1.msra.mxu0 %v3004
    %3075 = vmatprep.subr.mxu0 0.0
    %3076 = vmatpush1.msra.mxu0 %v3005
    %3077 = vmatprep.subr.mxu0 0.0
    %3078 = vmatpush1.msra.mxu0 %v3006
    %3079 = vmatprep.subr.mxu0 0.0
    %3080 = vmatpush1.msra.mxu0 %v3007
    %3081 = vmatprep.subr.mxu0 0.0
    %3082 = vmatpush1.msra.mxu0 %v3008
    %3083 = vmatprep.subr.mxu0 0.0
    %3084 = vmatpush1.msra.mxu0 %v3009
    %3085 = vmatprep.subr.mxu0 0.0
    %3086 = vmatpush1.msra.mxu0 %v3010
    %3087 = vmatprep.subr.mxu0 0.0
    %3088 = vmatpush1.msra.mxu0 %v3011
    %3089 = vmatprep.subr.mxu0 0.0
    %3090 = vmatpush1.msra.mxu0 %v3012
    %3091 = vmatprep.subr.mxu0 0.0
    %3092 = vmatpush1.msra.mxu0 %v3013
    %3093 = vmatprep.subr.mxu0 0.0
    %3094 = vmatpush1.msra.mxu0 %v3014
    %3095 = vmatprep.subr.mxu0 0.0
    %3096 = vmatpush1.msra.mxu0 %v3015
    %3097 = vmatprep.subr.mxu0 0.0
    %3098 = vmatpush1.msra.mxu0 %v3016
    %3099 = vmatprep.subr.mxu0 0.0
    %3100 = vmatpush1.msra.mxu0 %v3017
    %3101 = vmatprep.subr.mxu0 0.0
    %3102 = vmatpush1.msra.mxu0 %v3018
    %3103 = vmatprep.subr.mxu0 0.0
    %3104 = vmatpush1.msra.mxu0 %v3019
    %3105 = vmatprep.subr.mxu0 0.0
    %3106 = vmatpush1.msra.mxu0 %v3020
    %3107 = vmatprep.subr.mxu0 0.0
    %3108 = vmatpush1.msra.mxu0 %v3021
    %3109 = vmatprep.subr.mxu0 0.0
    %3110 = vmatpush1.msra.mxu0 %v3022
    %3111 = vmatprep.subr.mxu0 0.0
    %3112 = vmatpush1.msra.mxu0 %v3023
    %3113 = vmatprep.subr.mxu0 0.0
    %3114 = vmatpush1.msra.mxu0 %v3024
    %3115 = vmatprep.subr.mxu0 0.0
    %3116 = vmatpush1.msra.mxu0 %v3025
    %3117 = vmatprep.subr.mxu0 0.0
    %3118 = vmatpush1.msra.mxu0 %v3026
    %3119 = vmatprep.subr.mxu0 0.0
    %3120 = vmatpush1.msra.mxu0 %v3027
    %3121 = vmatprep.subr.mxu0 0.0
    %3122 = vmatpush1.msra.mxu0 %v3028
    %3123 = vmatprep.subr.mxu0 0.0
    %3124 = vmatpush1.msra.mxu0 %v3029
    %3125 = vmatprep.subr.mxu0 0.0
    %3126 = vmatpush1.msra.mxu0 %v3030
    %3127 = vmatprep.subr.mxu0 0.0
    %3128 = vmatpush1.msra.mxu0 %v3031
    %3129 = vmatprep.subr.mxu0 0.0
    %3130 = vmatpush1.msra.mxu0 %v3032
    %3131 = vmatprep.subr.mxu0 0.0
    %3132 = vmatpush1.msra.mxu0 %v3033
    %3133 = vmatprep.subr.mxu0 0.0
    %3134 = vmatpush1.msra.mxu0 %v3034
    %3135 = vmatprep.mubr.f32.mxu0 %v3067
    %3136 = vmatmul.mubr.f32.gmra.mrb[0].mxu0 %v3059
    %v3137 = vpop.f32.mrb[0].mxu0
    %v3138 = vadd.f32 0.0, %v3137
    %v3139 = vpop.f32.mrb[0].mxu0
    %3140 = vdwg.mxu0
    %3141 = vmatprep.subr.mxu0 0.0
    %3142 = vmatpush1.msra.mxu0 %v3035
    %3143 = vmatprep.subr.mxu0 0.0
    %3144 = vmatpush1.msra.mxu0 %v3036
    %3145 = vmatprep.subr.mxu0 0.0
    %3146 = vmatpush1.msra.mxu0 %v3037
    %3147 = vmatprep.subr.mxu0 0.0
    %3148 = vmatpush1.msra.mxu0 %v3038
    %3149 = vmatprep.subr.mxu0 0.0
    %3150 = vmatpush1.msra.mxu0 %v3039
    %3151 = vmatprep.subr.mxu0 0.0
    %3152 = vmatpush1.msra.mxu0 %v3040
    %3153 = vmatprep.subr.mxu0 0.0
    %3154 = vmatpush1.msra.mxu0 %v3041
    %3155 = vmatprep.subr.mxu0 0.0
    %3156 = vmatpush1.msra.mxu0 %v3042
    %3157 = vmatprep.subr.mxu0 0.0
    %3158 = vmatpush1.msra.mxu0 %v3043
    %3159 = vmatprep.subr.mxu0 0.0
    %3160 = vmatpush1.msra.mxu0 %v3044
    %3161 = vmatprep.subr.mxu0 0.0
    %3162 = vmatpush1.msra.mxu0 %v3045
    %3163 = vmatprep.subr.mxu0 0.0
    %3164 = vmatpush1.msra.mxu0 %v3046
    %3165 = vmatprep.subr.mxu0 0.0
    %3166 = vmatpush1.msra.mxu0 %v3047
    %3167 = vmatprep.subr.mxu0 0.0
    %3168 = vmatpush1.msra.mxu0 %v3048
    %3169 = vmatprep.subr.mxu0 0.0
    %3170 = vmatpush1.msra.mxu0 %v3049
    %3171 = vmatprep.subr.mxu0 0.0
    %3172 = vmatpush1.msra.mxu0 %v3050
    %3173 = vmatprep.subr.mxu0 0.0
    %3174 = vmatpush1.msra.mxu0 0.0
    %3175 = vmatprep.subr.mxu0 0.0
    %3176 = vmatpush1.msra.mxu0 0.0
    %3177 = vmatprep.subr.mxu0 0.0
    %3178 = vmatpush1.msra.mxu0 0.0
    %3179 = vmatprep.subr.mxu0 0.0
    %3180 = vmatpush1.msra.mxu0 0.0
    %3181 = vmatprep.subr.mxu0 0.0
    %3182 = vmatpush1.msra.mxu0 0.0
    %3183 = vmatprep.subr.mxu0 0.0
    %3184 = vmatpush1.msra.mxu0 0.0
    %3185 = vmatprep.subr.mxu0 0.0
    %3186 = vmatpush1.msra.mxu0 0.0
    %3187 = vmatprep.subr.mxu0 0.0
    %3188 = vmatpush1.msra.mxu0 0.0
    %3189 = vmatprep.subr.mxu0 0.0
    %3190 = vmatpush1.msra.mxu0 0.0
    %3191 = vmatprep.subr.mxu0 0.0
    %3192 = vmatpush1.msra.mxu0 0.0
    %3193 = vmatprep.subr.mxu0 0.0
    %3194 = vmatpush1.msra.mxu0 0.0
    %3195 = vmatprep.subr.mxu0 0.0
    %3196 = vmatpush1.msra.mxu0 0.0
    %3197 = vmatprep.subr.mxu0 0.0
    %3198 = vmatpush1.msra.mxu0 0.0
    %3199 = vmatprep.subr.mxu0 0.0
    %3200 = vmatpush1.msra.mxu0 0.0
    %3201 = vmatprep.subr.mxu0 0.0
    %3202 = vmatpush1.msra.mxu0 0.0
    %3203 = vmatprep.subr.mxu0 0.0
    %3204 = vmatpush1.msra.mxu0 0.0
    %3205 = vmatprep.mubr.f32.mxu0 0.0
    %3206 = vmatmul.mubr.f32.gmra.mrb[0].mxu0 %v3066
    %v3207 = vpop.f32.mrb[0].mxu0
    %v3208 = vadd.f32 %v3138, %v3207
    %v3209 = vpop.f32.mrb[0].mxu0
    %3210 = vdwg.mxu0
    %v3212 = vsel %vm76, %v2991, 0
    %3214 = vmatprep.subr.mxu0 0.0
    %3215 = vmatpush1.msra.mxu0 %v2994
    %3216 = vmatprep.subr.mxu0 0.0
    %3217 = vmatpush1.msra.mxu0 %v2995
    %3218 = vmatprep.subr.mxu0 0.0
    %3219 = vmatpush1.msra.mxu0 %v2996
    %3220 = vmatprep.subr.mxu0 0.0
    %3221 = vmatpush1.msra.mxu0 %v2997
    %3222 = vmatprep.subr.mxu0 0.0
    %3223 = vmatpush1.msra.mxu0 %v2998
    %3224 = vmatprep.subr.mxu0 0.0
    %3225 = vmatpush1.msra.mxu0 %v2999
    %3226 = vmatprep.subr.mxu0 0.0
    %3227 = vmatpush1.msra.mxu0 %v3000
    %3228 = vmatprep.subr.mxu0 0.0
    %3229 = vmatpush1.msra.mxu0 %v3001
    %3230 = vmatprep.subr.mxu0 0.0
    %3231 = vmatpush1.msra.mxu0 0.0
    %3232 = vmatprep.subr.mxu0 0.0
    %3233 = vmatpush1.msra.mxu0 0.0
    %3234 = vmatprep.subr.mxu0 0.0
    %3235 = vmatpush1.msra.mxu0 0.0
    %3236 = vmatprep.subr.mxu0 0.0
    %3237 = vmatpush1.msra.mxu0 0.0
    %3238 = vmatprep.subr.mxu0 0.0
    %3239 = vmatpush1.msra.mxu0 0.0
    %3240 = vmatprep.subr.mxu0 0.0
    %3241 = vmatpush1.msra.mxu0 0.0
    %3242 = vmatprep.subr.mxu0 0.0
    %3243 = vmatpush1.msra.mxu0 0.0
    %3244 = vmatprep.subr.mxu0 0.0
    %3245 = vmatpush1.msra.mxu0 0.0
    %3246 = vmatprep.subr.mxu0 0.0
    %3247 = vmatpush1.msra.mxu0 0.0
    %3248 = vmatprep.subr.mxu0 0.0
    %3249 = vmatpush1.msra.mxu0 0.0
    %3250 = vmatprep.subr.mxu0 0.0
    %3251 = vmatpush1.msra.mxu0 0.0
    %3252 = vmatprep.subr.mxu0 0.0
    %3253 = vmatpush1.msra.mxu0 0.0
    %3254 = vmatprep.subr.mxu0 0.0
    %3255 = vmatpush1.msra.mxu0 0.0
    %3256 = vmatprep.subr.mxu0 0.0
    %3257 = vmatpush1.msra.mxu0 0.0
    %3258 = vmatprep.subr.mxu0 0.0
    %3259 = vmatpush1.msra.mxu0 0.0
    %3260 = vmatprep.subr.mxu0 0.0
    %3261 = vmatpush1.msra.mxu0 0.0
    %3262 = vmatprep.subr.mxu0 0.0
    %3263 = vmatpush1.msra.mxu0 0.0
    %3264 = vmatprep.subr.mxu0 0.0
    %3265 = vmatpush1.msra.mxu0 0.0
    %3266 = vmatprep.subr.mxu0 0.0
    %3267 = vmatpush1.msra.mxu0 0.0
    %3268 = vmatprep.subr.mxu0 0.0
    %3269 = vmatpush1.msra.mxu0 0.0
    %3270 = vmatprep.subr.mxu0 0.0
    %3271 = vmatpush1.msra.mxu0 0.0
    %3272 = vmatprep.subr.mxu0 0.0
    %3273 = vmatpush1.msra.mxu0 0.0
    %3274 = vmatprep.subr.mxu0 0.0
    %3275 = vmatpush1.msra.mxu0 0.0
    %3276 = vmatprep.subr.mxu0 0.0
    %3277 = vmatpush1.msra.mxu0 0.0
    %3278 = vmatprep.mubr.f32.mxu0 0.0
    %3279 = vmatmul.mubr.f32.gmra.mrb[0].mxu0 %v3212
    %v3280 = vpop.f32.mrb[0].mxu0
    %v3281 = vadd.f32 %v3208, %v3280
    %v3282 = vpop.f32.mrb[0].mxu0
    %3283 = vdwg.mxu0
    %v3284 = vld [vmem:[%s21] sm:$0x1]
    %v3286 = vlaneseq
    %v3287 = vshrl.u32 %v3286, 7
    %v3288 = vsub.s32 0, %v3287
    %v3289 = vrot.slane %v3284, %v3288
    %v3291 = vadd.f32 %v3281, %v3289
    %vm3292 = vcmask 25600
    %3293 = vst.msk [vmem:[#allocation2] sm:$0x3] %vm3292, %v3291
    // Predicated region
    $region90: #{genre_classifier_forward.1} parent=1 // pred_check
      _
    $region91: #{genre_classifier_forward.1} parent=1 // pred_check_branch
      %3295 = sbr.rel (0) target = $region93
    $region92: #{genre_classifier_forward.1} parent=1 // pred_region
      %s3297 = ssub.s32 32, 32
      %3298 = vsyncadd [#allocation3], %s3297
      %s3300 = sshll.u32 [#allocation2], 4
      %s3301 = int_to_ptr.vmem [resolvable:$true] %s3300
      %3303 = dma.vmem_to_hbm [thread:$0]  %s3301, 32, %s22, [#allocation3]
    $region93: #{genre_classifier_forward.1} parent=1 // pred_fallthru
      _
    // Predicated region
    $region94: #{genre_classifier_forward.1} parent=1 // pred_check
      _
    $region95: #{genre_classifier_forward.1} parent=1 // pred_check_branch
      %3305 = sbr.rel (0) target = $region97
    $region96: #{genre_classifier_forward.1} parent=1 // pred_region
      %3306 = dma.done [#allocation3], 32
    $region97: #{genre_classifier_forward.1} parent=1 // pred_fallthru
      _
    %3307 = vsyncpa [#allocation3], 1

</llo_original>
